<compile_context>
chip_gen: v7x
topology: tpu7x:2x2x1
jax: 0.10.0
libtpu: 0.0.40
codegen_flags: <defaults>
</compile_context>

<pallas_src>
import functools
import math

import jax
import jax.numpy as jnp
from jax.experimental import pallas as pl
from jax.experimental.pallas import tpu as pltpu


# --------------------------------------------------------------------------
# helpers
# --------------------------------------------------------------------------
def _cdiv(a, b):
    return (a + b - 1) // b


def _rup(x, m):
    return _cdiv(x, m) * m


def _pad2(x, rows, cols):
    r, c = x.shape
    if r == rows and c == cols:
        return x
    return jnp.pad(x, ((0, rows - r), (0, cols - c)))


def _row_tiles(M, max_tile=512):
    """Balanced row tiling (avoids up-to-2x padding overshoot); prefers >=2 tiles so both
    v7x TensorCores get a 'parallel' block."""
    gm = max(1, _cdiv(M, max_tile))
    tm = _rup(_cdiv(M, gm), 8)
    if gm == 1 and tm >= 16:          # split a single tile so the parallel axis has extent >= 2
        tm = _rup(_cdiv(tm, 2), 8)
    gm = _cdiv(M, tm)
    return tm, gm, gm * tm


def _apply_act(y, activation):
    if activation == "relu":
        return jnp.maximum(y, 0.0)
    if activation == "sigmoid":
        return jax.nn.sigmoid(y)
    return y


# --------------------------------------------------------------------------
# generic linear (bf16 MXU operands, f32 accumulation)
# --------------------------------------------------------------------------
def _linear_kernel_1k(x_ref, w_ref, b_ref, o_ref, *, activation):
    """Single reduction step: weight fully resident, no accumulator scratch."""
    y = jnp.dot(x_ref[...].astype(jnp.bfloat16), w_ref[...],
                preferred_element_type=jnp.float32) + b_ref[...]
    o_ref[...] = _apply_act(y, activation).astype(o_ref.dtype)


def _linear_kernel_acc(x_ref, w_ref, b_ref, o_ref, acc_ref, *, activation):
    """K-tiled reduction with f32 VMEM accumulator (only used when K_pad > 1024)."""
    @pl.when(pl.program_id(2) == 0)
    def _():
        acc_ref[...] = jnp.zeros_like(acc_ref)

    acc_ref[...] += jnp.dot(x_ref[...].astype(jnp.bfloat16), w_ref[...],
                            preferred_element_type=jnp.float32)

    @pl.when(pl.program_id(2) == pl.num_programs(2) - 1)
    def _():
        y = acc_ref[...] + b_ref[...]
        o_ref[...] = _apply_act(y, activation).astype(o_ref.dtype)


def pallas_linear(x, w_pad, b_pad, *, activation="none", out_dtype=jnp.float32):
    """x: (M, K); w_pad: (K_pad, N_pad) bf16 pre-transposed/padded; b_pad: (1, N_pad) f32.
    Returns the PADDED (M_pad, N_pad) result (caller keeps/strips padding)."""
    M, K = x.shape
    K_pad, N_pad = w_pad.shape
    tm, gm, M_pad = _row_tiles(M)
    tn = 512 if N_pad % 512 == 0 else (256 if N_pad % 256 == 0 else 128)
    gn = N_pad // tn
    xp = _pad2(x, M_pad, K_pad)

    if K_pad <= 1024:
        return pl.pallas_call(
            functools.partial(_linear_kernel_1k, activation=activation),
            out_shape=jax.ShapeDtypeStruct((M_pad, N_pad), out_dtype),
            grid=(gm, gn),
            in_specs=[
                pl.BlockSpec((tm, K_pad), lambda i, j: (i, 0)),
                pl.BlockSpec((K_pad, tn), lambda i, j: (0, j)),
                pl.BlockSpec((1, tn), lambda i, j: (0, j)),
            ],
            out_specs=pl.BlockSpec((tm, tn), lambda i, j: (i, j)),
            compiler_params=pltpu.CompilerParams(
                dimension_semantics=("parallel", "parallel")),
        )(xp, w_pad, b_pad)

    tk = 512 if K_pad % 512 == 0 else (256 if K_pad % 256 == 0 else 128)
    gk = K_pad // tk
    return pl.pallas_call(
        functools.partial(_linear_kernel_acc, activation=activation),
        out_shape=jax.ShapeDtypeStruct((M_pad, N_pad), out_dtype),
        grid=(gm, gn, gk),
        in_specs=[
            pl.BlockSpec((tm, tk), lambda i, j, k: (i, k)),
            pl.BlockSpec((tk, tn), lambda i, j, k: (k, j)),
            pl.BlockSpec((1, tn), lambda i, j, k: (0, j)),
        ],
        out_specs=pl.BlockSpec((tm, tn), lambda i, j, k: (i, j)),
        scratch_shapes=[pltpu.VMEM((tm, tn), jnp.float32)],
        compiler_params=pltpu.CompilerParams(
            dimension_semantics=("parallel", "parallel", "arbitrary")),
    )(xp, w_pad, b_pad)


# --------------------------------------------------------------------------
# fused: input_proj (1x1 conv) + pos add + K/V projection -> contiguous bf16 K/V planes
# --------------------------------------------------------------------------
def _src_kv_kernel(tok_ref, pos_ref, wp_ref, bp_ref, wkv_ref, bkv_ref, k_ref, v_ref, *, d_pad):
    t = tok_ref[...].astype(jnp.bfloat16)
    mem = (jnp.dot(t, wp_ref[...], preferred_element_type=jnp.float32)
           + bp_ref[...] + pos_ref[...]).astype(jnp.bfloat16)
    y = jnp.dot(mem, wkv_ref[...], preferred_element_type=jnp.float32) + bkv_ref[...]
    k_ref[...] = y[:, :d_pad].astype(k_ref.dtype)
    v_ref[...] = y[:, d_pad:].astype(v_ref.dtype)


def pallas_src_kv(tokens, pos_tok, wp, bp, wkv, bkv, d_pad, tm, gm):
    """tokens: (M_pad, cin_pad) f32; pos_tok: (M_pad, d_pad) f32. Returns bf16 K and V planes
    of shape (M_pad, d_pad) each (contiguous, never round-tripped unsliced)."""
    M_pad, cin_pad = tokens.shape
    two_d = wkv.shape[1]
    return pl.pallas_call(
        functools.partial(_src_kv_kernel, d_pad=d_pad),
        out_shape=(jax.ShapeDtypeStruct((M_pad, d_pad), jnp.bfloat16),
                   jax.ShapeDtypeStruct((M_pad, d_pad), jnp.bfloat16)),
        grid=(gm,),
        in_specs=[
            pl.BlockSpec((tm, cin_pad), lambda i: (i, 0)),
            pl.BlockSpec((tm, d_pad), lambda i: (i, 0)),
            pl.BlockSpec((cin_pad, d_pad), lambda i: (0, 0)),
            pl.BlockSpec((1, d_pad), lambda i: (0, 0)),
            pl.BlockSpec((d_pad, two_d), lambda i: (0, 0)),
            pl.BlockSpec((1, two_d), lambda i: (0, 0)),
        ],
        out_specs=(pl.BlockSpec((tm, d_pad), lambda i: (i, 0)),
                   pl.BlockSpec((tm, d_pad), lambda i: (i, 0))),
        compiler_params=pltpu.CompilerParams(
            dimension_semantics=("parallel",),
            vmem_limit_bytes=48 * 1024 * 1024),
    )(tokens, pos_tok, wp, bp, wkv, bkv)


# --------------------------------------------------------------------------
# flash-style single-head cross attention (online softmax along keys)
# --------------------------------------------------------------------------
def _flash_xattn_kernel(q_ref, k_ref, v_ref, bias_ref, o_ref, m_sc, l_sc, acc_sc):
    s_idx = pl.program_id(2)

    @pl.when(s_idx == 0)
    def _():
        m_sc[...] = jnp.full_like(m_sc, -jnp.inf)
        l_sc[...] = jnp.zeros_like(l_sc)
        acc_sc[...] = jnp.zeros_like(acc_sc)

    q = q_ref[...]                  # (tq, d_pad) bf16 (scale folded into Wq)
    k = k_ref[0]                    # (tS, d_pad) bf16
    v = v_ref[0]                    # (tS, d_pad) bf16
    bias = bias_ref[0]              # (1, tS) f32 additive key-padding bias

    s = jax.lax.dot_general(q, k, (((1,), (1,)), ((), ())),
                            preferred_element_type=jnp.float32) + bias   # (tq, tS)

    m_prev = m_sc[...]
    m_new = jnp.maximum(m_prev, jnp.max(s, axis=-1, keepdims=True))
    alpha = jnp.exp(m_prev - m_new)
    p = jnp.exp(s - m_new)
    l_sc[...] = alpha * l_sc[...] + jnp.sum(p, axis=-1, keepdims=True)
    acc_sc[...] = alpha * acc_sc[...] + jnp.dot(p.astype(jnp.bfloat16), v,
                                                preferred_element_type=jnp.float32)
    m_sc[...] = m_new

    @pl.when(s_idx == pl.num_programs(2) - 1)
    def _():
        o_ref[0] = (acc_sc[...] * pl.reciprocal(l_sc[...], approx=True)).astype(o_ref.dtype)


def pallas_cross_attention(q, k, v, key_bias):
    """q: (nq_pad, d_pad) bf16; k, v: (B, S, d_pad) bf16 planes; key_bias: (B, 1, S) f32
    (-1e30 on padded keys). Returns (B, nq_pad, d_pad) f32."""
    nq_pad_in, d_pad = q.shape
    B, S, _ = k.shape

    # key-block tiling
    nS = max(1, _cdiv(S, 512))
    tS = _rup(_cdiv(S, nS), 128)
    S_pad = nS * tS
    if S_pad != S:
        k = jnp.pad(k, ((0, 0), (0, S_pad - S), (0, 0)))
        v = jnp.pad(v, ((0, 0), (0, S_pad - S), (0, 0)))
        key_bias = jnp.pad(key_bias, ((0, 0), (0, 0), (0, S_pad - S)),
                           constant_values=-1e30)

    # query-block tiling (second 'parallel' axis -> both v7x TensorCores busy even at bs=1)
    tq = nq_pad_in if nq_pad_in <= 128 else 128
    nq_pad = _rup(nq_pad_in, tq)
    if nq_pad != nq_pad_in:
        q = jnp.pad(q, ((0, nq_pad - nq_pad_in), (0, 0)))
    gq = nq_pad // tq

    out = pl.pallas_call(
        _flash_xattn_kernel,
        out_shape=jax.ShapeDtypeStruct((B, nq_pad, d_pad), jnp.float32),
        grid=(B, gq, nS),
        in_specs=[
            pl.BlockSpec((tq, d_pad), lambda b, qi, s: (qi, 0)),
            pl.BlockSpec((1, tS, d_pad), lambda b, qi, s: (b, s, 0)),
            pl.BlockSpec((1, tS, d_pad), lambda b, qi, s: (b, s, 0)),
            pl.BlockSpec((1, 1, tS), lambda b, qi, s: (b, 0, s)),
        ],
        out_specs=pl.BlockSpec((1, tq, d_pad), lambda b, qi, s: (b, qi, 0)),
        scratch_shapes=[pltpu.VMEM((tq, 1), jnp.float32),
                        pltpu.VMEM((tq, 1), jnp.float32),
                        pltpu.VMEM((tq, d_pad), jnp.float32)],
        compiler_params=pltpu.CompilerParams(
            dimension_semantics=("parallel", "parallel", "arbitrary")),
    )(q, k, v, key_bias)
    if nq_pad != nq_pad_in:
        out = out[:, :nq_pad_in]
    return out


# --------------------------------------------------------------------------
# fused heads: Wo projection + class head + 3-layer bbox MLP (+sigmoid)
# --------------------------------------------------------------------------
def _heads_kernel(x_ref, wo_ref, bo_ref, w1c_ref, b1c_ref, w2_ref, b2_ref,
                  w3_ref, b3_ref, cls_ref, box_ref, *, d_pad):
    x = x_ref[...].astype(jnp.bfloat16)
    hs = jnp.dot(x, wo_ref[...], preferred_element_type=jnp.float32) + bo_ref[...]
    hs16 = hs.astype(jnp.bfloat16)
    # packed [w1 | cls_w] -> one 256-wide matmul; slice class logits and MLP hidden from it
    y = jnp.dot(hs16, w1c_ref[...], preferred_element_type=jnp.float32) + b1c_ref[...]
    cls_ref[...] = y[:, d_pad:].astype(cls_ref.dtype)
    h = jnp.maximum(y[:, :d_pad], 0.0).astype(jnp.bfloat16)
    h2 = jnp.maximum(jnp.dot(h, w2_ref[...], preferred_element_type=jnp.float32) + b2_ref[...],
                     0.0).astype(jnp.bfloat16)
    box_ref[...] = jax.nn.sigmoid(
        jnp.dot(h2, w3_ref[...], preferred_element_type=jnp.float32) + b3_ref[...]
    ).astype(box_ref.dtype)


def pallas_heads(x, wo, bo, w1c, b1c, w2, b2, w3, b3, d_pad):
    """x: (M, d_pad) decoder output tokens. Returns padded (M_pad, 128) cls and box slabs."""
    M = x.shape[0]
    tm, gm, M_pad = _row_tiles(M)
    xp = _pad2(x, M_pad, d_pad)
    n2 = w1c.shape[1]   # d_pad + 128
    return pl.pallas_call(
        functools.partial(_heads_kernel, d_pad=d_pad),
        out_shape=(jax.ShapeDtypeStruct((M_pad, 128), jnp.float32),
                   jax.ShapeDtypeStruct((M_pad, 128), jnp.float32)),
        grid=(gm,),
        in_specs=[
            pl.BlockSpec((tm, d_pad), lambda i: (i, 0)),
            pl.BlockSpec((d_pad, d_pad), lambda i: (0, 0)),
            pl.BlockSpec((1, d_pad), lambda i: (0, 0)),
            pl.BlockSpec((d_pad, n2), lambda i: (0, 0)),
            pl.BlockSpec((1, n2), lambda i: (0, 0)),
            pl.BlockSpec((d_pad, d_pad), lambda i: (0, 0)),
            pl.BlockSpec((1, d_pad), lambda i: (0, 0)),
            pl.BlockSpec((d_pad, 128), lambda i: (0, 0)),
            pl.BlockSpec((1, 128), lambda i: (0, 0)),
        ],
        out_specs=(pl.BlockSpec((tm, 128), lambda i: (i, 0)),
                   pl.BlockSpec((tm, 128), lambda i: (i, 0))),
        compiler_params=pltpu.CompilerParams(dimension_semantics=("parallel",)),
    )(xp, wo, bo, w1c, b1c, w2, b2, w3, b3)


# --------------------------------------------------------------------------
# Model (glue in plain JAX, hot paths in Pallas)
# --------------------------------------------------------------------------
def vistr_forward(params, src, mask, pos, *, num_frames, num_queries, num_classes):
    """Mirrors VisTR.forward after the backbone.
    src: (n, C_in, H, W); mask: (n, H, W) bool (True = padded); pos: (n//T, T, hidden, H, W)."""
    n, c_in, H, W = src.shape
    bs = n // num_frames
    hidden = pos.shape[2]
    d_pad = params["Wq_t"].shape[0]
    cin_pad = params["proj_wt"].shape[0]
    nq_pad = params["query_embed"].shape[0]
    n_cls = num_classes + 1
    S = num_frames * H * W
    M_tok = n * H * W                    # == bs * S, token order (frame, h, w) per video

    # --- token-major features and positional encodings (one-time raw-input padding) --------
    tokens = jnp.transpose(src, (0, 2, 3, 1)).reshape(M_tok, c_in)
    pos_tok = jnp.transpose(pos, (0, 1, 3, 4, 2)).reshape(M_tok, hidden)
    tm, gm, M_pad = _row_tiles(M_tok)
    tokens = _pad2(tokens, M_pad, cin_pad)
    pos_tok = _pad2(pos_tok, M_pad, d_pad)

    # --- fused: input_proj (1x1 conv) + pos add + K/V projection -> bf16 planes -------------
    k_pl, v_pl = pallas_src_kv(tokens, pos_tok,
                               params["proj_wt"], params["proj_b"],
                               params["Wkv_t"], params["bkv"], d_pad, tm, gm)
    if M_pad != M_tok:
        k_pl, v_pl = k_pl[:M_tok], v_pl[:M_tok]
    k_pl = k_pl.reshape(bs, S, d_pad)
    v_pl = v_pl.reshape(bs, S, d_pad)

    # --- query projection (attention scale folded into Wq/bq at init), bf16 output ----------
    q = pallas_linear(params["query_embed"], params["Wq_t"], params["bq"],
                      out_dtype=jnp.bfloat16)                       # (nq_pad, d_pad) bf16

    # --- additive key-padding bias (1 on padded pixels -> -1e30) ----------------------------
    key_bias = jnp.where(mask.reshape(bs, 1, S), -1e30, 0.0).astype(jnp.float32)

    # --- transformer stand-in: single cross-attention decoder layer -------------------------
    attn = pallas_cross_attention(q, k_pl, v_pl, key_bias)          # (bs, nq_pad, d_pad) f32

    # --- fused Wo output projection + class head + bbox MLP (len(hs.shape)==4 branch) -------
    cls, box = pallas_heads(attn.reshape(bs * nq_pad, d_pad),
                            params["Wo_t"], params["bo"],
                            params["W1c_t"], params["b1c"],
                            params["W2_t"], params["b2"],
                            params["W3_t"], params["b3"], d_pad)
    cls = cls[:bs * nq_pad].reshape(bs, nq_pad, -1)[:, :num_queries, :n_cls]
    box = box[:bs * nq_pad].reshape(bs, nq_pad, -1)[:, :num_queries, :4]
    # hs corresponds to (num_dec_layers=1, bs, nq, hidden); we return the last layer's heads.
    return {"pred_logits": cls, "pred_boxes": box}


def init_params(key, c_in, hidden, num_queries, num_classes):
    """Weights are stored pre-transposed (in, out), padded to lane/sublane-aligned shapes and
    cast to bf16 (MXU operands); biases stay f32."""
    ks = jax.random.split(key, 10)
    sc = 0.02
    d_pad = _rup(hidden, 128)
    cin_pad = _rup(c_in, 128)
    nq_pad = _rup(num_queries, 8)
    n_cls = num_classes + 1

    def dense(k, n_in, n_out):
        return (sc * jax.random.normal(k, (n_in, n_out), jnp.float32),
                jnp.zeros((n_out,), jnp.float32))

    p = {}
    # input_proj (1x1 conv)
    w, b = dense(ks[0], c_in, hidden)
    p["proj_wt"] = _pad2(w, cin_pad, d_pad).astype(jnp.bfloat16)
    p["proj_b"] = _pad2(b.reshape(1, -1), 1, d_pad)
    # query embedding (kept padded)
    qe = sc * jax.random.normal(ks[1], (num_queries, hidden), jnp.float32)
    p["query_embed"] = _pad2(qe, nq_pad, d_pad)
    # Q projection with 1/sqrt(hidden) attention scale folded in
    wq, bq = dense(ks[2], hidden, hidden)
    scale = 1.0 / math.sqrt(hidden)
    p["Wq_t"] = _pad2(wq * scale, d_pad, d_pad).astype(jnp.bfloat16)
    p["bq"] = _pad2((bq * scale).reshape(1, -1), 1, d_pad)
    # packed K/V projection weights: (d_pad, 2*d_pad), K in cols [:d_pad], V in [d_pad:]
    wk, bk = dense(ks[3], hidden, hidden)
    wv, bv = dense(ks[4], hidden, hidden)
    wkv = jnp.zeros((d_pad, 2 * d_pad), jnp.float32)
    wkv = wkv.at[:hidden, :hidden].set(wk).at[:hidden, d_pad:d_pad + hidden].set(wv)
    p["Wkv_t"] = wkv.astype(jnp.bfloat16)
    bkv = jnp.zeros((1, 2 * d_pad), jnp.float32)
    p["bkv"] = bkv.at[0, :hidden].set(bk).at[0, d_pad:d_pad + hidden].set(bv)
    # output projection (fused into heads kernel)
    wo, bo = dense(ks[5], hidden, hidden)
    p["Wo_t"] = _pad2(wo, d_pad, d_pad).astype(jnp.bfloat16)
    p["bo"] = _pad2(bo.reshape(1, -1), 1, d_pad)
    # class head packed next to bbox-MLP layer 1 -> single 256-wide matmul in the heads kernel
    wc, bc = dense(ks[6], hidden, n_cls)
    w1, b1 = dense(ks[7], hidden, hidden)
    w1c = jnp.zeros((d_pad, d_pad + 128), jnp.float32)
    w1c = w1c.at[:hidden, :hidden].set(w1).at[:hidden, d_pad:d_pad + n_cls].set(wc)
    p["W1c_t"] = w1c.astype(jnp.bfloat16)
    b1c = jnp.zeros((1, d_pad + 128), jnp.float32)
    p["b1c"] = b1c.at[0, :hidden].set(b1).at[0, d_pad:d_pad + n_cls].set(bc)
    w2, b2 = dense(ks[8], hidden, hidden)
    p["W2_t"] = _pad2(w2, d_pad, d_pad).astype(jnp.bfloat16)
    p["b2"] = _pad2(b2.reshape(1, -1), 1, d_pad)
    w3, b3 = dense(ks[9], hidden, 4)
    p["W3_t"] = _pad2(w3, d_pad, 128).astype(jnp.bfloat16)
    p["b3"] = _pad2(b3.reshape(1, -1), 1, 128)
    return p


if __name__ == "__main__":
    # small shapes: bs(videos)=2, num_frames=2 -> n=4 frames; C_in=8; H=W=8; hidden=32;
    # num_queries=8; num_classes=4
    bs, T, c_in, H, W = 2, 2, 8, 8, 8
    hidden, num_queries, num_classes = 32, 8, 4
    n = bs * T

    key = jax.random.PRNGKey(0)
    k_src, k_pos, k_par = jax.random.split(key, 3)

    src = jax.random.normal(k_src, (n, c_in, H, W), jnp.float32)        # backbone feature map (NCHW)
    mask = jnp.zeros((n, H, W), jnp.bool_).at[:, :, -2:].set(True)      # True on padded pixels
    pos = jax.random.normal(k_pos, (bs, T, hidden, H, W), jnp.float32)  # positional encodings

    params = init_params(k_par, c_in, hidden, num_queries, num_classes)

    fwd = jax.jit(functools.partial(vistr_forward, num_frames=T,
                                    num_queries=num_queries, num_classes=num_classes))
    out = fwd(params, src, mask, pos)
    jax.block_until_ready(out["pred_logits"])
    jax.block_until_ready(out["pred_boxes"])

    assert out["pred_logits"].shape == (bs, num_queries, num_classes + 1)
    assert out["pred_boxes"].shape == (bs, num_queries, 4)
    assert bool(jnp.all(jnp.isfinite(out["pred_logits"])))
    assert bool(jnp.all(jnp.isfinite(out["pred_boxes"])))
    assert bool(jnp.all(out["pred_boxes"] >= 0.0)) and bool(jnp.all(out["pred_boxes"] <= 1.0))
    print("KERNEL_OK")
</pallas_src>

<mosaic_0001>
module attributes {stable_mosaic.version = 11 : i64} {
  func.func @_src_kv_kernel(%arg0: i32, %arg1: memref<128x128xf32, #tpu.memory_space<vmem>>, %arg2: memref<128x128xf32, #tpu.memory_space<vmem>>, %arg3: memref<128x128xbf16, #tpu.memory_space<vmem>>, %arg4: memref<1x128xf32, #tpu.memory_space<vmem>>, %arg5: memref<128x256xbf16, #tpu.memory_space<vmem>>, %arg6: memref<1x256xf32, #tpu.memory_space<vmem>>, %arg7: memref<128x128xbf16, #tpu.memory_space<vmem>>, %arg8: memref<128x128xbf16, #tpu.memory_space<vmem>>) attributes {dimension_semantics = [#tpu.dimension_semantics<parallel>], iteration_bounds = array<i64: 2>, scalar_prefetch = 0 : i64, scratch_operands = 0 : i64, tpu.core_type = #tpu.core_type<tc>, window_params = [{transform_indices = @transform_0, window_bounds = array<i64: 128, 128>}, {transform_indices = @transform_1, window_bounds = array<i64: 128, 128>}, {pipeline_mode = #tpu.pipeline_mode<synchronous>, transform_indices = @transform_2, window_bounds = array<i64: 128, 128>}, {pipeline_mode = #tpu.pipeline_mode<synchronous>, transform_indices = @transform_3, window_bounds = array<i64: 1, 128>}, {pipeline_mode = #tpu.pipeline_mode<synchronous>, transform_indices = @transform_4, window_bounds = array<i64: 128, 256>}, {pipeline_mode = #tpu.pipeline_mode<synchronous>, transform_indices = @transform_5, window_bounds = array<i64: 1, 256>}, {transform_indices = @transform_6, window_bounds = array<i64: 128, 128>}, {transform_indices = @transform_7, window_bounds = array<i64: 128, 128>}]} {
    %c0 = arith.constant 0 : index
    %c0_0 = arith.constant 0 : index
    %0 = vector.load %arg1[%c0, %c0_0] : memref<128x128xf32, #tpu.memory_space<vmem>>, vector<128x128xf32>
    %1 = arith.truncf %0 : vector<128x128xf32> to vector<128x128xbf16>
    %c0_1 = arith.constant 0 : index
    %c0_2 = arith.constant 0 : index
    %2 = vector.load %arg3[%c0_1, %c0_2] : memref<128x128xbf16, #tpu.memory_space<vmem>>, vector<128x128xbf16>
    %cst = arith.constant dense<0.000000e+00> : vector<128x128xf32>
    %3 = tpu.matmul %1, %2, %cst {dimension_numbers = #tpu.dot_dimension_numbers<[1], [0], [0], [1], [0, 0, 1, 1], [], []>} : vector<128x128xbf16>, vector<128x128xbf16>, vector<128x128xf32> -> vector<128x128xf32>
    %c0_3 = arith.constant 0 : index
    %c0_4 = arith.constant 0 : index
    %4 = vector.load %arg4[%c0_3, %c0_4] : memref<1x128xf32, #tpu.memory_space<vmem>>, vector<1x128xf32>
    %5 = vector.broadcast %4 : vector<1x128xf32> to vector<128x128xf32>
    %6 = arith.addf %3, %5 : vector<128x128xf32>
    %c0_5 = arith.constant 0 : index
    %c0_6 = arith.constant 0 : index
    %7 = vector.load %arg2[%c0_5, %c0_6] : memref<128x128xf32, #tpu.memory_space<vmem>>, vector<128x128xf32>
    %8 = arith.addf %6, %7 : vector<128x128xf32>
    %9 = arith.truncf %8 : vector<128x128xf32> to vector<128x128xbf16>
    %c0_7 = arith.constant 0 : index
    %c0_8 = arith.constant 0 : index
    %10 = vector.load %arg5[%c0_7, %c0_8] : memref<128x256xbf16, #tpu.memory_space<vmem>>, vector<128x256xbf16>
    %cst_9 = arith.constant dense<0.000000e+00> : vector<128x256xf32>
    %11 = tpu.matmul %9, %10, %cst_9 {dimension_numbers = #tpu.dot_dimension_numbers<[1], [0], [0], [1], [0, 0, 1, 1], [], []>} : vector<128x128xbf16>, vector<128x256xbf16>, vector<128x256xf32> -> vector<128x256xf32>
    %c0_10 = arith.constant 0 : index
    %c0_11 = arith.constant 0 : index
    %12 = vector.load %arg6[%c0_10, %c0_11] : memref<1x256xf32, #tpu.memory_space<vmem>>, vector<1x256xf32>
    %13 = vector.broadcast %12 : vector<1x256xf32> to vector<128x256xf32>
    %14 = arith.addf %11, %13 : vector<128x256xf32>
    %15 = vector.extract_strided_slice %14 {offsets = [0, 0], sizes = [128, 128], strides = [1, 1]} : vector<128x256xf32> to vector<128x128xf32>
    %16 = arith.truncf %15 : vector<128x128xf32> to vector<128x128xbf16>
    %c0_12 = arith.constant 0 : index
    %c0_13 = arith.constant 0 : index
    %17 = vector.load %arg7[%c0_12, %c0_13] : memref<128x128xbf16, #tpu.memory_space<vmem>>, vector<128x128xbf16>
    tpu.vector_store %arg7[%c0_12, %c0_13], %16 {strides = array<i32>} : memref<128x128xbf16, #tpu.memory_space<vmem>>, vector<128x128xbf16>,
    %18 = vector.extract_strided_slice %14 {offsets = [0, 128], sizes = [128, 128], strides = [1, 1]} : vector<128x256xf32> to vector<128x128xf32>
    %19 = arith.truncf %18 : vector<128x128xf32> to vector<128x128xbf16>
    %c0_14 = arith.constant 0 : index
    %c0_15 = arith.constant 0 : index
    %20 = vector.load %arg8[%c0_14, %c0_15] : memref<128x128xbf16, #tpu.memory_space<vmem>>, vector<128x128xbf16>
    tpu.vector_store %arg8[%c0_14, %c0_15], %19 {strides = array<i32>} : memref<128x128xbf16, #tpu.memory_space<vmem>>, vector<128x128xbf16>,
    return
  }
  func.func @transform_0(%arg0: i32) -> (i32, i32) {
    %c0_i32 = arith.constant 0 : i32
    %c0_i32_0 = arith.constant 0 : i32
    return %arg0, %c0_i32 : i32, i32
  }
  func.func @transform_1(%arg0: i32) -> (i32, i32) {
    %c0_i32 = arith.constant 0 : i32
    %c0_i32_0 = arith.constant 0 : i32
    return %arg0, %c0_i32 : i32, i32
  }
  func.func @transform_2(%arg0: i32) -> (i32, i32) {
    %c0_i32 = arith.constant 0 : i32
    %c0_i32_0 = arith.constant 0 : i32
    %c0_i32_1 = arith.constant 0 : i32
    return %c0_i32, %c0_i32_0 : i32, i32
  }
  func.func @transform_3(%arg0: i32) -> (i32, i32) {
    %c0_i32 = arith.constant 0 : i32
    %c0_i32_0 = arith.constant 0 : i32
    %c0_i32_1 = arith.constant 0 : i32
    return %c0_i32, %c0_i32_0 : i32, i32
  }
  func.func @transform_4(%arg0: i32) -> (i32, i32) {
    %c0_i32 = arith.constant 0 : i32
    %c0_i32_0 = arith.constant 0 : i32
    %c0_i32_1 = arith.constant 0 : i32
    return %c0_i32, %c0_i32_0 : i32, i32
  }
  func.func @transform_5(%arg0: i32) -> (i32, i32) {
    %c0_i32 = arith.constant 0 : i32
    %c0_i32_0 = arith.constant 0 : i32
    %c0_i32_1 = arith.constant 0 : i32
    return %c0_i32, %c0_i32_0 : i32, i32
  }
  func.func @transform_6(%arg0: i32) -> (i32, i32) {
    %c0_i32 = arith.constant 0 : i32
    %c0_i32_0 = arith.constant 0 : i32
    return %arg0, %c0_i32 : i32, i32
  }
  func.func @transform_7(%arg0: i32) -> (i32, i32) {
    %c0_i32 = arith.constant 0 : i32
    %c0_i32_0 = arith.constant 0 : i32
    return %arg0, %c0_i32 : i32, i32
  }
}

module attributes {stable_mosaic.version = 11 : i64} {
  func.func @_linear_kernel_1k(%arg0: i32, %arg1: i32, %arg2: memref<8x128xf32, #tpu.memory_space<vmem>>, %arg3: memref<128x128xbf16, #tpu.memory_space<vmem>>, %arg4: memref<1x128xf32, #tpu.memory_space<vmem>>, %arg5: memref<8x128xbf16, #tpu.memory_space<vmem>>) attributes {dimension_semantics = [#tpu.dimension_semantics<parallel>, #tpu.dimension_semantics<parallel>], iteration_bounds = array<i64: 1, 1>, scalar_prefetch = 0 : i64, scratch_operands = 0 : i64, tpu.core_type = #tpu.core_type<tc>, window_params = [{transform_indices = @transform_0, window_bounds = array<i64: 8, 128>}, {transform_indices = @transform_1, window_bounds = array<i64: 128, 128>}, {transform_indices = @transform_2, window_bounds = array<i64: 1, 128>}, {transform_indices = @transform_3, window_bounds = array<i64: 8, 128>}]} {
    %c0 = arith.constant 0 : index
    %c0_0 = arith.constant 0 : index
    %0 = vector.load %arg2[%c0, %c0_0] : memref<8x128xf32, #tpu.memory_space<vmem>>, vector<8x128xf32>
    %1 = arith.truncf %0 : vector<8x128xf32> to vector<8x128xbf16>
    %c0_1 = arith.constant 0 : index
    %c0_2 = arith.constant 0 : index
    %2 = vector.load %arg3[%c0_1, %c0_2] : memref<128x128xbf16, #tpu.memory_space<vmem>>, vector<128x128xbf16>
    %cst = arith.constant dense<0.000000e+00> : vector<8x128xf32>
    %3 = tpu.matmul %1, %2, %cst {dimension_numbers = #tpu.dot_dimension_numbers<[1], [0], [0], [1], [0, 0, 1, 1], [], []>} : vector<8x128xbf16>, vector<128x128xbf16>, vector<8x128xf32> -> vector<8x128xf32>
    %c0_3 = arith.constant 0 : index
    %c0_4 = arith.constant 0 : index
    %4 = vector.load %arg4[%c0_3, %c0_4] : memref<1x128xf32, #tpu.memory_space<vmem>>, vector<1x128xf32>
    %5 = vector.broadcast %4 : vector<1x128xf32> to vector<8x128xf32>
    %6 = arith.addf %3, %5 : vector<8x128xf32>
    %7 = arith.truncf %6 : vector<8x128xf32> to vector<8x128xbf16>
    %c0_5 = arith.constant 0 : index
    %c0_6 = arith.constant 0 : index
    %8 = vector.load %arg5[%c0_5, %c0_6] : memref<8x128xbf16, #tpu.memory_space<vmem>>, vector<8x128xbf16>
    tpu.vector_store %arg5[%c0_5, %c0_6], %7 {strides = array<i32>} : memref<8x128xbf16, #tpu.memory_space<vmem>>, vector<8x128xbf16>,
    return
  }
  func.func @transform_0(%arg0: i32, %arg1: i32) -> (i32, i32) {
    %c0_i32 = arith.constant 0 : i32
    %c0_i32_0 = arith.constant 0 : i32
    return %arg0, %c0_i32 : i32, i32
  }
  func.func @transform_1(%arg0: i32, %arg1: i32) -> (i32, i32) {
    %c0_i32 = arith.constant 0 : i32
    %c0_i32_0 = arith.constant 0 : i32
    return %c0_i32, %arg1 : i32, i32
  }
  func.func @transform_2(%arg0: i32, %arg1: i32) -> (i32, i32) {
    %c0_i32 = arith.constant 0 : i32
    %c0_i32_0 = arith.constant 0 : i32
    return %c0_i32, %arg1 : i32, i32
  }
  func.func @transform_3(%arg0: i32, %arg1: i32) -> (i32, i32) {
    %c0_i32 = arith.constant 0 : i32
    return %arg0, %arg1 : i32, i32
  }
}

module attributes {stable_mosaic.version = 11 : i64} {
  func.func @_heads_kernel(%arg0: i32, %arg1: memref<8x128xf32, #tpu.memory_space<vmem>>, %arg2: memref<128x128xbf16, #tpu.memory_space<vmem>>, %arg3: memref<1x128xf32, #tpu.memory_space<vmem>>, %arg4: memref<128x256xbf16, #tpu.memory_space<vmem>>, %arg5: memref<1x256xf32, #tpu.memory_space<vmem>>, %arg6: memref<128x128xbf16, #tpu.memory_space<vmem>>, %arg7: memref<1x128xf32, #tpu.memory_space<vmem>>, %arg8: memref<128x128xbf16, #tpu.memory_space<vmem>>, %arg9: memref<1x128xf32, #tpu.memory_space<vmem>>, %arg10: memref<8x128xf32, #tpu.memory_space<vmem>>, %arg11: memref<8x128xf32, #tpu.memory_space<vmem>>) attributes {dimension_semantics = [#tpu.dimension_semantics<parallel>], iteration_bounds = array<i64: 2>, scalar_prefetch = 0 : i64, scratch_operands = 0 : i64, tpu.core_type = #tpu.core_type<tc>, window_params = [{transform_indices = @transform_0, window_bounds = array<i64: 8, 128>}, {pipeline_mode = #tpu.pipeline_mode<synchronous>, transform_indices = @transform_1, window_bounds = array<i64: 128, 128>}, {pipeline_mode = #tpu.pipeline_mode<synchronous>, transform_indices = @transform_2, window_bounds = array<i64: 1, 128>}, {pipeline_mode = #tpu.pipeline_mode<synchronous>, transform_indices = @transform_3, window_bounds = array<i64: 128, 256>}, {pipeline_mode = #tpu.pipeline_mode<synchronous>, transform_indices = @transform_4, window_bounds = array<i64: 1, 256>}, {pipeline_mode = #tpu.pipeline_mode<synchronous>, transform_indices = @transform_5, window_bounds = array<i64: 128, 128>}, {pipeline_mode = #tpu.pipeline_mode<synchronous>, transform_indices = @transform_6, window_bounds = array<i64: 1, 128>}, {pipeline_mode = #tpu.pipeline_mode<synchronous>, transform_indices = @transform_7, window_bounds = array<i64: 128, 128>}, {pipeline_mode = #tpu.pipeline_mode<synchronous>, transform_indices = @transform_8, window_bounds = array<i64: 1, 128>}, {transform_indices = @transform_9, window_bounds = array<i64: 8, 128>}, {transform_indices = @transform_10, window_bounds = array<i64: 8, 128>}]} {
    %c0 = arith.constant 0 : index
    %c0_0 = arith.constant 0 : index
    %0 = vector.load %arg1[%c0, %c0_0] : memref<8x128xf32, #tpu.memory_space<vmem>>, vector<8x128xf32>
    %1 = arith.truncf %0 : vector<8x128xf32> to vector<8x128xbf16>
    %c0_1 = arith.constant 0 : index
    %c0_2 = arith.constant 0 : index
    %2 = vector.load %arg2[%c0_1, %c0_2] : memref<128x128xbf16, #tpu.memory_space<vmem>>, vector<128x128xbf16>
    %cst = arith.constant dense<0.000000e+00> : vector<8x128xf32>
    %3 = tpu.matmul %1, %2, %cst {dimension_numbers = #tpu.dot_dimension_numbers<[1], [0], [0], [1], [0, 0, 1, 1], [], []>} : vector<8x128xbf16>, vector<128x128xbf16>, vector<8x128xf32> -> vector<8x128xf32>
    %c0_3 = arith.constant 0 : index
    %c0_4 = arith.constant 0 : index
    %4 = vector.load %arg3[%c0_3, %c0_4] : memref<1x128xf32, #tpu.memory_space<vmem>>, vector<1x128xf32>
    %5 = vector.broadcast %4 : vector<1x128xf32> to vector<8x128xf32>
    %6 = arith.addf %3, %5 : vector<8x128xf32>
    %7 = arith.truncf %6 : vector<8x128xf32> to vector<8x128xbf16>
    %c0_5 = arith.constant 0 : index
    %c0_6 = arith.constant 0 : index
    %8 = vector.load %arg4[%c0_5, %c0_6] : memref<128x256xbf16, #tpu.memory_space<vmem>>, vector<128x256xbf16>
    %cst_7 = arith.constant dense<0.000000e+00> : vector<8x256xf32>
    %9 = tpu.matmul %7, %8, %cst_7 {dimension_numbers = #tpu.dot_dimension_numbers<[1], [0], [0], [1], [0, 0, 1, 1], [], []>} : vector<8x128xbf16>, vector<128x256xbf16>, vector<8x256xf32> -> vector<8x256xf32>
    %c0_8 = arith.constant 0 : index
    %c0_9 = arith.constant 0 : index
    %10 = vector.load %arg5[%c0_8, %c0_9] : memref<1x256xf32, #tpu.memory_space<vmem>>, vector<1x256xf32>
    %11 = vector.broadcast %10 : vector<1x256xf32> to vector<8x256xf32>
    %12 = arith.addf %9, %11 : vector<8x256xf32>
    %13 = vector.extract_strided_slice %12 {offsets = [0, 128], sizes = [8, 128], strides = [1, 1]} : vector<8x256xf32> to vector<8x128xf32>
    %c0_10 = arith.constant 0 : index
    %c0_11 = arith.constant 0 : index
    %14 = vector.load %arg10[%c0_10, %c0_11] : memref<8x128xf32, #tpu.memory_space<vmem>>, vector<8x128xf32>
    tpu.vector_store %arg10[%c0_10, %c0_11], %13 {strides = array<i32>} : memref<8x128xf32, #tpu.memory_space<vmem>>, vector<8x128xf32>,
    %15 = vector.extract_strided_slice %12 {offsets = [0, 0], sizes = [8, 128], strides = [1, 1]} : vector<8x256xf32> to vector<8x128xf32>
    %cst_12 = arith.constant 0.000000e+00 : f32
    %16 = vector.broadcast %cst_12 : f32 to vector<8x128xf32>
    %17 = arith.maximumf %15, %16 : vector<8x128xf32>
    %18 = arith.truncf %17 : vector<8x128xf32> to vector<8x128xbf16>
    %c0_13 = arith.constant 0 : index
    %c0_14 = arith.constant 0 : index
    %19 = vector.load %arg6[%c0_13, %c0_14] : memref<128x128xbf16, #tpu.memory_space<vmem>>, vector<128x128xbf16>
    %cst_15 = arith.constant dense<0.000000e+00> : vector<8x128xf32>
    %20 = tpu.matmul %18, %19, %cst_15 {dimension_numbers = #tpu.dot_dimension_numbers<[1], [0], [0], [1], [0, 0, 1, 1], [], []>} : vector<8x128xbf16>, vector<128x128xbf16>, vector<8x128xf32> -> vector<8x128xf32>
    %c0_16 = arith.constant 0 : index
    %c0_17 = arith.constant 0 : index
    %21 = vector.load %arg7[%c0_16, %c0_17] : memref<1x128xf32, #tpu.memory_space<vmem>>, vector<1x128xf32>
    %22 = vector.broadcast %21 : vector<1x128xf32> to vector<8x128xf32>
    %23 = arith.addf %20, %22 : vector<8x128xf32>
    %cst_18 = arith.constant 0.000000e+00 : f32
    %24 = vector.broadcast %cst_18 : f32 to vector<8x128xf32>
    %25 = arith.maximumf %23, %24 : vector<8x128xf32>
    %26 = arith.truncf %25 : vector<8x128xf32> to vector<8x128xbf16>
    %c0_19 = arith.constant 0 : index
    %c0_20 = arith.constant 0 : index
    %27 = vector.load %arg8[%c0_19, %c0_20] : memref<128x128xbf16, #tpu.memory_space<vmem>>, vector<128x128xbf16>
    %cst_21 = arith.constant dense<0.000000e+00> : vector<8x128xf32>
    %28 = tpu.matmul %26, %27, %cst_21 {dimension_numbers = #tpu.dot_dimension_numbers<[1], [0], [0], [1], [0, 0, 1, 1], [], []>} : vector<8x128xbf16>, vector<128x128xbf16>, vector<8x128xf32> -> vector<8x128xf32>
    %c0_22 = arith.constant 0 : index
    %c0_23 = arith.constant 0 : index
    %29 = vector.load %arg9[%c0_22, %c0_23] : memref<1x128xf32, #tpu.memory_space<vmem>>, vector<1x128xf32>
    %30 = vector.broadcast %29 : vector<1x128xf32> to vector<8x128xf32>
    %31 = arith.addf %28, %30 : vector<8x128xf32>
    %32 = arith.negf %31 : vector<8x128xf32>
    %33 = math.exp %32 : vector<8x128xf32>
    %cst_24 = arith.constant 1.000000e+00 : f32
    %34 = vector.broadcast %cst_24 : f32 to vector<8x128xf32>
    %35 = arith.addf %34, %33 : vector<8x128xf32>
    %36 = arith.divf %34, %35 : vector<8x128xf32>
    %c0_25 = arith.constant 0 : index
    %c0_26 = arith.constant 0 : index
    %37 = vector.load %arg11[%c0_25, %c0_26] : memref<8x128xf32, #tpu.memory_space<vmem>>, vector<8x128xf32>
    tpu.vector_store %arg11[%c0_25, %c0_26], %36 {strides = array<i32>} : memref<8x128xf32, #tpu.memory_space<vmem>>, vector<8x128xf32>,
    return
  }
  func.func @transform_0(%arg0: i32) -> (i32, i32) {
    %c0_i32 = arith.constant 0 : i32
    %c0_i32_0 = arith.constant 0 : i32
    return %arg0, %c0_i32 : i32, i32
  }
  func.func @transform_1(%arg0: i32) -> (i32, i32) {
    %c0_i32 = arith.constant 0 : i32
    %c0_i32_0 = arith.constant 0 : i32
    %c0_i32_1 = arith.constant 0 : i32
    return %c0_i32, %c0_i32_0 : i32, i32
  }
  func.func @transform_2(%arg0: i32) -> (i32, i32) {
    %c0_i32 = arith.constant 0 : i32
    %c0_i32_0 = arith.constant 0 : i32
    %c0_i32_1 = arith.constant 0 : i32
    return %c0_i32, %c0_i32_0 : i32, i32
  }
  func.func @transform_3(%arg0: i32) -> (i32, i32) {
    %c0_i32 = arith.constant 0 : i32
    %c0_i32_0 = arith.constant 0 : i32
    %c0_i32_1 = arith.constant 0 : i32
    return %c0_i32, %c0_i32_0 : i32, i32
  }
  func.func @transform_4(%arg0: i32) -> (i32, i32) {
    %c0_i32 = arith.constant 0 : i32
    %c0_i32_0 = arith.constant 0 : i32
    %c0_i32_1 = arith.constant 0 : i32
    return %c0_i32, %c0_i32_0 : i32, i32
  }
  func.func @transform_5(%arg0: i32) -> (i32, i32) {
    %c0_i32 = arith.constant 0 : i32
    %c0_i32_0 = arith.constant 0 : i32
    %c0_i32_1 = arith.constant 0 : i32
    return %c0_i32, %c0_i32_0 : i32, i32
  }
  func.func @transform_6(%arg0: i32) -> (i32, i32) {
    %c0_i32 = arith.constant 0 : i32
    %c0_i32_0 = arith.constant 0 : i32
    %c0_i32_1 = arith.constant 0 : i32
    return %c0_i32, %c0_i32_0 : i32, i32
  }
  func.func @transform_7(%arg0: i32) -> (i32, i32) {
    %c0_i32 = arith.constant 0 : i32
    %c0_i32_0 = arith.constant 0 : i32
    %c0_i32_1 = arith.constant 0 : i32
    return %c0_i32, %c0_i32_0 : i32, i32
  }
  func.func @transform_8(%arg0: i32) -> (i32, i32) {
    %c0_i32 = arith.constant 0 : i32
    %c0_i32_0 = arith.constant 0 : i32
    %c0_i32_1 = arith.constant 0 : i32
    return %c0_i32, %c0_i32_0 : i32, i32
  }
  func.func @transform_9(%arg0: i32) -> (i32, i32) {
    %c0_i32 = arith.constant 0 : i32
    %c0_i32_0 = arith.constant 0 : i32
    return %arg0, %c0_i32 : i32, i32
  }
  func.func @transform_10(%arg0: i32) -> (i32, i32) {
    %c0_i32 = arith.constant 0 : i32
    %c0_i32_0 = arith.constant 0 : i32
    return %arg0, %c0_i32 : i32, i32
  }
}

module attributes {stable_mosaic.version = 11 : i64} {
  func.func @_flash_xattn_kernel(%arg0: i32, %arg1: i32, %arg2: i32, %arg3: memref<8x128xbf16, #tpu.memory_space<vmem>>, %arg4: memref<1x128x128xbf16, #tpu.memory_space<vmem>>, %arg5: memref<1x128x128xbf16, #tpu.memory_space<vmem>>, %arg6: memref<1x1x128xf32, #tpu.memory_space<vmem>>, %arg7: memref<1x8x128xf32, #tpu.memory_space<vmem>>, %arg8: memref<8x1xf32, #tpu.memory_space<vmem>>, %arg9: memref<8x1xf32, #tpu.memory_space<vmem>>, %arg10: memref<8x128xf32, #tpu.memory_space<vmem>>) attributes {dimension_semantics = [#tpu.dimension_semantics<parallel>, #tpu.dimension_semantics<parallel>, #tpu.dimension_semantics<arbitrary>], iteration_bounds = array<i64: 2, 1, 1>, scalar_prefetch = 0 : i64, scratch_operands = 3 : i64, tpu.core_type = #tpu.core_type<tc>, window_params = [{transform_indices = @transform_0, window_bounds = array<i64: 8, 128>}, {transform_indices = @transform_1, window_bounds = array<i64: 1, 128, 128>}, {transform_indices = @transform_2, window_bounds = array<i64: 1, 128, 128>}, {transform_indices = @transform_3, window_bounds = array<i64: 1, 1, 128>}, {transform_indices = @transform_4, window_bounds = array<i64: 1, 8, 128>}]} {
    %c0_i32 = arith.constant 0 : i32
    %0 = arith.cmpi eq, %arg2, %c0_i32 : i32
    %1 = arith.extui %0 : i1 to i32
    %c0_i32_0 = arith.constant 0 : i32
    %2 = arith.cmpi ne, %1, %c0_i32_0 : i32
    scf.if %2 {
      %cst_28 = arith.constant 0xFF800000 : f32
      %39 = vector.broadcast %cst_28 : f32 to vector<8x1xf32>
      %c0_29 = arith.constant 0 : index
      %c0_30 = arith.constant 0 : index
      %40 = vector.load %arg8[%c0_29, %c0_30] : memref<8x1xf32, #tpu.memory_space<vmem>>, vector<8x1xf32>
      tpu.vector_store %arg8[%c0_29, %c0_30], %39 {strides = array<i32>} : memref<8x1xf32, #tpu.memory_space<vmem>>, vector<8x1xf32>,
      %cst_31 = arith.constant 0.000000e+00 : f32
      %41 = vector.broadcast %cst_31 : f32 to vector<8x1xf32>
      %c0_32 = arith.constant 0 : index
      %c0_33 = arith.constant 0 : index
      %42 = vector.load %arg9[%c0_32, %c0_33] : memref<8x1xf32, #tpu.memory_space<vmem>>, vector<8x1xf32>
      tpu.vector_store %arg9[%c0_32, %c0_33], %41 {strides = array<i32>} : memref<8x1xf32, #tpu.memory_space<vmem>>, vector<8x1xf32>,
      %cst_34 = arith.constant 0.000000e+00 : f32
      %43 = vector.broadcast %cst_34 : f32 to vector<8x128xf32>
      %c0_35 = arith.constant 0 : index
      %c0_36 = arith.constant 0 : index
      %44 = vector.load %arg10[%c0_35, %c0_36] : memref<8x128xf32, #tpu.memory_space<vmem>>, vector<8x128xf32>
      tpu.vector_store %arg10[%c0_35, %c0_36], %43 {strides = array<i32>} : memref<8x128xf32, #tpu.memory_space<vmem>>, vector<8x128xf32>,
    } else {
    }
    %c0 = arith.constant 0 : index
    %c0_1 = arith.constant 0 : index
    %3 = vector.load %arg3[%c0, %c0_1] : memref<8x128xbf16, #tpu.memory_space<vmem>>, vector<8x128xbf16>
    %c0_2 = arith.constant 0 : index
    %c0_3 = arith.constant 0 : index
    %c0_4 = arith.constant 0 : index
    %4 = vector.load %arg4[%c0_2, %c0_3, %c0_4] : memref<1x128x128xbf16, #tpu.memory_space<vmem>>, vector<1x128x128xbf16>
    %5 = vector.shape_cast %4 : vector<1x128x128xbf16> to vector<128x128xbf16>
    %c0_5 = arith.constant 0 : index
    %c0_6 = arith.constant 0 : index
    %c0_7 = arith.constant 0 : index
    %6 = vector.load %arg5[%c0_5, %c0_6, %c0_7] : memref<1x128x128xbf16, #tpu.memory_space<vmem>>, vector<1x128x128xbf16>
    %7 = vector.shape_cast %6 : vector<1x128x128xbf16> to vector<128x128xbf16>
    %c0_8 = arith.constant 0 : index
    %c0_9 = arith.constant 0 : index
    %c0_10 = arith.constant 0 : index
    %8 = vector.load %arg6[%c0_8, %c0_9, %c0_10] : memref<1x1x128xf32, #tpu.memory_space<vmem>>, vector<1x1x128xf32>
    %9 = vector.shape_cast %8 : vector<1x1x128xf32> to vector<1x128xf32>
    %cst = arith.constant dense<0.000000e+00> : vector<8x128xf32>
    %10 = tpu.matmul %3, %5, %cst {dimension_numbers = #tpu.dot_dimension_numbers<[1], [1], [0], [0], [0, 0, 1, 0], [], []>} : vector<8x128xbf16>, vector<128x128xbf16>, vector<8x128xf32> -> vector<8x128xf32>
    %11 = vector.broadcast %9 : vector<1x128xf32> to vector<8x128xf32>
    %12 = arith.addf %10, %11 : vector<8x128xf32>
    %c0_11 = arith.constant 0 : index
    %c0_12 = arith.constant 0 : index
    %13 = vector.load %arg8[%c0_11, %c0_12] : memref<8x1xf32, #tpu.memory_space<vmem>>, vector<8x1xf32>
    %cst_13 = arith.constant dense<0xFF800000> : vector<8xf32>
    %14 = vector.multi_reduction <maximumf>, %12, %cst_13 [1] : vector<8x128xf32> to vector<8xf32>
    %15 = vector.shape_cast %14 : vector<8xf32> to vector<8x1xf32>
    %16 = arith.maximumf %13, %15 : vector<8x1xf32>
    %17 = arith.subf %13, %16 : vector<8x1xf32>
    %18 = math.exp %17 : vector<8x1xf32>
    %19 = vector.broadcast %16 : vector<8x1xf32> to vector<8x128xf32>
    %20 = arith.subf %12, %19 : vector<8x128xf32>
    %21 = math.exp %20 : vector<8x128xf32>
    %c0_14 = arith.constant 0 : index
    %c0_15 = arith.constant 0 : index
    %22 = vector.load %arg9[%c0_14, %c0_15] : memref<8x1xf32, #tpu.memory_space<vmem>>, vector<8x1xf32>
    %23 = arith.mulf %18, %22 : vector<8x1xf32>
    %cst_16 = arith.constant dense<0.000000e+00> : vector<8xf32>
    %24 = vector.multi_reduction <add>, %21, %cst_16 [1] : vector<8x128xf32> to vector<8xf32>
    %25 = vector.shape_cast %24 : vector<8xf32> to vector<8x1xf32>
    %26 = arith.addf %23, %25 : vector<8x1xf32>
    %c0_17 = arith.constant 0 : index
    %c0_18 = arith.constant 0 : index
    %27 = vector.load %arg9[%c0_17, %c0_18] : memref<8x1xf32, #tpu.memory_space<vmem>>, vector<8x1xf32>
    tpu.vector_store %arg9[%c0_17, %c0_18], %26 {strides = array<i32>} : memref<8x1xf32, #tpu.memory_space<vmem>>, vector<8x1xf32>,
    %c0_19 = arith.constant 0 : index
    %c0_20 = arith.constant 0 : index
    %28 = vector.load %arg10[%c0_19, %c0_20] : memref<8x128xf32, #tpu.memory_space<vmem>>, vector<8x128xf32>
    %29 = vector.broadcast %18 : vector<8x1xf32> to vector<8x128xf32>
    %30 = arith.mulf %29, %28 : vector<8x128xf32>
    %31 = arith.truncf %21 : vector<8x128xf32> to vector<8x128xbf16>
    %cst_21 = arith.constant dense<0.000000e+00> : vector<8x128xf32>
    %32 = tpu.matmul %31, %7, %cst_21 {dimension_numbers = #tpu.dot_dimension_numbers<[1], [0], [0], [1], [0, 0, 1, 1], [], []>} : vector<8x128xbf16>, vector<128x128xbf16>, vector<8x128xf32> -> vector<8x128xf32>
    %33 = arith.addf %30, %32 : vector<8x128xf32>
    %c0_22 = arith.constant 0 : index
    %c0_23 = arith.constant 0 : index
    %34 = vector.load %arg10[%c0_22, %c0_23] : memref<8x128xf32, #tpu.memory_space<vmem>>, vector<8x128xf32>
    tpu.vector_store %arg10[%c0_22, %c0_23], %33 {strides = array<i32>} : memref<8x128xf32, #tpu.memory_space<vmem>>, vector<8x128xf32>,
    %c0_24 = arith.constant 0 : index
    %c0_25 = arith.constant 0 : index
    %35 = vector.load %arg8[%c0_24, %c0_25] : memref<8x1xf32, #tpu.memory_space<vmem>>, vector<8x1xf32>
    tpu.vector_store %arg8[%c0_24, %c0_25], %16 {strides = array<i32>} : memref<8x1xf32, #tpu.memory_space<vmem>>, vector<8x1xf32>,
    %c0_i32_26 = arith.constant 0 : i32
    %36 = arith.cmpi eq, %arg2, %c0_i32_26 : i32
    %37 = arith.extui %36 : i1 to i32
    %c0_i32_27 = arith.constant 0 : i32
    %38 = arith.cmpi ne, %37, %c0_i32_27 : i32
    scf.if %38 {
      %c0_28 = arith.constant 0 : index
      %c0_29 = arith.constant 0 : index
      %39 = vector.load %arg10[%c0_28, %c0_29] : memref<8x128xf32, #tpu.memory_space<vmem>>, vector<8x128xf32>
      %c0_30 = arith.constant 0 : index
      %c0_31 = arith.constant 0 : index
      %40 = vector.load %arg9[%c0_30, %c0_31] : memref<8x1xf32, #tpu.memory_space<vmem>>, vector<8x1xf32>
      %41 = tpu.reciprocal %40 {approx = true} : vector<8x1xf32> -> vector<8x1xf32>
      %42 = vector.broadcast %41 : vector<8x1xf32> to vector<8x128xf32>
      %43 = arith.mulf %39, %42 : vector<8x128xf32>
      %c0_32 = arith.constant 0 : index
      %c0_33 = arith.constant 0 : index
      %c0_34 = arith.constant 0 : index
      %44 = vector.load %arg7[%c0_32, %c0_33, %c0_34] : memref<1x8x128xf32, #tpu.memory_space<vmem>>, vector<1x8x128xf32>
      %45 = vector.shape_cast %44 : vector<1x8x128xf32> to vector<8x128xf32>
      %46 = vector.shape_cast %43 : vector<8x128xf32> to vector<1x8x128xf32>
      tpu.vector_store %arg7[%c0_32, %c0_33, %c0_34], %46 {strides = array<i32>} : memref<1x8x128xf32, #tpu.memory_space<vmem>>, vector<1x8x128xf32>,
    } else {
    }
    return
  }
  func.func @transform_0(%arg0: i32, %arg1: i32, %arg2: i32) -> (i32, i32) {
    %c0_i32 = arith.constant 0 : i32
    %c0_i32_0 = arith.constant 0 : i32
    return %arg1, %c0_i32 : i32, i32
  }
  func.func @transform_1(%arg0: i32, %arg1: i32, %arg2: i32) -> (i32, i32, i32) {
    %c0_i32 = arith.constant 0 : i32
    %c0_i32_0 = arith.constant 0 : i32
    return %arg0, %arg2, %c0_i32 : i32, i32, i32
  }
  func.func @transform_2(%arg0: i32, %arg1: i32, %arg2: i32) -> (i32, i32, i32) {
    %c0_i32 = arith.constant 0 : i32
    %c0_i32_0 = arith.constant 0 : i32
    return %arg0, %arg2, %c0_i32 : i32, i32, i32
  }
  func.func @transform_3(%arg0: i32, %arg1: i32, %arg2: i32) -> (i32, i32, i32) {
    %c0_i32 = arith.constant 0 : i32
    %c0_i32_0 = arith.constant 0 : i32
    return %arg0, %c0_i32, %arg2 : i32, i32, i32
  }
  func.func @transform_4(%arg0: i32, %arg1: i32, %arg2: i32) -> (i32, i32, i32) {
    %c0_i32 = arith.constant 0 : i32
    %c0_i32_0 = arith.constant 0 : i32
    return %arg0, %arg1, %c0_i32 : i32, i32, i32
  }
}

</mosaic_0001>

<llo_original>
// kernel: vistr_forward.4
$region0: #{vistr_forward.4}
  #allocation0 [shape = 'u32[]', space=smem, size = 0x4, offset = 0x4, fixed_abs, tag = 'smem constant byte address 0x4 - core index']
  #allocation1 [shape = 'u32[144,128]{1,0:T(1,128)}', space=vmem, size = 0x12000, scoped, tag = 'internal scratch']
  %s0 = inlined_call_operand.vmem [shape: f32[256,128], index: 0, kind: input, shape index: {}]
  %s1 = inlined_call_operand.vmem [shape: f32[256,128], index: 1, kind: input, shape index: {}]
  %s2 = inlined_call_operand.vmem [shape: bf16[128,128], index: 2, kind: input, shape index: {}]
  %s3 = inlined_call_operand.vmem [shape: f32[1,128], index: 3, kind: input, shape index: {}]
  %s4 = inlined_call_operand.vmem [shape: bf16[128,256], index: 4, kind: input, shape index: {}]
  %s5 = inlined_call_operand.vmem [shape: f32[1,256], index: 5, kind: input, shape index: {}]
  %s6 = inlined_call_operand.vmem [shape: bf16[256,128], index: 6, kind: output, shape index: {0}]
  %s7 = inlined_call_operand.vmem [shape: bf16[256,128], index: 7, kind: output, shape index: {1}]
  %8 = xla_tuple %s6, %s7
  %s9 = sld [smem:[#allocation0]]
  $region65: #{vistr_forward.4} parent=0
    _
  %s11 = ssub.s32 1, %s9
  %s12 = scalar_select 0, %s11, %s9
  loop: start=0, step=1, limit=4
  $region2: #{vistr_forward.4} parent=0 // loop_pre_header
    _
  $region3: #{vistr_forward.4} parent=0 // loop_header
    %s14 = sphi 0, %s18
    %p15 = scmp.ge.s32.totalorder %s14, 4
    %s24 = sphi 0, %s26
    %s27 = sphi 0, %s24
    %s28 = sphi 0, %s27
    %s44 = sphi 0, %s28
    %s50 = sphi 0, %s52
    %s53 = sphi 0, %s50
    %s54 = sphi 0, %s53
    %s70 = sphi 0, %s54
    %s74 = sphi 0, %s74
    %s76 = sphi 0, %s74
    %s77 = sphi 0, %s76
    %s91 = sphi 0, %s77
    %s95 = sphi 0, %s95
    %s97 = sphi 0, %s95
    %s98 = sphi 0, %s97
    %s112 = sphi 0, %s98
    %s116 = sphi 0, %s116
    %s118 = sphi 0, %s116
    %s119 = sphi 0, %s118
    %s133 = sphi 0, %s119
    %s137 = sphi 0, %s137
    %s139 = sphi 0, %s137
    %s140 = sphi 0, %s139
    %s154 = sphi 0, %s140
    %s160 = sphi 0, %s162
    %s163 = sphi 0, %s160
    %s164 = sphi 0, %s163
    %s180 = sphi 0, %s164
    %s186 = sphi 0, %s188
    %s189 = sphi 0, %s186
    %s190 = sphi 0, %s189
    %s206 = sphi 0, %s190
  $region4: #{vistr_forward.4} parent=0 // loop_header_branch
    %17 = sbr.rel (%p15) target = $region8
  $region5: #{vistr_forward.4} parent=0 // loop_body
    %s19 = ssub.s32 %s14, 1
    %s20 = ssub.s32 %s14, 2
    %s21 = sadd.s32 %s14, 1
    %s22 = ssub.s32 %s14, %s21
    %p23 = scmp.eq.s32.totalorder %s22, 0
    %s25 = sadd.s32 %s24, 1
    %s26 = scalar_select %p23, %s24, %s25
    %p29 = pneg %p23
    %p30 = scmp.eq.s32.totalorder %s14, 1
    %p31 = por %p29, %p30
    %p32 = scmp.ne.s32.totalorder %s24, %s27
    %p33 = scmp.eq.s32.totalorder %s14, 0
    %p34 = por %p32, %p33
    %p35 = scmp.ne.s32.totalorder %s24, %s27
    %p36 = scmp.eq.s32.totalorder %s19, 1
    %p37 = por %p35, %p36
    %p38 = scmp.ne.s32.totalorder %s27, %s28
    %p39 = scmp.eq.s32.totalorder %s19, 0
    %p40 = por %p38, %p39
    %p41 = scmp.ne.s32.totalorder %s27, %s28
    %p42 = scmp.eq.s32.totalorder %s20, 1
    %p43 = por %p41, %p42
    %p45 = scmp.ne.s32.totalorder %s28, %s44
    %p46 = scmp.eq.s32.totalorder %s20, 0
    %p47 = por %p45, %p46
    %s48 = ssub.s32 %s14, %s21
    %p49 = scmp.eq.s32.totalorder %s48, 0
    %s51 = sadd.s32 %s50, 1
    %s52 = scalar_select %p49, %s50, %s51
    %p55 = pneg %p49
    %p56 = scmp.eq.s32.totalorder %s14, 1
    %p57 = por %p55, %p56
    %p58 = scmp.ne.s32.totalorder %s50, %s53
    %p59 = scmp.eq.s32.totalorder %s14, 0
    %p60 = por %p58, %p59
    %p61 = scmp.ne.s32.totalorder %s50, %s53
    %p62 = scmp.eq.s32.totalorder %s19, 1
    %p63 = por %p61, %p62
    %p64 = scmp.ne.s32.totalorder %s53, %s54
    %p65 = scmp.eq.s32.totalorder %s19, 0
    %p66 = por %p64, %p65
    %p67 = scmp.ne.s32.totalorder %s53, %s54
    %p68 = scmp.eq.s32.totalorder %s20, 1
    %p69 = por %p67, %p68
    %p71 = scmp.ne.s32.totalorder %s54, %s70
    %p72 = scmp.eq.s32.totalorder %s20, 0
    %p73 = por %p71, %p72
    %s75 = sadd.s32 %s74, 1
    %p78 = scmp.eq.s32.totalorder %s14, 1
    %p79 = scmp.ne.s32.totalorder %s74, %s76
    %p80 = scmp.eq.s32.totalorder %s14, 0
    %p81 = por %p79, %p80
    %p82 = scmp.ne.s32.totalorder %s74, %s76
    %p83 = scmp.eq.s32.totalorder %s19, 1
    %p84 = por %p82, %p83
    %p85 = scmp.ne.s32.totalorder %s76, %s77
    %p86 = scmp.eq.s32.totalorder %s19, 0
    %p87 = por %p85, %p86
    %p88 = scmp.ne.s32.totalorder %s76, %s77
    %p89 = scmp.eq.s32.totalorder %s20, 1
    %p90 = por %p88, %p89
    %p92 = scmp.ne.s32.totalorder %s77, %s91
    %p93 = scmp.eq.s32.totalorder %s20, 0
    %p94 = por %p92, %p93
    %s96 = sadd.s32 %s95, 1
    %p99 = scmp.eq.s32.totalorder %s14, 1
    %p100 = scmp.ne.s32.totalorder %s95, %s97
    %p101 = scmp.eq.s32.totalorder %s14, 0
    %p102 = por %p100, %p101
    %p103 = scmp.ne.s32.totalorder %s95, %s97
    %p104 = scmp.eq.s32.totalorder %s19, 1
    %p105 = por %p103, %p104
    %p106 = scmp.ne.s32.totalorder %s97, %s98
    %p107 = scmp.eq.s32.totalorder %s19, 0
    %p108 = por %p106, %p107
    %p109 = scmp.ne.s32.totalorder %s97, %s98
    %p110 = scmp.eq.s32.totalorder %s20, 1
    %p111 = por %p109, %p110
    %p113 = scmp.ne.s32.totalorder %s98, %s112
    %p114 = scmp.eq.s32.totalorder %s20, 0
    %p115 = por %p113, %p114
    %s117 = sadd.s32 %s116, 1
    %p120 = scmp.eq.s32.totalorder %s14, 1
    %p121 = scmp.ne.s32.totalorder %s116, %s118
    %p122 = scmp.eq.s32.totalorder %s14, 0
    %p123 = por %p121, %p122
    %p124 = scmp.ne.s32.totalorder %s116, %s118
    %p125 = scmp.eq.s32.totalorder %s19, 1
    %p126 = por %p124, %p125
    %p127 = scmp.ne.s32.totalorder %s118, %s119
    %p128 = scmp.eq.s32.totalorder %s19, 0
    %p129 = por %p127, %p128
    %p130 = scmp.ne.s32.totalorder %s118, %s119
    %p131 = scmp.eq.s32.totalorder %s20, 1
    %p132 = por %p130, %p131
    %p134 = scmp.ne.s32.totalorder %s119, %s133
    %p135 = scmp.eq.s32.totalorder %s20, 0
    %p136 = por %p134, %p135
    %s138 = sadd.s32 %s137, 1
    %p141 = scmp.eq.s32.totalorder %s14, 1
    %p142 = scmp.ne.s32.totalorder %s137, %s139
    %p143 = scmp.eq.s32.totalorder %s14, 0
    %p144 = por %p142, %p143
    %p145 = scmp.ne.s32.totalorder %s137, %s139
    %p146 = scmp.eq.s32.totalorder %s19, 1
    %p147 = por %p145, %p146
    %p148 = scmp.ne.s32.totalorder %s139, %s140
    %p149 = scmp.eq.s32.totalorder %s19, 0
    %p150 = por %p148, %p149
    %p151 = scmp.ne.s32.totalorder %s139, %s140
    %p152 = scmp.eq.s32.totalorder %s20, 1
    %p153 = por %p151, %p152
    %p155 = scmp.ne.s32.totalorder %s140, %s154
    %p156 = scmp.eq.s32.totalorder %s20, 0
    %p157 = por %p155, %p156
    %s158 = ssub.s32 %s14, %s21
    %p159 = scmp.eq.s32.totalorder %s158, 0
    %s161 = sadd.s32 %s160, 1
    %s162 = scalar_select %p159, %s160, %s161
    %p165 = pneg %p159
    %p166 = scmp.eq.s32.totalorder %s14, 1
    %p167 = por %p165, %p166
    %p168 = scmp.ne.s32.totalorder %s160, %s163
    %p169 = scmp.eq.s32.totalorder %s14, 0
    %p170 = por %p168, %p169
    %p171 = scmp.ne.s32.totalorder %s160, %s163
    %p172 = scmp.eq.s32.totalorder %s19, 1
    %p173 = por %p171, %p172
    %p174 = scmp.ne.s32.totalorder %s163, %s164
    %p175 = scmp.eq.s32.totalorder %s19, 0
    %p176 = por %p174, %p175
    %p177 = scmp.ne.s32.totalorder %s163, %s164
    %p178 = scmp.eq.s32.totalorder %s20, 1
    %p179 = por %p177, %p178
    %p181 = scmp.ne.s32.totalorder %s164, %s180
    %p182 = scmp.eq.s32.totalorder %s20, 0
    %p183 = por %p181, %p182
    %s184 = ssub.s32 %s14, %s21
    %p185 = scmp.eq.s32.totalorder %s184, 0
    %s187 = sadd.s32 %s186, 1
    %s188 = scalar_select %p185, %s186, %s187
    %p191 = pneg %p185
    %p192 = scmp.eq.s32.totalorder %s14, 1
    %p193 = por %p191, %p192
    %p194 = scmp.ne.s32.totalorder %s186, %s189
    %p195 = scmp.eq.s32.totalorder %s14, 0
    %p196 = por %p194, %p195
    %p197 = scmp.ne.s32.totalorder %s186, %s189
    %p198 = scmp.eq.s32.totalorder %s19, 1
    %p199 = por %p197, %p198
    %p200 = scmp.ne.s32.totalorder %s189, %s190
    %p201 = scmp.eq.s32.totalorder %s19, 0
    %p202 = por %p200, %p201
    %p203 = scmp.ne.s32.totalorder %s189, %s190
    %p204 = scmp.eq.s32.totalorder %s20, 1
    %p205 = por %p203, %p204
    %p207 = scmp.ne.s32.totalorder %s190, %s206
    %p208 = scmp.eq.s32.totalorder %s20, 0
    %p209 = por %p207, %p208
    %p210 = scmp.le.s32.totalorder 1, %s14
    %p211 = scmp.lt.s32.totalorder %s14, 3
    %p212 = pnand %p210, %p211
    %p213 = pneg %p212
    // Predicated region
    $region9: #{vistr_forward.4} parent=5 // pred_check
      _
    $region10: #{vistr_forward.4} parent=5 // pred_check_branch
      %215 = sbr.rel (%p212) target = $region12
    $region11: #{vistr_forward.4} parent=5 // pred_region
      %s216 = ssub.s32 %s14, 1
      // Predicated region
      $region13: #{vistr_forward.4} parent=11 // pred_check
        %p217 = pneg %p87
      $region14: #{vistr_forward.4} parent=11 // pred_check_branch
        %219 = sbr.rel (%p217) target = $region16
      $region15: #{vistr_forward.4} parent=11 // pred_region
        _
      $region16: #{vistr_forward.4} parent=11 // pred_fallthru
        _
      // Predicated region
      $region17: #{vistr_forward.4} parent=11 // pred_check
        %p220 = pneg %p108
      $region18: #{vistr_forward.4} parent=11 // pred_check_branch
        %222 = sbr.rel (%p220) target = $region20
      $region19: #{vistr_forward.4} parent=11 // pred_region
        _
      $region20: #{vistr_forward.4} parent=11 // pred_fallthru
        _
      // Predicated region
      $region21: #{vistr_forward.4} parent=11 // pred_check
        %p223 = pneg %p129
      $region22: #{vistr_forward.4} parent=11 // pred_check_branch
        %225 = sbr.rel (%p223) target = $region24
      $region23: #{vistr_forward.4} parent=11 // pred_region
        _
      $region24: #{vistr_forward.4} parent=11 // pred_fallthru
        _
      // Predicated region
      $region25: #{vistr_forward.4} parent=11 // pred_check
        %p226 = pneg %p150
      $region26: #{vistr_forward.4} parent=11 // pred_check_branch
        %228 = sbr.rel (%p226) target = $region28
      $region27: #{vistr_forward.4} parent=11 // pred_region
        _
      $region28: #{vistr_forward.4} parent=11 // pred_fallthru
        _
    $region12: #{vistr_forward.4} parent=5 // pred_fallthru
      _
    %p229 = scmp.lt.s32.totalorder %s14, 2
    // Predicated region
    $region29: #{vistr_forward.4} parent=5 // pred_check
      %p230 = pneg %p229
    $region30: #{vistr_forward.4} parent=5 // pred_check_branch
      %232 = sbr.rel (%p230) target = $region32
    $region31: #{vistr_forward.4} parent=5 // pred_region
      // Predicated region
      $region33: #{vistr_forward.4} parent=31 // pred_check
        %p233 = pneg %p34
      $region34: #{vistr_forward.4} parent=31 // pred_check_branch
        %235 = sbr.rel (%p233) target = $region36
      $region35: #{vistr_forward.4} parent=31 // pred_region
        %s236 = smul.u32 16, %s14
        %p237 = scmp.lt.s32.totalorder %s236, 31
        %s238 = scalar_select %p237, %s236, 31
        %s239 = smul.addr %s238, 8
        %s240 = scalar_lea.vmem %s0, %s239
        %s241 = smul.u32 16, %s14
      $region36: #{vistr_forward.4} parent=31 // pred_fallthru
        _
      // Predicated region
      $region37: #{vistr_forward.4} parent=31 // pred_check
        %p242 = pneg %p60
      $region38: #{vistr_forward.4} parent=31 // pred_check_branch
        %244 = sbr.rel (%p242) target = $region40
      $region39: #{vistr_forward.4} parent=31 // pred_region
        %s245 = smul.u32 16, %s14
        %p246 = scmp.lt.s32.totalorder %s245, 31
        %s247 = scalar_select %p246, %s245, 31
        %s248 = smul.addr %s247, 8
        %s249 = scalar_lea.vmem %s1, %s248
        %s250 = smul.u32 16, %s14
      $region40: #{vistr_forward.4} parent=31 // pred_fallthru
        _
    $region32: #{vistr_forward.4} parent=5 // pred_fallthru
      _
    %p251 = scmp.le.s32.totalorder 1, %s14
    %p252 = scmp.lt.s32.totalorder %s14, 3
    %p253 = pnand %p251, %p252
    %p254 = pneg %p253
    // Predicated region
    $region41: #{vistr_forward.4} parent=5 // pred_check
      _
    $region42: #{vistr_forward.4} parent=5 // pred_check_branch
      %256 = sbr.rel (%p253) target = $region44
    $region43: #{vistr_forward.4} parent=5 // pred_region
      %s257 = ssub.s32 %s14, 1
      %s258 = smul.u32 16, %s19
      %p259 = scmp.lt.s32.totalorder %s258, 31
      %s260 = scalar_select %p259, %s258, 31
      %s261 = smul.addr %s260, 8
      %s262 = scalar_lea.vmem %s0, %s261
      %p263 = pneg %p40
      %p264 = pneg %p37
      %s265 = smul.u32 16, %s19
      %p266 = scmp.lt.s32.totalorder %s265, 31
      %s267 = scalar_select %p266, %s265, 31
      %s268 = smul.addr %s267, 8
      %s269 = scalar_lea.vmem %s1, %s268
      %p270 = pneg %p66
      %p271 = pneg %p63
      %p272 = pneg %p87
      %p273 = pneg %p84
      %p274 = pneg %p108
      %p275 = pneg %p105
      %p276 = pneg %p129
      %p277 = pneg %p126
      %p278 = pneg %p150
      %p279 = pneg %p147
      %p280 = pneg %p176
      %p281 = pneg %p173
      %s282 = smul.u32 16, %s19
      %p283 = scmp.lt.s32.totalorder %s282, 31
      %s284 = scalar_select %p283, %s282, 31
      %s285 = smul.addr %s284, 4
      %s286 = scalar_lea.vmem %s6, %s285
      %p287 = pneg %p202
      %p288 = pneg %p199
      %s289 = smul.u32 16, %s19
      %p290 = scmp.lt.s32.totalorder %s289, 31
      %s291 = scalar_select %p290, %s289, 31
      %s292 = smul.addr %s291, 4
      %s293 = scalar_lea.vmem %s7, %s292
      %s294 = smul.u32 16, %s19
      %p295 = scmp.lt.s32.totalorder %s294, 31
      %s296 = scalar_select %p295, %s294, 31
      %s297 = smul.addr %s296, 8
      %s298 = scalar_lea.vmem %s0, %s297
      %s299 = smul.u32 16, %s19
      %s300 = smul.u32 16, %s19
      %p301 = scmp.lt.s32.totalorder %s300, 31
      %s302 = scalar_select %p301, %s300, 31
      %s303 = smul.addr %s302, 8
      %s304 = scalar_lea.vmem %s1, %s303
      %s305 = smul.u32 16, %s19
      %s306 = smul.u32 16, %s19
      %p307 = scmp.lt.s32.totalorder %s306, 31
      %s308 = scalar_select %p307, %s306, 31
      %s309 = smul.addr %s308, 4
      %s310 = scalar_lea.vmem %s6, %s309
      %s311 = smul.u32 16, %s19
      %s312 = smul.u32 16, %s19
      %p313 = scmp.lt.s32.totalorder %s312, 31
      %s314 = scalar_select %p313, %s312, 31
      %s315 = smul.addr %s314, 4
      %s316 = scalar_lea.vmem %s7, %s315
      %s317 = smul.u32 16, %s19
      %v319 = vld [vmem:[%s298] sm:$0xff]
      %v320 = vld [vmem:[%s298 + $0x8] sm:$0xff]
      %v321 = vld [vmem:[%s298 + $0x10] sm:$0xff]
      %v322 = vld [vmem:[%s298 + $0x18] sm:$0xff]
      %v323 = vld [vmem:[%s298 + $0x20] sm:$0xff]
      %v324 = vld [vmem:[%s298 + $0x28] sm:$0xff]
      %v325 = vld [vmem:[%s298 + $0x30] sm:$0xff]
      %v326 = vld [vmem:[%s298 + $0x38] sm:$0xff]
      %v327 = vld [vmem:[%s298 + $0x40] sm:$0xff]
      %v328 = vld [vmem:[%s298 + $0x48] sm:$0xff]
      %v329 = vld [vmem:[%s298 + $0x50] sm:$0xff]
      %v330 = vld [vmem:[%s298 + $0x58] sm:$0xff]
      %v331 = vld [vmem:[%s298 + $0x60] sm:$0xff]
      %v332 = vld [vmem:[%s298 + $0x68] sm:$0xff]
      %v333 = vld [vmem:[%s298 + $0x70] sm:$0xff]
      %v334 = vld [vmem:[%s298 + $0x78] sm:$0xff]
      %v335 = vpack.c.bf16 %v320, %v319
      %v336 = vpack.c.bf16 %v322, %v321
      %v337 = vpack.c.bf16 %v324, %v323
      %v338 = vpack.c.bf16 %v326, %v325
      %v339 = vpack.c.bf16 %v328, %v327
      %v340 = vpack.c.bf16 %v330, %v329
      %v341 = vpack.c.bf16 %v332, %v331
      %v342 = vpack.c.bf16 %v334, %v333
      %v343 = vld [vmem:[%s2] sm:$0xf]
      %v344 = vld [vmem:[%s2 + $0x4] sm:$0xf]
      %v345 = vld [vmem:[%s2 + $0x8] sm:$0xf]
      %v346 = vld [vmem:[%s2 + $0xc] sm:$0xf]
      %v347 = vld [vmem:[%s2 + $0x10] sm:$0xf]
      %v348 = vld [vmem:[%s2 + $0x14] sm:$0xf]
      %v349 = vld [vmem:[%s2 + $0x18] sm:$0xf]
      %v350 = vld [vmem:[%s2 + $0x1c] sm:$0xf]
      %v351 = vld [vmem:[%s2 + $0x20] sm:$0xf]
      %v352 = vld [vmem:[%s2 + $0x24] sm:$0xf]
      %v353 = vld [vmem:[%s2 + $0x28] sm:$0xf]
      %v354 = vld [vmem:[%s2 + $0x2c] sm:$0xf]
      %v355 = vld [vmem:[%s2 + $0x30] sm:$0xf]
      %v356 = vld [vmem:[%s2 + $0x34] sm:$0xf]
      %v357 = vld [vmem:[%s2 + $0x38] sm:$0xf]
      %v358 = vld [vmem:[%s2 + $0x3c] sm:$0xf]
      %v359 = vld [vmem:[%s3] sm:$0x1]
      %v361 = vlaneseq
      %v362 = vshrl.u32 %v361, 7
      %v363 = vsub.s32 0, %v362
      %v364 = vrot.slane %v359, %v363
      %v382 = vunpack.c.l.b16 %v343
      %v383 = vunpack.c.l.b16 %v344
      %v384 = vunpack.c.l.b16 %v345
      %v385 = vunpack.c.l.b16 %v346
      %v386 = vunpack.c.l.b16 %v347
      %v387 = vunpack.c.l.b16 %v348
      %v388 = vunpack.c.l.b16 %v349
      %v389 = vunpack.c.l.b16 %v350
      %v390 = vunpack.c.l.b16 %v351
      %v391 = vunpack.c.l.b16 %v352
      %v392 = vunpack.c.l.b16 %v353
      %v393 = vunpack.c.l.b16 %v354
      %v394 = vunpack.c.l.b16 %v355
      %v395 = vunpack.c.l.b16 %v356
      %v396 = vunpack.c.l.b16 %v357
      %v397 = vunpack.c.l.b16 %v358
      %v398 = vpack.c.b16 %v383, %v382
      %v399 = vpack.c.b16 %v385, %v384
      %v400 = vpack.c.b16 %v387, %v386
      %v401 = vpack.c.b16 %v389, %v388
      %v402 = vpack.c.b16 %v391, %v390
      %v403 = vpack.c.b16 %v393, %v392
      %v404 = vpack.c.b16 %v395, %v394
      %v405 = vpack.c.b16 %v397, %v396
      %414 = vmatprep.subr.bf16.mxu0 0
      %415 = vmatpush1.bf16.msra.mxu0 %v398
      %416 = vmatprep.subr.bf16.mxu0 0
      %417 = vmatpush1.bf16.msra.mxu0 %v399
      %418 = vmatprep.subr.bf16.mxu0 0
      %419 = vmatpush1.bf16.msra.mxu0 %v400
      %420 = vmatprep.subr.bf16.mxu0 0
      %421 = vmatpush1.bf16.msra.mxu0 %v401
      %422 = vmatprep.subr.bf16.mxu0 0
      %423 = vmatpush1.bf16.msra.mxu0 %v402
      %424 = vmatprep.subr.bf16.mxu0 0
      %425 = vmatpush1.bf16.msra.mxu0 %v403
      %426 = vmatprep.subr.bf16.mxu0 0
      %427 = vmatpush1.bf16.msra.mxu0 %v404
      %428 = vmatprep.subr.bf16.mxu0 0
      %429 = vmatpush1.bf16.msra.mxu0 %v405
      %430 = vmatprep.subr.bf16.mxu0 0
      %431 = vmatpush1.bf16.msra.mxu0 0
      %432 = vmatprep.subr.bf16.mxu0 0
      %433 = vmatpush1.bf16.msra.mxu0 0
      %434 = vmatprep.subr.bf16.mxu0 0
      %435 = vmatpush1.bf16.msra.mxu0 0
      %436 = vmatprep.subr.bf16.mxu0 0
      %437 = vmatpush1.bf16.msra.mxu0 0
      %438 = vmatprep.subr.bf16.mxu0 0
      %439 = vmatpush1.bf16.msra.mxu0 0
      %440 = vmatprep.subr.bf16.mxu0 0
      %441 = vmatpush1.bf16.msra.mxu0 0
      %442 = vmatprep.subr.bf16.mxu0 0
      %443 = vmatpush1.bf16.msra.mxu0 0
      %444 = vmatprep.subr.bf16.mxu0 0
      %445 = vmatpush1.bf16.msra.mxu0 0
      %446 = vmatprep.mubr.bf16.mxu0 0
      %447 = vmatmul.mubr.bf16.gmra.mrb[0].mxu0 %v335
      %v448 = vpop.f32.mrb[0].mxu0
      %v449 = vadd.f32 %v364, %v448
      %v450 = vpop.f32.mrb[0].mxu0
      %v451 = vpop.f32.mrb[0].mxu0
      %v452 = vadd.f32 %v364, %v451
      %v453 = vpop.f32.mrb[0].mxu0
      %454 = vmatprep.mubr.bf16.mxu0 0
      %455 = vmatmul.mubr.bf16.gmra.mrb[0].mxu0 %v336
      %v456 = vpop.f32.mrb[0].mxu0
      %v457 = vadd.f32 %v364, %v456
      %v458 = vpop.f32.mrb[0].mxu0
      %v459 = vpop.f32.mrb[0].mxu0
      %v460 = vadd.f32 %v364, %v459
      %v461 = vpop.f32.mrb[0].mxu0
      %462 = vmatprep.mubr.bf16.mxu0 0
      %463 = vmatmul.mubr.bf16.gmra.mrb[0].mxu0 %v337
      %v464 = vpop.f32.mrb[0].mxu0
      %v465 = vadd.f32 %v364, %v464
      %v466 = vpop.f32.mrb[0].mxu0
      %v467 = vpop.f32.mrb[0].mxu0
      %v468 = vadd.f32 %v364, %v467
      %v469 = vpop.f32.mrb[0].mxu0
      %470 = vmatprep.mubr.bf16.mxu0 0
      %471 = vmatmul.mubr.bf16.gmra.mrb[0].mxu0 %v338
      %v472 = vpop.f32.mrb[0].mxu0
      %v473 = vadd.f32 %v364, %v472
      %v474 = vpop.f32.mrb[0].mxu0
      %v475 = vpop.f32.mrb[0].mxu0
      %v476 = vadd.f32 %v364, %v475
      %v477 = vpop.f32.mrb[0].mxu0
      %478 = vmatprep.mubr.bf16.mxu0 0
      %479 = vmatmul.mubr.bf16.gmra.mrb[0].mxu0 %v339
      %v480 = vpop.f32.mrb[0].mxu0
      %v481 = vadd.f32 %v364, %v480
      %v482 = vpop.f32.mrb[0].mxu0
      %v483 = vpop.f32.mrb[0].mxu0
      %v484 = vadd.f32 %v364, %v483
      %v485 = vpop.f32.mrb[0].mxu0
      %486 = vmatprep.mubr.bf16.mxu0 0
      %487 = vmatmul.mubr.bf16.gmra.mrb[0].mxu0 %v340
      %v488 = vpop.f32.mrb[0].mxu0
      %v489 = vadd.f32 %v364, %v488
      %v490 = vpop.f32.mrb[0].mxu0
      %v491 = vpop.f32.mrb[0].mxu0
      %v492 = vadd.f32 %v364, %v491
      %v493 = vpop.f32.mrb[0].mxu0
      %494 = vmatprep.mubr.bf16.mxu0 0
      %495 = vmatmul.mubr.bf16.gmra.mrb[0].mxu0 %v341
      %v496 = vpop.f32.mrb[0].mxu0
      %v497 = vadd.f32 %v364, %v496
      %v498 = vpop.f32.mrb[0].mxu0
      %v499 = vpop.f32.mrb[0].mxu0
      %v500 = vadd.f32 %v364, %v499
      %v501 = vpop.f32.mrb[0].mxu0
      %502 = vmatprep.mubr.bf16.mxu0 0
      %503 = vmatmul.mubr.bf16.gmra.mrb[0].mxu0 %v342
      %v504 = vpop.f32.mrb[0].mxu0
      %v505 = vadd.f32 %v364, %v504
      %v506 = vpop.f32.mrb[0].mxu0
      %v507 = vpop.f32.mrb[0].mxu0
      %v508 = vadd.f32 %v364, %v507
      %v509 = vpop.f32.mrb[0].mxu0
      %510 = vdwg.mxu0
      %v511 = vld [vmem:[%s304] sm:$0xff]
      %v512 = vld [vmem:[%s304 + $0x8] sm:$0xff]
      %v513 = vld [vmem:[%s304 + $0x10] sm:$0xff]
      %v514 = vld [vmem:[%s304 + $0x18] sm:$0xff]
      %v515 = vld [vmem:[%s304 + $0x20] sm:$0xff]
      %v516 = vld [vmem:[%s304 + $0x28] sm:$0xff]
      %v517 = vld [vmem:[%s304 + $0x30] sm:$0xff]
      %v518 = vld [vmem:[%s304 + $0x38] sm:$0xff]
      %v519 = vld [vmem:[%s304 + $0x40] sm:$0xff]
      %v520 = vld [vmem:[%s304 + $0x48] sm:$0xff]
      %v521 = vld [vmem:[%s304 + $0x50] sm:$0xff]
      %v522 = vld [vmem:[%s304 + $0x58] sm:$0xff]
      %v523 = vld [vmem:[%s304 + $0x60] sm:$0xff]
      %v524 = vld [vmem:[%s304 + $0x68] sm:$0xff]
      %v525 = vld [vmem:[%s304 + $0x70] sm:$0xff]
      %v526 = vld [vmem:[%s304 + $0x78] sm:$0xff]
      %v527 = vadd.f32 %v449, %v511
      %v528 = vadd.f32 %v452, %v512
      %v529 = vadd.f32 %v457, %v513
      %v530 = vadd.f32 %v460, %v514
      %v531 = vadd.f32 %v465, %v515
      %v532 = vadd.f32 %v468, %v516
      %v533 = vadd.f32 %v473, %v517
      %v534 = vadd.f32 %v476, %v518
      %v535 = vadd.f32 %v481, %v519
      %v536 = vadd.f32 %v484, %v520
      %v537 = vadd.f32 %v489, %v521
      %v538 = vadd.f32 %v492, %v522
      %v539 = vadd.f32 %v497, %v523
      %v540 = vadd.f32 %v500, %v524
      %v541 = vadd.f32 %v505, %v525
      %v542 = vadd.f32 %v508, %v526
      %v543 = vpack.c.bf16 %v528, %v527
      %v544 = vpack.c.bf16 %v530, %v529
      %v545 = vpack.c.bf16 %v532, %v531
      %v546 = vpack.c.bf16 %v534, %v533
      %v547 = vpack.c.bf16 %v536, %v535
      %v548 = vpack.c.bf16 %v538, %v537
      %v549 = vpack.c.bf16 %v540, %v539
      %v550 = vpack.c.bf16 %v542, %v541
      %v551 = vld [vmem:[%s4] sm:$0xff]
      %v552 = vld [vmem:[%s4 + $0x8] sm:$0xff]
      %v553 = vld [vmem:[%s4 + $0x10] sm:$0xff]
      %v554 = vld [vmem:[%s4 + $0x18] sm:$0xff]
      %v555 = vld [vmem:[%s4 + $0x20] sm:$0xff]
      %v556 = vld [vmem:[%s4 + $0x28] sm:$0xff]
      %v557 = vld [vmem:[%s4 + $0x30] sm:$0xff]
      %v558 = vld [vmem:[%s4 + $0x38] sm:$0xff]
      %v559 = vld [vmem:[%s4 + $0x40] sm:$0xff]
      %v560 = vld [vmem:[%s4 + $0x48] sm:$0xff]
      %v561 = vld [vmem:[%s4 + $0x50] sm:$0xff]
      %v562 = vld [vmem:[%s4 + $0x58] sm:$0xff]
      %v563 = vld [vmem:[%s4 + $0x60] sm:$0xff]
      %v564 = vld [vmem:[%s4 + $0x68] sm:$0xff]
      %v565 = vld [vmem:[%s4 + $0x70] sm:$0xff]
      %v566 = vld [vmem:[%s4 + $0x78] sm:$0xff]
      %v567 = vld [vmem:[%s5] sm:$0x3]
      %v569 = vlaneseq
      %v570 = vshrl.u32 %v569, 7
      %v571 = vsub.s32 0, %v570
      %v572 = vrot.slane %v567, %v571
      %v573 = vlaneseq
      %v574 = vshrl.u32 %v573, 7
      %v575 = vsub.s32 1, %v574
      %v576 = vrot.slane %v567, %v575
      %v595 = vunpack.c.l.b16 %v551
      %v596 = vunpack.c.h.b16 %v551
      %v597 = vunpack.c.l.b16 %v552
      %v598 = vunpack.c.h.b16 %v552
      %v599 = vunpack.c.l.b16 %v553
      %v600 = vunpack.c.h.b16 %v553
      %v601 = vunpack.c.l.b16 %v554
      %v602 = vunpack.c.h.b16 %v554
      %v603 = vunpack.c.l.b16 %v555
      %v604 = vunpack.c.h.b16 %v555
      %v605 = vunpack.c.l.b16 %v556
      %v606 = vunpack.c.h.b16 %v556
      %v607 = vunpack.c.l.b16 %v557
      %v608 = vunpack.c.h.b16 %v557
      %v609 = vunpack.c.l.b16 %v558
      %v610 = vunpack.c.h.b16 %v558
      %v611 = vunpack.c.l.b16 %v559
      %v612 = vunpack.c.h.b16 %v559
      %v613 = vunpack.c.l.b16 %v560
      %v614 = vunpack.c.h.b16 %v560
      %v615 = vunpack.c.l.b16 %v561
      %v616 = vunpack.c.h.b16 %v561
      %v617 = vunpack.c.l.b16 %v562
      %v618 = vunpack.c.h.b16 %v562
      %v619 = vunpack.c.l.b16 %v563
      %v620 = vunpack.c.h.b16 %v563
      %v621 = vunpack.c.l.b16 %v564
      %v622 = vunpack.c.h.b16 %v564
      %v623 = vunpack.c.l.b16 %v565
      %v624 = vunpack.c.h.b16 %v565
      %v625 = vunpack.c.l.b16 %v566
      %v626 = vunpack.c.h.b16 %v566
      %v627 = vpack.c.b16 %v597, %v595
      %v628 = vpack.c.b16 %v598, %v596
      %v629 = vpack.c.b16 %v601, %v599
      %v630 = vpack.c.b16 %v602, %v600
      %v631 = vpack.c.b16 %v605, %v603
      %v632 = vpack.c.b16 %v606, %v604
      %v633 = vpack.c.b16 %v609, %v607
      %v634 = vpack.c.b16 %v610, %v608
      %v635 = vpack.c.b16 %v613, %v611
      %v636 = vpack.c.b16 %v614, %v612
      %v637 = vpack.c.b16 %v617, %v615
      %v638 = vpack.c.b16 %v618, %v616
      %v639 = vpack.c.b16 %v621, %v619
      %v640 = vpack.c.b16 %v622, %v620
      %v641 = vpack.c.b16 %v625, %v623
      %v642 = vpack.c.b16 %v626, %v624
      %659 = vmatprep.subr.bf16.mxu0 %v628
      %660 = vmatpush1.bf16.msra.mxu0 %v627
      %661 = vmatprep.subr.bf16.mxu0 %v630
      %662 = vmatpush1.bf16.msra.mxu0 %v629
      %663 = vmatprep.subr.bf16.mxu0 %v632
      %664 = vmatpush1.bf16.msra.mxu0 %v631
      %665 = vmatprep.subr.bf16.mxu0 %v634
      %666 = vmatpush1.bf16.msra.mxu0 %v633
      %667 = vmatprep.subr.bf16.mxu0 %v636
      %668 = vmatpush1.bf16.msra.mxu0 %v635
      %669 = vmatprep.subr.bf16.mxu0 %v638
      %670 = vmatpush1.bf16.msra.mxu0 %v637
      %671 = vmatprep.subr.bf16.mxu0 %v640
      %672 = vmatpush1.bf16.msra.mxu0 %v639
      %673 = vmatprep.subr.bf16.mxu0 %v642
      %674 = vmatpush1.bf16.msra.mxu0 %v641
      %675 = vmatprep.subr.bf16.mxu0 0
      %676 = vmatpush1.bf16.msra.mxu0 0
      %677 = vmatprep.subr.bf16.mxu0 0
      %678 = vmatpush1.bf16.msra.mxu0 0
      %679 = vmatprep.subr.bf16.mxu0 0
      %680 = vmatpush1.bf16.msra.mxu0 0
      %681 = vmatprep.subr.bf16.mxu0 0
      %682 = vmatpush1.bf16.msra.mxu0 0
      %683 = vmatprep.subr.bf16.mxu0 0
      %684 = vmatpush1.bf16.msra.mxu0 0
      %685 = vmatprep.subr.bf16.mxu0 0
      %686 = vmatpush1.bf16.msra.mxu0 0
      %687 = vmatprep.subr.bf16.mxu0 0
      %688 = vmatpush1.bf16.msra.mxu0 0
      %689 = vmatprep.subr.bf16.mxu0 0
      %690 = vmatpush1.bf16.msra.mxu0 0
      %691 = vmatprep.mubr.bf16.mxu0 0
      %692 = vmatmul.mubr.bf16.gmra.mrb[0].mxu0 %v543
      %v693 = vpop.f32.mrb[0].mxu0
      %v694 = vadd.f32 %v572, %v693
      %v695 = vpop.f32.mrb[0].mxu0
      %v696 = vadd.f32 %v576, %v695
      %v697 = vpop.f32.mrb[0].mxu0
      %v698 = vadd.f32 %v572, %v697
      %v699 = vpop.f32.mrb[0].mxu0
      %v700 = vadd.f32 %v576, %v699
      %701 = vmatprep.mubr.bf16.mxu0 0
      %702 = vmatmul.mubr.bf16.gmra.mrb[0].mxu0 %v544
      %v703 = vpop.f32.mrb[0].mxu0
      %v704 = vadd.f32 %v572, %v703
      %v705 = vpop.f32.mrb[0].mxu0
      %v706 = vadd.f32 %v576, %v705
      %v707 = vpop.f32.mrb[0].mxu0
      %v708 = vadd.f32 %v572, %v707
      %v709 = vpop.f32.mrb[0].mxu0
      %v710 = vadd.f32 %v576, %v709
      %711 = vmatprep.mubr.bf16.mxu0 0
      %712 = vmatmul.mubr.bf16.gmra.mrb[0].mxu0 %v545
      %v713 = vpop.f32.mrb[0].mxu0
      %v714 = vadd.f32 %v572, %v713
      %v715 = vpop.f32.mrb[0].mxu0
      %v716 = vadd.f32 %v576, %v715
      %v717 = vpop.f32.mrb[0].mxu0
      %v718 = vadd.f32 %v572, %v717
      %v719 = vpop.f32.mrb[0].mxu0
      %v720 = vadd.f32 %v576, %v719
      %721 = vmatprep.mubr.bf16.mxu0 0
      %722 = vmatmul.mubr.bf16.gmra.mrb[0].mxu0 %v546
      %v723 = vpop.f32.mrb[0].mxu0
      %v724 = vadd.f32 %v572, %v723
      %v725 = vpop.f32.mrb[0].mxu0
      %v726 = vadd.f32 %v576, %v725
      %v727 = vpop.f32.mrb[0].mxu0
      %v728 = vadd.f32 %v572, %v727
      %v729 = vpop.f32.mrb[0].mxu0
      %v730 = vadd.f32 %v576, %v729
      %731 = vmatprep.mubr.bf16.mxu0 0
      %732 = vmatmul.mubr.bf16.gmra.mrb[0].mxu0 %v547
      %v733 = vpop.f32.mrb[0].mxu0
      %v734 = vadd.f32 %v572, %v733
      %v735 = vpop.f32.mrb[0].mxu0
      %v736 = vadd.f32 %v576, %v735
      %v737 = vpop.f32.mrb[0].mxu0
      %v738 = vadd.f32 %v572, %v737
      %v739 = vpop.f32.mrb[0].mxu0
      %v740 = vadd.f32 %v576, %v739
      %741 = vmatprep.mubr.bf16.mxu0 0
      %742 = vmatmul.mubr.bf16.gmra.mrb[0].mxu0 %v548
      %v743 = vpop.f32.mrb[0].mxu0
      %v744 = vadd.f32 %v572, %v743
      %v745 = vpop.f32.mrb[0].mxu0
      %v746 = vadd.f32 %v576, %v745
      %v747 = vpop.f32.mrb[0].mxu0
      %v748 = vadd.f32 %v572, %v747
      %v749 = vpop.f32.mrb[0].mxu0
      %v750 = vadd.f32 %v576, %v749
      %751 = vmatprep.mubr.bf16.mxu0 0
      %752 = vmatmul.mubr.bf16.gmra.mrb[0].mxu0 %v549
      %v753 = vpop.f32.mrb[0].mxu0
      %v754 = vadd.f32 %v572, %v753
      %v755 = vpop.f32.mrb[0].mxu0
      %v756 = vadd.f32 %v576, %v755
      %v757 = vpop.f32.mrb[0].mxu0
      %v758 = vadd.f32 %v572, %v757
      %v759 = vpop.f32.mrb[0].mxu0
      %v760 = vadd.f32 %v576, %v759
      %761 = vmatprep.mubr.bf16.mxu0 0
      %762 = vmatmul.mubr.bf16.gmra.mrb[0].mxu0 %v550
      %v763 = vpop.f32.mrb[0].mxu0
      %v764 = vadd.f32 %v572, %v763
      %v765 = vpop.f32.mrb[0].mxu0
      %v766 = vadd.f32 %v576, %v765
      %v767 = vpop.f32.mrb[0].mxu0
      %v768 = vadd.f32 %v572, %v767
      %v769 = vpop.f32.mrb[0].mxu0
      %v770 = vadd.f32 %v576, %v769
      %771 = vdwg.mxu0
      %v772 = vpack.c.bf16 %v698, %v694
      %v773 = vpack.c.bf16 %v708, %v704
      %v774 = vpack.c.bf16 %v718, %v714
      %v775 = vpack.c.bf16 %v728, %v724
      %v776 = vpack.c.bf16 %v738, %v734
      %v777 = vpack.c.bf16 %v748, %v744
      %v778 = vpack.c.bf16 %v758, %v754
      %v779 = vpack.c.bf16 %v768, %v764
      %v788 = vunpack.c.l.b16 %v772
      %v789 = vunpack.c.h.b16 %v772
      %v790 = vunpack.c.l.b16 %v773
      %v791 = vunpack.c.h.b16 %v773
      %v792 = vunpack.c.l.b16 %v774
      %v793 = vunpack.c.h.b16 %v774
      %v794 = vunpack.c.l.b16 %v775
      %v795 = vunpack.c.h.b16 %v775
      %v796 = vunpack.c.l.b16 %v776
      %v797 = vunpack.c.h.b16 %v776
      %v798 = vunpack.c.l.b16 %v777
      %v799 = vunpack.c.h.b16 %v777
      %v800 = vunpack.c.l.b16 %v778
      %v801 = vunpack.c.h.b16 %v778
      %v802 = vunpack.c.l.b16 %v779
      %v803 = vunpack.c.h.b16 %v779
      %v804 = vpack.c.b16 %v788, %v788
      %v805 = vpack.c.b16 %v789, %v789
      %v806 = vpack.c.b16 %v790, %v790
      %v807 = vpack.c.b16 %v791, %v791
      %v808 = vpack.c.b16 %v792, %v792
      %v809 = vpack.c.b16 %v793, %v793
      %v810 = vpack.c.b16 %v794, %v794
      %v811 = vpack.c.b16 %v795, %v795
      %v812 = vpack.c.b16 %v796, %v796
      %v813 = vpack.c.b16 %v797, %v797
      %v814 = vpack.c.b16 %v798, %v798
      %v815 = vpack.c.b16 %v799, %v799
      %v816 = vpack.c.b16 %v800, %v800
      %v817 = vpack.c.b16 %v801, %v801
      %v818 = vpack.c.b16 %v802, %v802
      %v819 = vpack.c.b16 %v803, %v803
      %836 = vst [vmem:[%s310] sm:$0xf] %v804
      %837 = vst [vmem:[%s310 + $0x4] sm:$0xf] %v805
      %838 = vst [vmem:[%s310 + $0x8] sm:$0xf] %v806
      %839 = vst [vmem:[%s310 + $0xc] sm:$0xf] %v807
      %840 = vst [vmem:[%s310 + $0x10] sm:$0xf] %v808
      %841 = vst [vmem:[%s310 + $0x14] sm:$0xf] %v809
      %842 = vst [vmem:[%s310 + $0x18] sm:$0xf] %v810
      %843 = vst [vmem:[%s310 + $0x1c] sm:$0xf] %v811
      %844 = vst [vmem:[%s310 + $0x20] sm:$0xf] %v812
      %845 = vst [vmem:[%s310 + $0x24] sm:$0xf] %v813
      %846 = vst [vmem:[%s310 + $0x28] sm:$0xf] %v814
      %847 = vst [vmem:[%s310 + $0x2c] sm:$0xf] %v815
      %848 = vst [vmem:[%s310 + $0x30] sm:$0xf] %v816
      %849 = vst [vmem:[%s310 + $0x34] sm:$0xf] %v817
      %850 = vst [vmem:[%s310 + $0x38] sm:$0xf] %v818
      %851 = vst [vmem:[%s310 + $0x3c] sm:$0xf] %v819
      %v852 = vpack.c.bf16 %v700, %v696
      %v853 = vpack.c.bf16 %v710, %v706
      %v854 = vpack.c.bf16 %v720, %v716
      %v855 = vpack.c.bf16 %v730, %v726
      %v856 = vpack.c.bf16 %v740, %v736
      %v857 = vpack.c.bf16 %v750, %v746
      %v858 = vpack.c.bf16 %v760, %v756
      %v859 = vpack.c.bf16 %v770, %v766
      %v868 = vunpack.c.l.b16 %v852
      %v869 = vunpack.c.h.b16 %v852
      %v870 = vunpack.c.l.b16 %v853
      %v871 = vunpack.c.h.b16 %v853
      %v872 = vunpack.c.l.b16 %v854
      %v873 = vunpack.c.h.b16 %v854
      %v874 = vunpack.c.l.b16 %v855
      %v875 = vunpack.c.h.b16 %v855
      %v876 = vunpack.c.l.b16 %v856
      %v877 = vunpack.c.h.b16 %v856
      %v878 = vunpack.c.l.b16 %v857
      %v879 = vunpack.c.h.b16 %v857
      %v880 = vunpack.c.l.b16 %v858
      %v881 = vunpack.c.h.b16 %v858
      %v882 = vunpack.c.l.b16 %v859
      %v883 = vunpack.c.h.b16 %v859
      %v884 = vpack.c.b16 %v868, %v868
      %v885 = vpack.c.b16 %v869, %v869
      %v886 = vpack.c.b16 %v870, %v870
      %v887 = vpack.c.b16 %v871, %v871
      %v888 = vpack.c.b16 %v872, %v872
      %v889 = vpack.c.b16 %v873, %v873
      %v890 = vpack.c.b16 %v874, %v874
      %v891 = vpack.c.b16 %v875, %v875
      %v892 = vpack.c.b16 %v876, %v876
      %v893 = vpack.c.b16 %v877, %v877
      %v894 = vpack.c.b16 %v878, %v878
      %v895 = vpack.c.b16 %v879, %v879
      %v896 = vpack.c.b16 %v880, %v880
      %v897 = vpack.c.b16 %v881, %v881
      %v898 = vpack.c.b16 %v882, %v882
      %v899 = vpack.c.b16 %v883, %v883
      %916 = vst [vmem:[%s316] sm:$0xf] %v884
      %917 = vst [vmem:[%s316 + $0x4] sm:$0xf] %v885
      %918 = vst [vmem:[%s316 + $0x8] sm:$0xf] %v886
      %919 = vst [vmem:[%s316 + $0xc] sm:$0xf] %v887
      %920 = vst [vmem:[%s316 + $0x10] sm:$0xf] %v888
      %921 = vst [vmem:[%s316 + $0x14] sm:$0xf] %v889
      %922 = vst [vmem:[%s316 + $0x18] sm:$0xf] %v890
      %923 = vst [vmem:[%s316 + $0x1c] sm:$0xf] %v891
      %924 = vst [vmem:[%s316 + $0x20] sm:$0xf] %v892
      %925 = vst [vmem:[%s316 + $0x24] sm:$0xf] %v893
      %926 = vst [vmem:[%s316 + $0x28] sm:$0xf] %v894
      %927 = vst [vmem:[%s316 + $0x2c] sm:$0xf] %v895
      %928 = vst [vmem:[%s316 + $0x30] sm:$0xf] %v896
      %929 = vst [vmem:[%s316 + $0x34] sm:$0xf] %v897
      %930 = vst [vmem:[%s316 + $0x38] sm:$0xf] %v898
      %931 = vst [vmem:[%s316 + $0x3c] sm:$0xf] %v899
      %s932 = smul.u32 16, %s19
      %p933 = scmp.lt.s32.totalorder %s932, 31
      %s934 = scalar_select %p933, %s932, 31
      %s935 = smul.addr %s934, 4
      %s936 = scalar_lea.vmem %s6, %s935
      %s937 = smul.u32 16, %s19
      %p938 = scmp.lt.s32.totalorder %s937, 31
      %s939 = scalar_select %p938, %s937, 31
      %s940 = smul.addr %s939, 4
      %s941 = scalar_lea.vmem %s7, %s940
      // Predicated region
      $region45: #{vistr_forward.4} parent=43 // pred_check
        %p942 = pneg %p173
      $region46: #{vistr_forward.4} parent=43 // pred_check_branch
        %944 = sbr.rel (%p942) target = $region48
      $region47: #{vistr_forward.4} parent=43 // pred_region
        %s945 = smul.u32 16, %s19
      $region48: #{vistr_forward.4} parent=43 // pred_fallthru
        _
      // Predicated region
      $region49: #{vistr_forward.4} parent=43 // pred_check
        %p946 = pneg %p199
      $region50: #{vistr_forward.4} parent=43 // pred_check_branch
        %948 = sbr.rel (%p946) target = $region52
      $region51: #{vistr_forward.4} parent=43 // pred_region
        %s949 = smul.u32 16, %s19
      $region52: #{vistr_forward.4} parent=43 // pred_fallthru
        _
    $region44: #{vistr_forward.4} parent=5 // pred_fallthru
      _
    %p950 = scmp.le.s32.totalorder 2, %s14
    // Predicated region
    $region53: #{vistr_forward.4} parent=5 // pred_check
      %p951 = pneg %p950
    $region54: #{vistr_forward.4} parent=5 // pred_check_branch
      %953 = sbr.rel (%p951) target = $region56
    $region55: #{vistr_forward.4} parent=5 // pred_region
      %s954 = ssub.s32 %s14, 2
      // Predicated region
      $region57: #{vistr_forward.4} parent=55 // pred_check
        %p955 = pneg %p179
      $region58: #{vistr_forward.4} parent=55 // pred_check_branch
        %957 = sbr.rel (%p955) target = $region60
      $region59: #{vistr_forward.4} parent=55 // pred_region
        %s958 = smul.u32 16, %s20
        %p959 = scmp.lt.s32.totalorder %s958, 31
        %s960 = scalar_select %p959, %s958, 31
        %s961 = smul.addr %s960, 4
        %s962 = scalar_lea.vmem %s6, %s961
      $region60: #{vistr_forward.4} parent=55 // pred_fallthru
        _
      // Predicated region
      $region61: #{vistr_forward.4} parent=55 // pred_check
        %p963 = pneg %p205
      $region62: #{vistr_forward.4} parent=55 // pred_check_branch
        %965 = sbr.rel (%p963) target = $region64
      $region63: #{vistr_forward.4} parent=55 // pred_region
        %s966 = smul.u32 16, %s20
        %p967 = scmp.lt.s32.totalorder %s966, 31
        %s968 = scalar_select %p967, %s966, 31
        %s969 = smul.addr %s968, 4
        %s970 = scalar_lea.vmem %s7, %s969
      $region64: #{vistr_forward.4} parent=55 // pred_fallthru
        _
    $region56: #{vistr_forward.4} parent=5 // pred_fallthru
      _
  $region6: #{vistr_forward.4} parent=0 // loop_footer
    %s18 = sadd.s32 1, %s14
  $region7: #{vistr_forward.4} parent=0 // loop_footer_branch
    %13 = sbr.rel target = $region3
  $region8: #{vistr_forward.4} parent=0 // loop_exit
    _

// kernel: vistr_forward.5
$region0: #{vistr_forward.5}
  #allocation0 [shape = 'u32[]', space=smem, size = 0x4, offset = 0x4, fixed_abs, tag = 'smem constant byte address 0x4 - core index']
  #allocation1 [shape = 'u32[144,128]{1,0:T(1,128)}', space=vmem, size = 0x12000, scoped, tag = 'internal scratch']
  %s0 = inlined_call_operand.vmem [shape: f32[8,128], index: 0, kind: input, shape index: {}]
  %s1 = inlined_call_operand.vmem [shape: bf16[128,128], index: 1, kind: input, shape index: {}]
  %s2 = inlined_call_operand.vmem [shape: f32[1,128], index: 2, kind: input, shape index: {}]
  %s3 = inlined_call_operand.vmem [shape: bf16[8,128], index: 3, kind: output, shape index: {}]
  %s4 = sld [smem:[#allocation0]]
  $region22: #{vistr_forward.5} parent=0
    _
  %s6 = ssub.s32 1, %s4
  %s7 = scalar_select 0, %s6, %s4
  // Predicated region
  $region2: #{vistr_forward.5} parent=0 // pred_check
    _
  $region3: #{vistr_forward.5} parent=0 // pred_check_branch
    %9 = sbr.rel (0) target = $region5
  $region4: #{vistr_forward.5} parent=0 // pred_region
    _
  $region5: #{vistr_forward.5} parent=0 // pred_fallthru
    _
  // Predicated region
  $region6: #{vistr_forward.5} parent=0 // pred_check
    _
  $region7: #{vistr_forward.5} parent=0 // pred_check_branch
    %11 = sbr.rel (0) target = $region9
  $region8: #{vistr_forward.5} parent=0 // pred_region
    _
  $region9: #{vistr_forward.5} parent=0 // pred_fallthru
    _
  // Predicated region
  $region10: #{vistr_forward.5} parent=0 // pred_check
    _
  $region11: #{vistr_forward.5} parent=0 // pred_check_branch
    %13 = sbr.rel (0) target = $region13
  $region12: #{vistr_forward.5} parent=0 // pred_region
    _
  $region13: #{vistr_forward.5} parent=0 // pred_fallthru
    _
  %v15 = vld [vmem:[%s0] sm:$0xff]
  %v16 = vpack.c.bf16 %v15, %v15
  %v17 = vld [vmem:[%s1] sm:$0xf]
  %v18 = vld [vmem:[%s1 + $0x4] sm:$0xf]
  %v19 = vld [vmem:[%s1 + $0x8] sm:$0xf]
  %v20 = vld [vmem:[%s1 + $0xc] sm:$0xf]
  %v21 = vld [vmem:[%s1 + $0x10] sm:$0xf]
  %v22 = vld [vmem:[%s1 + $0x14] sm:$0xf]
  %v23 = vld [vmem:[%s1 + $0x18] sm:$0xf]
  %v24 = vld [vmem:[%s1 + $0x1c] sm:$0xf]
  %v25 = vld [vmem:[%s1 + $0x20] sm:$0xf]
  %v26 = vld [vmem:[%s1 + $0x24] sm:$0xf]
  %v27 = vld [vmem:[%s1 + $0x28] sm:$0xf]
  %v28 = vld [vmem:[%s1 + $0x2c] sm:$0xf]
  %v29 = vld [vmem:[%s1 + $0x30] sm:$0xf]
  %v30 = vld [vmem:[%s1 + $0x34] sm:$0xf]
  %v31 = vld [vmem:[%s1 + $0x38] sm:$0xf]
  %v32 = vld [vmem:[%s1 + $0x3c] sm:$0xf]
  %v33 = vld [vmem:[%s2] sm:$0x1]
  %v35 = vlaneseq
  %v36 = vshrl.u32 %v35, 7
  %v37 = vsub.s32 0, %v36
  %v38 = vrot.slane %v33, %v37
  %v56 = vunpack.c.l.b16 %v17
  %v57 = vunpack.c.l.b16 %v18
  %v58 = vunpack.c.l.b16 %v19
  %v59 = vunpack.c.l.b16 %v20
  %v60 = vunpack.c.l.b16 %v21
  %v61 = vunpack.c.l.b16 %v22
  %v62 = vunpack.c.l.b16 %v23
  %v63 = vunpack.c.l.b16 %v24
  %v64 = vunpack.c.l.b16 %v25
  %v65 = vunpack.c.l.b16 %v26
  %v66 = vunpack.c.l.b16 %v27
  %v67 = vunpack.c.l.b16 %v28
  %v68 = vunpack.c.l.b16 %v29
  %v69 = vunpack.c.l.b16 %v30
  %v70 = vunpack.c.l.b16 %v31
  %v71 = vunpack.c.l.b16 %v32
  %v72 = vpack.c.b16 %v57, %v56
  %v73 = vpack.c.b16 %v59, %v58
  %v74 = vpack.c.b16 %v61, %v60
  %v75 = vpack.c.b16 %v63, %v62
  %v76 = vpack.c.b16 %v65, %v64
  %v77 = vpack.c.b16 %v67, %v66
  %v78 = vpack.c.b16 %v69, %v68
  %v79 = vpack.c.b16 %v71, %v70
  %88 = vmatprep.subr.bf16.mxu0 0
  %89 = vmatpush1.bf16.msra.mxu0 %v72
  %90 = vmatprep.subr.bf16.mxu0 0
  %91 = vmatpush1.bf16.msra.mxu0 %v73
  %92 = vmatprep.subr.bf16.mxu0 0
  %93 = vmatpush1.bf16.msra.mxu0 %v74
  %94 = vmatprep.subr.bf16.mxu0 0
  %95 = vmatpush1.bf16.msra.mxu0 %v75
  %96 = vmatprep.subr.bf16.mxu0 0
  %97 = vmatpush1.bf16.msra.mxu0 %v76
  %98 = vmatprep.subr.bf16.mxu0 0
  %99 = vmatpush1.bf16.msra.mxu0 %v77
  %100 = vmatprep.subr.bf16.mxu0 0
  %101 = vmatpush1.bf16.msra.mxu0 %v78
  %102 = vmatprep.subr.bf16.mxu0 0
  %103 = vmatpush1.bf16.msra.mxu0 %v79
  %104 = vmatprep.subr.bf16.mxu0 0
  %105 = vmatpush1.bf16.msra.mxu0 0
  %106 = vmatprep.subr.bf16.mxu0 0
  %107 = vmatpush1.bf16.msra.mxu0 0
  %108 = vmatprep.subr.bf16.mxu0 0
  %109 = vmatpush1.bf16.msra.mxu0 0
  %110 = vmatprep.subr.bf16.mxu0 0
  %111 = vmatpush1.bf16.msra.mxu0 0
  %112 = vmatprep.subr.bf16.mxu0 0
  %113 = vmatpush1.bf16.msra.mxu0 0
  %114 = vmatprep.subr.bf16.mxu0 0
  %115 = vmatpush1.bf16.msra.mxu0 0
  %116 = vmatprep.subr.bf16.mxu0 0
  %117 = vmatpush1.bf16.msra.mxu0 0
  %118 = vmatprep.subr.bf16.mxu0 0
  %119 = vmatpush1.bf16.msra.mxu0 0
  %120 = vmatprep.mubr.bf16.mxu0 0
  %121 = vmatmul.mubr.bf16.gmra.mrb[0].mxu0 %v16
  %v122 = vpop.f32.mrb[0].mxu0
  %v123 = vadd.f32 %v38, %v122
  %v124 = vpop.f32.mrb[0].mxu0
  %v125 = vpop.f32.mrb[0].mxu0
  %v126 = vpop.f32.mrb[0].mxu0
  %127 = vdwg.mxu0
  %v128 = vpack.c.bf16 %v123, %v123
  %129 = vst [vmem:[%s3] sm:$0xf] %v128
  // Predicated region
  $region14: #{vistr_forward.5} parent=0 // pred_check
    _
  $region15: #{vistr_forward.5} parent=0 // pred_check_branch
    %131 = sbr.rel (0) target = $region17
  $region16: #{vistr_forward.5} parent=0 // pred_region
    _
  $region17: #{vistr_forward.5} parent=0 // pred_fallthru
    _
  // Predicated region
  $region18: #{vistr_forward.5} parent=0 // pred_check
    _
  $region19: #{vistr_forward.5} parent=0 // pred_check_branch
    %133 = sbr.rel (0) target = $region21
  $region20: #{vistr_forward.5} parent=0 // pred_region
    _
  $region21: #{vistr_forward.5} parent=0 // pred_fallthru
    _

// kernel: vistr_forward.7
$region0: #{vistr_forward.7}
  #allocation0 [shape = 'u32[]', space=smem, size = 0x4, offset = 0x4, fixed_abs, tag = 'smem constant byte address 0x4 - core index']
  #allocation1 [shape = 'u32[144,128]{1,0:T(1,128)}', space=vmem, size = 0x12000, scoped, tag = 'internal scratch']
  %s0 = inlined_call_operand.vmem [shape: f32[16,128], index: 0, kind: input, shape index: {}]
  %s1 = inlined_call_operand.vmem [shape: bf16[128,128], index: 1, kind: input, shape index: {}]
  %s2 = inlined_call_operand.vmem [shape: f32[1,128], index: 2, kind: input, shape index: {}]
  %s3 = inlined_call_operand.vmem [shape: bf16[128,256], index: 3, kind: input, shape index: {}]
  %s4 = inlined_call_operand.vmem [shape: f32[1,256], index: 4, kind: input, shape index: {}]
  %s5 = inlined_call_operand.vmem [shape: bf16[128,128], index: 5, kind: input, shape index: {}]
  %s6 = inlined_call_operand.vmem [shape: f32[1,128], index: 6, kind: input, shape index: {}]
  %s7 = inlined_call_operand.vmem [shape: bf16[128,128], index: 7, kind: input, shape index: {}]
  %s8 = inlined_call_operand.vmem [shape: f32[1,128], index: 8, kind: input, shape index: {}]
  %s9 = inlined_call_operand.vmem [shape: f32[16,128], index: 9, kind: output, shape index: {0}]
  %s10 = inlined_call_operand.vmem [shape: f32[16,128], index: 10, kind: output, shape index: {1}]
  %11 = xla_tuple %s9, %s10
  %s12 = sld [smem:[#allocation0]]
  $region77: #{vistr_forward.7} parent=0
    _
  %s14 = ssub.s32 1, %s12
  %s15 = scalar_select 0, %s14, %s12
  loop: start=0, step=1, limit=4
  $region2: #{vistr_forward.7} parent=0 // loop_pre_header
    _
  $region3: #{vistr_forward.7} parent=0 // loop_header
    %s17 = sphi 0, %s21
    %p18 = scmp.ge.s32.totalorder %s17, 4
    %s27 = sphi 0, %s29
    %s30 = sphi 0, %s27
    %s31 = sphi 0, %s30
    %s47 = sphi 0, %s31
    %s51 = sphi 0, %s51
    %s53 = sphi 0, %s51
    %s54 = sphi 0, %s53
    %s68 = sphi 0, %s54
    %s72 = sphi 0, %s72
    %s74 = sphi 0, %s72
    %s75 = sphi 0, %s74
    %s89 = sphi 0, %s75
    %s93 = sphi 0, %s93
    %s95 = sphi 0, %s93
    %s96 = sphi 0, %s95
    %s110 = sphi 0, %s96
    %s114 = sphi 0, %s114
    %s116 = sphi 0, %s114
    %s117 = sphi 0, %s116
    %s131 = sphi 0, %s117
    %s135 = sphi 0, %s135
    %s137 = sphi 0, %s135
    %s138 = sphi 0, %s137
    %s152 = sphi 0, %s138
    %s156 = sphi 0, %s156
    %s158 = sphi 0, %s156
    %s159 = sphi 0, %s158
    %s173 = sphi 0, %s159
    %s177 = sphi 0, %s177
    %s179 = sphi 0, %s177
    %s180 = sphi 0, %s179
    %s194 = sphi 0, %s180
    %s198 = sphi 0, %s198
    %s200 = sphi 0, %s198
    %s201 = sphi 0, %s200
    %s215 = sphi 0, %s201
    %s221 = sphi 0, %s223
    %s224 = sphi 0, %s221
    %s225 = sphi 0, %s224
    %s241 = sphi 0, %s225
    %s247 = sphi 0, %s249
    %s250 = sphi 0, %s247
    %s251 = sphi 0, %s250
    %s267 = sphi 0, %s251
  $region4: #{vistr_forward.7} parent=0 // loop_header_branch
    %20 = sbr.rel (%p18) target = $region8
  $region5: #{vistr_forward.7} parent=0 // loop_body
    %s22 = ssub.s32 %s17, 1
    %s23 = ssub.s32 %s17, 2
    %s24 = sadd.s32 %s17, 1
    %s25 = ssub.s32 %s17, %s24
    %p26 = scmp.eq.s32.totalorder %s25, 0
    %s28 = sadd.s32 %s27, 1
    %s29 = scalar_select %p26, %s27, %s28
    %p32 = pneg %p26
    %p33 = scmp.eq.s32.totalorder %s17, 1
    %p34 = por %p32, %p33
    %p35 = scmp.ne.s32.totalorder %s27, %s30
    %p36 = scmp.eq.s32.totalorder %s17, 0
    %p37 = por %p35, %p36
    %p38 = scmp.ne.s32.totalorder %s27, %s30
    %p39 = scmp.eq.s32.totalorder %s22, 1
    %p40 = por %p38, %p39
    %p41 = scmp.ne.s32.totalorder %s30, %s31
    %p42 = scmp.eq.s32.totalorder %s22, 0
    %p43 = por %p41, %p42
    %p44 = scmp.ne.s32.totalorder %s30, %s31
    %p45 = scmp.eq.s32.totalorder %s23, 1
    %p46 = por %p44, %p45
    %p48 = scmp.ne.s32.totalorder %s31, %s47
    %p49 = scmp.eq.s32.totalorder %s23, 0
    %p50 = por %p48, %p49
    %s52 = sadd.s32 %s51, 1
    %p55 = scmp.eq.s32.totalorder %s17, 1
    %p56 = scmp.ne.s32.totalorder %s51, %s53
    %p57 = scmp.eq.s32.totalorder %s17, 0
    %p58 = por %p56, %p57
    %p59 = scmp.ne.s32.totalorder %s51, %s53
    %p60 = scmp.eq.s32.totalorder %s22, 1
    %p61 = por %p59, %p60
    %p62 = scmp.ne.s32.totalorder %s53, %s54
    %p63 = scmp.eq.s32.totalorder %s22, 0
    %p64 = por %p62, %p63
    %p65 = scmp.ne.s32.totalorder %s53, %s54
    %p66 = scmp.eq.s32.totalorder %s23, 1
    %p67 = por %p65, %p66
    %p69 = scmp.ne.s32.totalorder %s54, %s68
    %p70 = scmp.eq.s32.totalorder %s23, 0
    %p71 = por %p69, %p70
    %s73 = sadd.s32 %s72, 1
    %p76 = scmp.eq.s32.totalorder %s17, 1
    %p77 = scmp.ne.s32.totalorder %s72, %s74
    %p78 = scmp.eq.s32.totalorder %s17, 0
    %p79 = por %p77, %p78
    %p80 = scmp.ne.s32.totalorder %s72, %s74
    %p81 = scmp.eq.s32.totalorder %s22, 1
    %p82 = por %p80, %p81
    %p83 = scmp.ne.s32.totalorder %s74, %s75
    %p84 = scmp.eq.s32.totalorder %s22, 0
    %p85 = por %p83, %p84
    %p86 = scmp.ne.s32.totalorder %s74, %s75
    %p87 = scmp.eq.s32.totalorder %s23, 1
    %p88 = por %p86, %p87
    %p90 = scmp.ne.s32.totalorder %s75, %s89
    %p91 = scmp.eq.s32.totalorder %s23, 0
    %p92 = por %p90, %p91
    %s94 = sadd.s32 %s93, 1
    %p97 = scmp.eq.s32.totalorder %s17, 1
    %p98 = scmp.ne.s32.totalorder %s93, %s95
    %p99 = scmp.eq.s32.totalorder %s17, 0
    %p100 = por %p98, %p99
    %p101 = scmp.ne.s32.totalorder %s93, %s95
    %p102 = scmp.eq.s32.totalorder %s22, 1
    %p103 = por %p101, %p102
    %p104 = scmp.ne.s32.totalorder %s95, %s96
    %p105 = scmp.eq.s32.totalorder %s22, 0
    %p106 = por %p104, %p105
    %p107 = scmp.ne.s32.totalorder %s95, %s96
    %p108 = scmp.eq.s32.totalorder %s23, 1
    %p109 = por %p107, %p108
    %p111 = scmp.ne.s32.totalorder %s96, %s110
    %p112 = scmp.eq.s32.totalorder %s23, 0
    %p113 = por %p111, %p112
    %s115 = sadd.s32 %s114, 1
    %p118 = scmp.eq.s32.totalorder %s17, 1
    %p119 = scmp.ne.s32.totalorder %s114, %s116
    %p120 = scmp.eq.s32.totalorder %s17, 0
    %p121 = por %p119, %p120
    %p122 = scmp.ne.s32.totalorder %s114, %s116
    %p123 = scmp.eq.s32.totalorder %s22, 1
    %p124 = por %p122, %p123
    %p125 = scmp.ne.s32.totalorder %s116, %s117
    %p126 = scmp.eq.s32.totalorder %s22, 0
    %p127 = por %p125, %p126
    %p128 = scmp.ne.s32.totalorder %s116, %s117
    %p129 = scmp.eq.s32.totalorder %s23, 1
    %p130 = por %p128, %p129
    %p132 = scmp.ne.s32.totalorder %s117, %s131
    %p133 = scmp.eq.s32.totalorder %s23, 0
    %p134 = por %p132, %p133
    %s136 = sadd.s32 %s135, 1
    %p139 = scmp.eq.s32.totalorder %s17, 1
    %p140 = scmp.ne.s32.totalorder %s135, %s137
    %p141 = scmp.eq.s32.totalorder %s17, 0
    %p142 = por %p140, %p141
    %p143 = scmp.ne.s32.totalorder %s135, %s137
    %p144 = scmp.eq.s32.totalorder %s22, 1
    %p145 = por %p143, %p144
    %p146 = scmp.ne.s32.totalorder %s137, %s138
    %p147 = scmp.eq.s32.totalorder %s22, 0
    %p148 = por %p146, %p147
    %p149 = scmp.ne.s32.totalorder %s137, %s138
    %p150 = scmp.eq.s32.totalorder %s23, 1
    %p151 = por %p149, %p150
    %p153 = scmp.ne.s32.totalorder %s138, %s152
    %p154 = scmp.eq.s32.totalorder %s23, 0
    %p155 = por %p153, %p154
    %s157 = sadd.s32 %s156, 1
    %p160 = scmp.eq.s32.totalorder %s17, 1
    %p161 = scmp.ne.s32.totalorder %s156, %s158
    %p162 = scmp.eq.s32.totalorder %s17, 0
    %p163 = por %p161, %p162
    %p164 = scmp.ne.s32.totalorder %s156, %s158
    %p165 = scmp.eq.s32.totalorder %s22, 1
    %p166 = por %p164, %p165
    %p167 = scmp.ne.s32.totalorder %s158, %s159
    %p168 = scmp.eq.s32.totalorder %s22, 0
    %p169 = por %p167, %p168
    %p170 = scmp.ne.s32.totalorder %s158, %s159
    %p171 = scmp.eq.s32.totalorder %s23, 1
    %p172 = por %p170, %p171
    %p174 = scmp.ne.s32.totalorder %s159, %s173
    %p175 = scmp.eq.s32.totalorder %s23, 0
    %p176 = por %p174, %p175
    %s178 = sadd.s32 %s177, 1
    %p181 = scmp.eq.s32.totalorder %s17, 1
    %p182 = scmp.ne.s32.totalorder %s177, %s179
    %p183 = scmp.eq.s32.totalorder %s17, 0
    %p184 = por %p182, %p183
    %p185 = scmp.ne.s32.totalorder %s177, %s179
    %p186 = scmp.eq.s32.totalorder %s22, 1
    %p187 = por %p185, %p186
    %p188 = scmp.ne.s32.totalorder %s179, %s180
    %p189 = scmp.eq.s32.totalorder %s22, 0
    %p190 = por %p188, %p189
    %p191 = scmp.ne.s32.totalorder %s179, %s180
    %p192 = scmp.eq.s32.totalorder %s23, 1
    %p193 = por %p191, %p192
    %p195 = scmp.ne.s32.totalorder %s180, %s194
    %p196 = scmp.eq.s32.totalorder %s23, 0
    %p197 = por %p195, %p196
    %s199 = sadd.s32 %s198, 1
    %p202 = scmp.eq.s32.totalorder %s17, 1
    %p203 = scmp.ne.s32.totalorder %s198, %s200
    %p204 = scmp.eq.s32.totalorder %s17, 0
    %p205 = por %p203, %p204
    %p206 = scmp.ne.s32.totalorder %s198, %s200
    %p207 = scmp.eq.s32.totalorder %s22, 1
    %p208 = por %p206, %p207
    %p209 = scmp.ne.s32.totalorder %s200, %s201
    %p210 = scmp.eq.s32.totalorder %s22, 0
    %p211 = por %p209, %p210
    %p212 = scmp.ne.s32.totalorder %s200, %s201
    %p213 = scmp.eq.s32.totalorder %s23, 1
    %p214 = por %p212, %p213
    %p216 = scmp.ne.s32.totalorder %s201, %s215
    %p217 = scmp.eq.s32.totalorder %s23, 0
    %p218 = por %p216, %p217
    %s219 = ssub.s32 %s17, %s24
    %p220 = scmp.eq.s32.totalorder %s219, 0
    %s222 = sadd.s32 %s221, 1
    %s223 = scalar_select %p220, %s221, %s222
    %p226 = pneg %p220
    %p227 = scmp.eq.s32.totalorder %s17, 1
    %p228 = por %p226, %p227
    %p229 = scmp.ne.s32.totalorder %s221, %s224
    %p230 = scmp.eq.s32.totalorder %s17, 0
    %p231 = por %p229, %p230
    %p232 = scmp.ne.s32.totalorder %s221, %s224
    %p233 = scmp.eq.s32.totalorder %s22, 1
    %p234 = por %p232, %p233
    %p235 = scmp.ne.s32.totalorder %s224, %s225
    %p236 = scmp.eq.s32.totalorder %s22, 0
    %p237 = por %p235, %p236
    %p238 = scmp.ne.s32.totalorder %s224, %s225
    %p239 = scmp.eq.s32.totalorder %s23, 1
    %p240 = por %p238, %p239
    %p242 = scmp.ne.s32.totalorder %s225, %s241
    %p243 = scmp.eq.s32.totalorder %s23, 0
    %p244 = por %p242, %p243
    %s245 = ssub.s32 %s17, %s24
    %p246 = scmp.eq.s32.totalorder %s245, 0
    %s248 = sadd.s32 %s247, 1
    %s249 = scalar_select %p246, %s247, %s248
    %p252 = pneg %p246
    %p253 = scmp.eq.s32.totalorder %s17, 1
    %p254 = por %p252, %p253
    %p255 = scmp.ne.s32.totalorder %s247, %s250
    %p256 = scmp.eq.s32.totalorder %s17, 0
    %p257 = por %p255, %p256
    %p258 = scmp.ne.s32.totalorder %s247, %s250
    %p259 = scmp.eq.s32.totalorder %s22, 1
    %p260 = por %p258, %p259
    %p261 = scmp.ne.s32.totalorder %s250, %s251
    %p262 = scmp.eq.s32.totalorder %s22, 0
    %p263 = por %p261, %p262
    %p264 = scmp.ne.s32.totalorder %s250, %s251
    %p265 = scmp.eq.s32.totalorder %s23, 1
    %p266 = por %p264, %p265
    %p268 = scmp.ne.s32.totalorder %s251, %s267
    %p269 = scmp.eq.s32.totalorder %s23, 0
    %p270 = por %p268, %p269
    %p271 = scmp.le.s32.totalorder 1, %s17
    %p272 = scmp.lt.s32.totalorder %s17, 3
    %p273 = pnand %p271, %p272
    %p274 = pneg %p273
    // Predicated region
    $region9: #{vistr_forward.7} parent=5 // pred_check
      _
    $region10: #{vistr_forward.7} parent=5 // pred_check_branch
      %276 = sbr.rel (%p273) target = $region12
    $region11: #{vistr_forward.7} parent=5 // pred_region
      %s277 = ssub.s32 %s17, 1
      // Predicated region
      $region13: #{vistr_forward.7} parent=11 // pred_check
        %p278 = pneg %p64
      $region14: #{vistr_forward.7} parent=11 // pred_check_branch
        %280 = sbr.rel (%p278) target = $region16
      $region15: #{vistr_forward.7} parent=11 // pred_region
        _
      $region16: #{vistr_forward.7} parent=11 // pred_fallthru
        _
      // Predicated region
      $region17: #{vistr_forward.7} parent=11 // pred_check
        %p281 = pneg %p85
      $region18: #{vistr_forward.7} parent=11 // pred_check_branch
        %283 = sbr.rel (%p281) target = $region20
      $region19: #{vistr_forward.7} parent=11 // pred_region
        _
      $region20: #{vistr_forward.7} parent=11 // pred_fallthru
        _
      // Predicated region
      $region21: #{vistr_forward.7} parent=11 // pred_check
        %p284 = pneg %p106
      $region22: #{vistr_forward.7} parent=11 // pred_check_branch
        %286 = sbr.rel (%p284) target = $region24
      $region23: #{vistr_forward.7} parent=11 // pred_region
        _
      $region24: #{vistr_forward.7} parent=11 // pred_fallthru
        _
      // Predicated region
      $region25: #{vistr_forward.7} parent=11 // pred_check
        %p287 = pneg %p127
      $region26: #{vistr_forward.7} parent=11 // pred_check_branch
        %289 = sbr.rel (%p287) target = $region28
      $region27: #{vistr_forward.7} parent=11 // pred_region
        _
      $region28: #{vistr_forward.7} parent=11 // pred_fallthru
        _
      // Predicated region
      $region29: #{vistr_forward.7} parent=11 // pred_check
        %p290 = pneg %p148
      $region30: #{vistr_forward.7} parent=11 // pred_check_branch
        %292 = sbr.rel (%p290) target = $region32
      $region31: #{vistr_forward.7} parent=11 // pred_region
        _
      $region32: #{vistr_forward.7} parent=11 // pred_fallthru
        _
      // Predicated region
      $region33: #{vistr_forward.7} parent=11 // pred_check
        %p293 = pneg %p169
      $region34: #{vistr_forward.7} parent=11 // pred_check_branch
        %295 = sbr.rel (%p293) target = $region36
      $region35: #{vistr_forward.7} parent=11 // pred_region
        _
      $region36: #{vistr_forward.7} parent=11 // pred_fallthru
        _
      // Predicated region
      $region37: #{vistr_forward.7} parent=11 // pred_check
        %p296 = pneg %p190
      $region38: #{vistr_forward.7} parent=11 // pred_check_branch
        %298 = sbr.rel (%p296) target = $region40
      $region39: #{vistr_forward.7} parent=11 // pred_region
        _
      $region40: #{vistr_forward.7} parent=11 // pred_fallthru
        _
      // Predicated region
      $region41: #{vistr_forward.7} parent=11 // pred_check
        %p299 = pneg %p211
      $region42: #{vistr_forward.7} parent=11 // pred_check_branch
        %301 = sbr.rel (%p299) target = $region44
      $region43: #{vistr_forward.7} parent=11 // pred_region
        _
      $region44: #{vistr_forward.7} parent=11 // pred_fallthru
        _
    $region12: #{vistr_forward.7} parent=5 // pred_fallthru
      _
    %p302 = scmp.lt.s32.totalorder %s17, 2
    // Predicated region
    $region45: #{vistr_forward.7} parent=5 // pred_check
      %p303 = pneg %p302
    $region46: #{vistr_forward.7} parent=5 // pred_check_branch
      %305 = sbr.rel (%p303) target = $region48
    $region47: #{vistr_forward.7} parent=5 // pred_region
      // Predicated region
      $region49: #{vistr_forward.7} parent=47 // pred_check
        %p306 = pneg %p37
      $region50: #{vistr_forward.7} parent=47 // pred_check_branch
        %308 = sbr.rel (%p306) target = $region52
      $region51: #{vistr_forward.7} parent=47 // pred_region
        %p309 = scmp.lt.s32.totalorder %s17, 1
        %s310 = scalar_select %p309, %s17, 1
        %s311 = smul.addr %s310, 8
        %s312 = scalar_lea.vmem %s0, %s311
      $region52: #{vistr_forward.7} parent=47 // pred_fallthru
        _
    $region48: #{vistr_forward.7} parent=5 // pred_fallthru
      _
    %p313 = scmp.le.s32.totalorder 1, %s17
    %p314 = scmp.lt.s32.totalorder %s17, 3
    %p315 = pnand %p313, %p314
    %p316 = pneg %p315
    // Predicated region
    $region53: #{vistr_forward.7} parent=5 // pred_check
      _
    $region54: #{vistr_forward.7} parent=5 // pred_check_branch
      %318 = sbr.rel (%p315) target = $region56
    $region55: #{vistr_forward.7} parent=5 // pred_region
      %s319 = ssub.s32 %s17, 1
      %p320 = scmp.lt.s32.totalorder %s22, 1
      %s321 = scalar_select %p320, %s22, 1
      %s322 = smul.addr %s321, 8
      %s323 = scalar_lea.vmem %s0, %s322
      %p324 = pneg %p43
      %p325 = pneg %p40
      %p326 = pneg %p64
      %p327 = pneg %p61
      %p328 = pneg %p85
      %p329 = pneg %p82
      %p330 = pneg %p106
      %p331 = pneg %p103
      %p332 = pneg %p127
      %p333 = pneg %p124
      %p334 = pneg %p148
      %p335 = pneg %p145
      %p336 = pneg %p169
      %p337 = pneg %p166
      %p338 = pneg %p190
      %p339 = pneg %p187
      %p340 = pneg %p211
      %p341 = pneg %p208
      %p342 = pneg %p237
      %p343 = pneg %p234
      %p344 = scmp.lt.s32.totalorder %s22, 1
      %s345 = scalar_select %p344, %s22, 1
      %s346 = smul.addr %s345, 8
      %s347 = scalar_lea.vmem %s9, %s346
      %p348 = pneg %p263
      %p349 = pneg %p260
      %p350 = scmp.lt.s32.totalorder %s22, 1
      %s351 = scalar_select %p350, %s22, 1
      %s352 = smul.addr %s351, 8
      %s353 = scalar_lea.vmem %s10, %s352
      %p354 = scmp.lt.s32.totalorder %s22, 1
      %s355 = scalar_select %p354, %s22, 1
      %s356 = smul.addr %s355, 8
      %s357 = scalar_lea.vmem %s0, %s356
      %p358 = scmp.lt.s32.totalorder %s22, 1
      %s359 = scalar_select %p358, %s22, 1
      %s360 = smul.addr %s359, 8
      %s361 = scalar_lea.vmem %s9, %s360
      %p362 = scmp.lt.s32.totalorder %s22, 1
      %s363 = scalar_select %p362, %s22, 1
      %s364 = smul.addr %s363, 8
      %s365 = scalar_lea.vmem %s10, %s364
      %v367 = vld [vmem:[%s357] sm:$0xff]
      %v368 = vpack.c.bf16 %v367, %v367
      %v369 = vld [vmem:[%s1] sm:$0xf]
      %v370 = vld [vmem:[%s1 + $0x4] sm:$0xf]
      %v371 = vld [vmem:[%s1 + $0x8] sm:$0xf]
      %v372 = vld [vmem:[%s1 + $0xc] sm:$0xf]
      %v373 = vld [vmem:[%s1 + $0x10] sm:$0xf]
      %v374 = vld [vmem:[%s1 + $0x14] sm:$0xf]
      %v375 = vld [vmem:[%s1 + $0x18] sm:$0xf]
      %v376 = vld [vmem:[%s1 + $0x1c] sm:$0xf]
      %v377 = vld [vmem:[%s1 + $0x20] sm:$0xf]
      %v378 = vld [vmem:[%s1 + $0x24] sm:$0xf]
      %v379 = vld [vmem:[%s1 + $0x28] sm:$0xf]
      %v380 = vld [vmem:[%s1 + $0x2c] sm:$0xf]
      %v381 = vld [vmem:[%s1 + $0x30] sm:$0xf]
      %v382 = vld [vmem:[%s1 + $0x34] sm:$0xf]
      %v383 = vld [vmem:[%s1 + $0x38] sm:$0xf]
      %v384 = vld [vmem:[%s1 + $0x3c] sm:$0xf]
      %v385 = vld [vmem:[%s2] sm:$0x1]
      %v387 = vlaneseq
      %v388 = vshrl.u32 %v387, 7
      %v389 = vsub.s32 0, %v388
      %v390 = vrot.slane %v385, %v389
      %v408 = vunpack.c.l.b16 %v369
      %v409 = vunpack.c.l.b16 %v370
      %v410 = vunpack.c.l.b16 %v371
      %v411 = vunpack.c.l.b16 %v372
      %v412 = vunpack.c.l.b16 %v373
      %v413 = vunpack.c.l.b16 %v374
      %v414 = vunpack.c.l.b16 %v375
      %v415 = vunpack.c.l.b16 %v376
      %v416 = vunpack.c.l.b16 %v377
      %v417 = vunpack.c.l.b16 %v378
      %v418 = vunpack.c.l.b16 %v379
      %v419 = vunpack.c.l.b16 %v380
      %v420 = vunpack.c.l.b16 %v381
      %v421 = vunpack.c.l.b16 %v382
      %v422 = vunpack.c.l.b16 %v383
      %v423 = vunpack.c.l.b16 %v384
      %v424 = vpack.c.b16 %v409, %v408
      %v425 = vpack.c.b16 %v411, %v410
      %v426 = vpack.c.b16 %v413, %v412
      %v427 = vpack.c.b16 %v415, %v414
      %v428 = vpack.c.b16 %v417, %v416
      %v429 = vpack.c.b16 %v419, %v418
      %v430 = vpack.c.b16 %v421, %v420
      %v431 = vpack.c.b16 %v423, %v422
      %440 = vmatprep.subr.bf16.mxu0 0
      %441 = vmatpush1.bf16.msra.mxu0 %v424
      %442 = vmatprep.subr.bf16.mxu0 0
      %443 = vmatpush1.bf16.msra.mxu0 %v425
      %444 = vmatprep.subr.bf16.mxu0 0
      %445 = vmatpush1.bf16.msra.mxu0 %v426
      %446 = vmatprep.subr.bf16.mxu0 0
      %447 = vmatpush1.bf16.msra.mxu0 %v427
      %448 = vmatprep.subr.bf16.mxu0 0
      %449 = vmatpush1.bf16.msra.mxu0 %v428
      %450 = vmatprep.subr.bf16.mxu0 0
      %451 = vmatpush1.bf16.msra.mxu0 %v429
      %452 = vmatprep.subr.bf16.mxu0 0
      %453 = vmatpush1.bf16.msra.mxu0 %v430
      %454 = vmatprep.subr.bf16.mxu0 0
      %455 = vmatpush1.bf16.msra.mxu0 %v431
      %456 = vmatprep.subr.bf16.mxu0 0
      %457 = vmatpush1.bf16.msra.mxu0 0
      %458 = vmatprep.subr.bf16.mxu0 0
      %459 = vmatpush1.bf16.msra.mxu0 0
      %460 = vmatprep.subr.bf16.mxu0 0
      %461 = vmatpush1.bf16.msra.mxu0 0
      %462 = vmatprep.subr.bf16.mxu0 0
      %463 = vmatpush1.bf16.msra.mxu0 0
      %464 = vmatprep.subr.bf16.mxu0 0
      %465 = vmatpush1.bf16.msra.mxu0 0
      %466 = vmatprep.subr.bf16.mxu0 0
      %467 = vmatpush1.bf16.msra.mxu0 0
      %468 = vmatprep.subr.bf16.mxu0 0
      %469 = vmatpush1.bf16.msra.mxu0 0
      %470 = vmatprep.subr.bf16.mxu0 0
      %471 = vmatpush1.bf16.msra.mxu0 0
      %472 = vmatprep.mubr.bf16.mxu0 0
      %473 = vmatmul.mubr.bf16.gmra.mrb[0].mxu0 %v368
      %v474 = vpop.f32.mrb[0].mxu0
      %v475 = vadd.f32 %v390, %v474
      %v476 = vpop.f32.mrb[0].mxu0
      %v477 = vpop.f32.mrb[0].mxu0
      %v478 = vpop.f32.mrb[0].mxu0
      %479 = vdwg.mxu0
      %v480 = vpack.c.bf16 %v475, %v475
      %v481 = vld [vmem:[%s3] sm:$0xff]
      %v482 = vld [vmem:[%s3 + $0x8] sm:$0xff]
      %v483 = vld [vmem:[%s3 + $0x10] sm:$0xff]
      %v484 = vld [vmem:[%s3 + $0x18] sm:$0xff]
      %v485 = vld [vmem:[%s3 + $0x20] sm:$0xff]
      %v486 = vld [vmem:[%s3 + $0x28] sm:$0xff]
      %v487 = vld [vmem:[%s3 + $0x30] sm:$0xff]
      %v488 = vld [vmem:[%s3 + $0x38] sm:$0xff]
      %v489 = vld [vmem:[%s3 + $0x40] sm:$0xff]
      %v490 = vld [vmem:[%s3 + $0x48] sm:$0xff]
      %v491 = vld [vmem:[%s3 + $0x50] sm:$0xff]
      %v492 = vld [vmem:[%s3 + $0x58] sm:$0xff]
      %v493 = vld [vmem:[%s3 + $0x60] sm:$0xff]
      %v494 = vld [vmem:[%s3 + $0x68] sm:$0xff]
      %v495 = vld [vmem:[%s3 + $0x70] sm:$0xff]
      %v496 = vld [vmem:[%s3 + $0x78] sm:$0xff]
      %v497 = vld [vmem:[%s4] sm:$0x3]
      %v499 = vlaneseq
      %v500 = vshrl.u32 %v499, 7
      %v501 = vsub.s32 0, %v500
      %v502 = vrot.slane %v497, %v501
      %v503 = vlaneseq
      %v504 = vshrl.u32 %v503, 7
      %v505 = vsub.s32 1, %v504
      %v506 = vrot.slane %v497, %v505
      %v525 = vunpack.c.l.b16 %v481
      %v526 = vunpack.c.h.b16 %v481
      %v527 = vunpack.c.l.b16 %v482
      %v528 = vunpack.c.h.b16 %v482
      %v529 = vunpack.c.l.b16 %v483
      %v530 = vunpack.c.h.b16 %v483
      %v531 = vunpack.c.l.b16 %v484
      %v532 = vunpack.c.h.b16 %v484
      %v533 = vunpack.c.l.b16 %v485
      %v534 = vunpack.c.h.b16 %v485
      %v535 = vunpack.c.l.b16 %v486
      %v536 = vunpack.c.h.b16 %v486
      %v537 = vunpack.c.l.b16 %v487
      %v538 = vunpack.c.h.b16 %v487
      %v539 = vunpack.c.l.b16 %v488
      %v540 = vunpack.c.h.b16 %v488
      %v541 = vunpack.c.l.b16 %v489
      %v542 = vunpack.c.h.b16 %v489
      %v543 = vunpack.c.l.b16 %v490
      %v544 = vunpack.c.h.b16 %v490
      %v545 = vunpack.c.l.b16 %v491
      %v546 = vunpack.c.h.b16 %v491
      %v547 = vunpack.c.l.b16 %v492
      %v548 = vunpack.c.h.b16 %v492
      %v549 = vunpack.c.l.b16 %v493
      %v550 = vunpack.c.h.b16 %v493
      %v551 = vunpack.c.l.b16 %v494
      %v552 = vunpack.c.h.b16 %v494
      %v553 = vunpack.c.l.b16 %v495
      %v554 = vunpack.c.h.b16 %v495
      %v555 = vunpack.c.l.b16 %v496
      %v556 = vunpack.c.h.b16 %v496
      %v557 = vpack.c.b16 %v527, %v525
      %v558 = vpack.c.b16 %v528, %v526
      %v559 = vpack.c.b16 %v531, %v529
      %v560 = vpack.c.b16 %v532, %v530
      %v561 = vpack.c.b16 %v535, %v533
      %v562 = vpack.c.b16 %v536, %v534
      %v563 = vpack.c.b16 %v539, %v537
      %v564 = vpack.c.b16 %v540, %v538
      %v565 = vpack.c.b16 %v543, %v541
      %v566 = vpack.c.b16 %v544, %v542
      %v567 = vpack.c.b16 %v547, %v545
      %v568 = vpack.c.b16 %v548, %v546
      %v569 = vpack.c.b16 %v551, %v549
      %v570 = vpack.c.b16 %v552, %v550
      %v571 = vpack.c.b16 %v555, %v553
      %v572 = vpack.c.b16 %v556, %v554
      %589 = vmatprep.subr.bf16.mxu0 %v558
      %590 = vmatpush1.bf16.msra.mxu0 %v557
      %591 = vmatprep.subr.bf16.mxu0 %v560
      %592 = vmatpush1.bf16.msra.mxu0 %v559
      %593 = vmatprep.subr.bf16.mxu0 %v562
      %594 = vmatpush1.bf16.msra.mxu0 %v561
      %595 = vmatprep.subr.bf16.mxu0 %v564
      %596 = vmatpush1.bf16.msra.mxu0 %v563
      %597 = vmatprep.subr.bf16.mxu0 %v566
      %598 = vmatpush1.bf16.msra.mxu0 %v565
      %599 = vmatprep.subr.bf16.mxu0 %v568
      %600 = vmatpush1.bf16.msra.mxu0 %v567
      %601 = vmatprep.subr.bf16.mxu0 %v570
      %602 = vmatpush1.bf16.msra.mxu0 %v569
      %603 = vmatprep.subr.bf16.mxu0 %v572
      %604 = vmatpush1.bf16.msra.mxu0 %v571
      %605 = vmatprep.subr.bf16.mxu0 0
      %606 = vmatpush1.bf16.msra.mxu0 0
      %607 = vmatprep.subr.bf16.mxu0 0
      %608 = vmatpush1.bf16.msra.mxu0 0
      %609 = vmatprep.subr.bf16.mxu0 0
      %610 = vmatpush1.bf16.msra.mxu0 0
      %611 = vmatprep.subr.bf16.mxu0 0
      %612 = vmatpush1.bf16.msra.mxu0 0
      %613 = vmatprep.subr.bf16.mxu0 0
      %614 = vmatpush1.bf16.msra.mxu0 0
      %615 = vmatprep.subr.bf16.mxu0 0
      %616 = vmatpush1.bf16.msra.mxu0 0
      %617 = vmatprep.subr.bf16.mxu0 0
      %618 = vmatpush1.bf16.msra.mxu0 0
      %619 = vmatprep.subr.bf16.mxu0 0
      %620 = vmatpush1.bf16.msra.mxu0 0
      %621 = vmatprep.mubr.bf16.mxu0 0
      %622 = vmatmul.mubr.bf16.gmra.mrb[0].mxu0 %v480
      %v623 = vpop.f32.mrb[0].mxu0
      %v624 = vadd.f32 %v502, %v623
      %v625 = vpop.f32.mrb[0].mxu0
      %v626 = vadd.f32 %v506, %v625
      %v627 = vpop.f32.mrb[0].mxu0
      %v628 = vpop.f32.mrb[0].mxu0
      %629 = vdwg.mxu0
      %630 = vst [vmem:[%s361] sm:$0xff] %v626
      %v631 = vmax.f32 %v624, 0.0
      %v632 = vpack.c.bf16 %v631, %v631
      %v633 = vld [vmem:[%s5] sm:$0xf]
      %v634 = vld [vmem:[%s5 + $0x4] sm:$0xf]
      %v635 = vld [vmem:[%s5 + $0x8] sm:$0xf]
      %v636 = vld [vmem:[%s5 + $0xc] sm:$0xf]
      %v637 = vld [vmem:[%s5 + $0x10] sm:$0xf]
      %v638 = vld [vmem:[%s5 + $0x14] sm:$0xf]
      %v639 = vld [vmem:[%s5 + $0x18] sm:$0xf]
      %v640 = vld [vmem:[%s5 + $0x1c] sm:$0xf]
      %v641 = vld [vmem:[%s5 + $0x20] sm:$0xf]
      %v642 = vld [vmem:[%s5 + $0x24] sm:$0xf]
      %v643 = vld [vmem:[%s5 + $0x28] sm:$0xf]
      %v644 = vld [vmem:[%s5 + $0x2c] sm:$0xf]
      %v645 = vld [vmem:[%s5 + $0x30] sm:$0xf]
      %v646 = vld [vmem:[%s5 + $0x34] sm:$0xf]
      %v647 = vld [vmem:[%s5 + $0x38] sm:$0xf]
      %v648 = vld [vmem:[%s5 + $0x3c] sm:$0xf]
      %v649 = vld [vmem:[%s6] sm:$0x1]
      %v651 = vlaneseq
      %v652 = vshrl.u32 %v651, 7
      %v653 = vsub.s32 0, %v652
      %v654 = vrot.slane %v649, %v653
      %v672 = vunpack.c.l.b16 %v633
      %v673 = vunpack.c.l.b16 %v634
      %v674 = vunpack.c.l.b16 %v635
      %v675 = vunpack.c.l.b16 %v636
      %v676 = vunpack.c.l.b16 %v637
      %v677 = vunpack.c.l.b16 %v638
      %v678 = vunpack.c.l.b16 %v639
      %v679 = vunpack.c.l.b16 %v640
      %v680 = vunpack.c.l.b16 %v641
      %v681 = vunpack.c.l.b16 %v642
      %v682 = vunpack.c.l.b16 %v643
      %v683 = vunpack.c.l.b16 %v644
      %v684 = vunpack.c.l.b16 %v645
      %v685 = vunpack.c.l.b16 %v646
      %v686 = vunpack.c.l.b16 %v647
      %v687 = vunpack.c.l.b16 %v648
      %v688 = vpack.c.b16 %v673, %v672
      %v689 = vpack.c.b16 %v675, %v674
      %v690 = vpack.c.b16 %v677, %v676
      %v691 = vpack.c.b16 %v679, %v678
      %v692 = vpack.c.b16 %v681, %v680
      %v693 = vpack.c.b16 %v683, %v682
      %v694 = vpack.c.b16 %v685, %v684
      %v695 = vpack.c.b16 %v687, %v686
      %704 = vmatprep.subr.bf16.mxu0 0
      %705 = vmatpush1.bf16.msra.mxu0 %v688
      %706 = vmatprep.subr.bf16.mxu0 0
      %707 = vmatpush1.bf16.msra.mxu0 %v689
      %708 = vmatprep.subr.bf16.mxu0 0
      %709 = vmatpush1.bf16.msra.mxu0 %v690
      %710 = vmatprep.subr.bf16.mxu0 0
      %711 = vmatpush1.bf16.msra.mxu0 %v691
      %712 = vmatprep.subr.bf16.mxu0 0
      %713 = vmatpush1.bf16.msra.mxu0 %v692
      %714 = vmatprep.subr.bf16.mxu0 0
      %715 = vmatpush1.bf16.msra.mxu0 %v693
      %716 = vmatprep.subr.bf16.mxu0 0
      %717 = vmatpush1.bf16.msra.mxu0 %v694
      %718 = vmatprep.subr.bf16.mxu0 0
      %719 = vmatpush1.bf16.msra.mxu0 %v695
      %720 = vmatprep.subr.bf16.mxu0 0
      %721 = vmatpush1.bf16.msra.mxu0 0
      %722 = vmatprep.subr.bf16.mxu0 0
      %723 = vmatpush1.bf16.msra.mxu0 0
      %724 = vmatprep.subr.bf16.mxu0 0
      %725 = vmatpush1.bf16.msra.mxu0 0
      %726 = vmatprep.subr.bf16.mxu0 0
      %727 = vmatpush1.bf16.msra.mxu0 0
      %728 = vmatprep.subr.bf16.mxu0 0
      %729 = vmatpush1.bf16.msra.mxu0 0
      %730 = vmatprep.subr.bf16.mxu0 0
      %731 = vmatpush1.bf16.msra.mxu0 0
      %732 = vmatprep.subr.bf16.mxu0 0
      %733 = vmatpush1.bf16.msra.mxu0 0
      %734 = vmatprep.subr.bf16.mxu0 0
      %735 = vmatpush1.bf16.msra.mxu0 0
      %736 = vmatprep.mubr.bf16.mxu0 0
      %737 = vmatmul.mubr.bf16.gmra.mrb[0].mxu0 %v632
      %v738 = vpop.f32.mrb[0].mxu0
      %v739 = vadd.f32 %v654, %v738
      %v740 = vpop.f32.mrb[0].mxu0
      %v741 = vpop.f32.mrb[0].mxu0
      %v742 = vpop.f32.mrb[0].mxu0
      %743 = vdwg.mxu0
      %v744 = vmax.f32 %v739, 0.0
      %v745 = vpack.c.bf16 %v744, %v744
      %v746 = vld [vmem:[%s7] sm:$0xf]
      %v747 = vld [vmem:[%s7 + $0x4] sm:$0xf]
      %v748 = vld [vmem:[%s7 + $0x8] sm:$0xf]
      %v749 = vld [vmem:[%s7 + $0xc] sm:$0xf]
      %v750 = vld [vmem:[%s7 + $0x10] sm:$0xf]
      %v751 = vld [vmem:[%s7 + $0x14] sm:$0xf]
      %v752 = vld [vmem:[%s7 + $0x18] sm:$0xf]
      %v753 = vld [vmem:[%s7 + $0x1c] sm:$0xf]
      %v754 = vld [vmem:[%s7 + $0x20] sm:$0xf]
      %v755 = vld [vmem:[%s7 + $0x24] sm:$0xf]
      %v756 = vld [vmem:[%s7 + $0x28] sm:$0xf]
      %v757 = vld [vmem:[%s7 + $0x2c] sm:$0xf]
      %v758 = vld [vmem:[%s7 + $0x30] sm:$0xf]
      %v759 = vld [vmem:[%s7 + $0x34] sm:$0xf]
      %v760 = vld [vmem:[%s7 + $0x38] sm:$0xf]
      %v761 = vld [vmem:[%s7 + $0x3c] sm:$0xf]
      %v762 = vld [vmem:[%s8] sm:$0x1]
      %v764 = vlaneseq
      %v765 = vshrl.u32 %v764, 7
      %v766 = vsub.s32 0, %v765
      %v767 = vrot.slane %v762, %v766
      %v785 = vunpack.c.l.b16 %v746
      %v786 = vunpack.c.l.b16 %v747
      %v787 = vunpack.c.l.b16 %v748
      %v788 = vunpack.c.l.b16 %v749
      %v789 = vunpack.c.l.b16 %v750
      %v790 = vunpack.c.l.b16 %v751
      %v791 = vunpack.c.l.b16 %v752
      %v792 = vunpack.c.l.b16 %v753
      %v793 = vunpack.c.l.b16 %v754
      %v794 = vunpack.c.l.b16 %v755
      %v795 = vunpack.c.l.b16 %v756
      %v796 = vunpack.c.l.b16 %v757
      %v797 = vunpack.c.l.b16 %v758
      %v798 = vunpack.c.l.b16 %v759
      %v799 = vunpack.c.l.b16 %v760
      %v800 = vunpack.c.l.b16 %v761
      %v801 = vpack.c.b16 %v786, %v785
      %v802 = vpack.c.b16 %v788, %v787
      %v803 = vpack.c.b16 %v790, %v789
      %v804 = vpack.c.b16 %v792, %v791
      %v805 = vpack.c.b16 %v794, %v793
      %v806 = vpack.c.b16 %v796, %v795
      %v807 = vpack.c.b16 %v798, %v797
      %v808 = vpack.c.b16 %v800, %v799
      %817 = vmatprep.subr.bf16.mxu0 0
      %818 = vmatpush1.bf16.msra.mxu0 %v801
      %819 = vmatprep.subr.bf16.mxu0 0
      %820 = vmatpush1.bf16.msra.mxu0 %v802
      %821 = vmatprep.subr.bf16.mxu0 0
      %822 = vmatpush1.bf16.msra.mxu0 %v803
      %823 = vmatprep.subr.bf16.mxu0 0
      %824 = vmatpush1.bf16.msra.mxu0 %v804
      %825 = vmatprep.subr.bf16.mxu0 0
      %826 = vmatpush1.bf16.msra.mxu0 %v805
      %827 = vmatprep.subr.bf16.mxu0 0
      %828 = vmatpush1.bf16.msra.mxu0 %v806
      %829 = vmatprep.subr.bf16.mxu0 0
      %830 = vmatpush1.bf16.msra.mxu0 %v807
      %831 = vmatprep.subr.bf16.mxu0 0
      %832 = vmatpush1.bf16.msra.mxu0 %v808
      %833 = vmatprep.subr.bf16.mxu0 0
      %834 = vmatpush1.bf16.msra.mxu0 0
      %835 = vmatprep.subr.bf16.mxu0 0
      %836 = vmatpush1.bf16.msra.mxu0 0
      %837 = vmatprep.subr.bf16.mxu0 0
      %838 = vmatpush1.bf16.msra.mxu0 0
      %839 = vmatprep.subr.bf16.mxu0 0
      %840 = vmatpush1.bf16.msra.mxu0 0
      %841 = vmatprep.subr.bf16.mxu0 0
      %842 = vmatpush1.bf16.msra.mxu0 0
      %843 = vmatprep.subr.bf16.mxu0 0
      %844 = vmatpush1.bf16.msra.mxu0 0
      %845 = vmatprep.subr.bf16.mxu0 0
      %846 = vmatpush1.bf16.msra.mxu0 0
      %847 = vmatprep.subr.bf16.mxu0 0
      %848 = vmatpush1.bf16.msra.mxu0 0
      %849 = vmatprep.mubr.bf16.mxu0 0
      %850 = vmatmul.mubr.bf16.gmra.mrb[0].mxu0 %v745
      %v851 = vpop.f32.mrb[0].mxu0
      %v852 = vadd.f32 %v767, %v851
      %v853 = vpop.f32.mrb[0].mxu0
      %v854 = vpop.f32.mrb[0].mxu0
      %v855 = vpop.f32.mrb[0].mxu0
      %856 = vdwg.mxu0
      %v857 = vxor.u32 %v852, 2147483648
      %v858 = vmul.f32 %v857, 1.442695
      %v859 = vpow.pop %v858
      %v860 = vadd.f32 %v859, 1.0
      %v861 = vrcp.pop %v860
      %v862 = vmul.f32 1.0, %v861
      %863 = vst [vmem:[%s365] sm:$0xff] %v862
      %p864 = scmp.lt.s32.totalorder %s22, 1
      %s865 = scalar_select %p864, %s22, 1
      %s866 = smul.addr %s865, 8
      %s867 = scalar_lea.vmem %s9, %s866
      %p868 = scmp.lt.s32.totalorder %s22, 1
      %s869 = scalar_select %p868, %s22, 1
      %s870 = smul.addr %s869, 8
      %s871 = scalar_lea.vmem %s10, %s870
      // Predicated region
      $region57: #{vistr_forward.7} parent=55 // pred_check
        %p872 = pneg %p234
      $region58: #{vistr_forward.7} parent=55 // pred_check_branch
        %874 = sbr.rel (%p872) target = $region60
      $region59: #{vistr_forward.7} parent=55 // pred_region
        _
      $region60: #{vistr_forward.7} parent=55 // pred_fallthru
        _
      // Predicated region
      $region61: #{vistr_forward.7} parent=55 // pred_check
        %p875 = pneg %p260
      $region62: #{vistr_forward.7} parent=55 // pred_check_branch
        %877 = sbr.rel (%p875) target = $region64
      $region63: #{vistr_forward.7} parent=55 // pred_region
        _
      $region64: #{vistr_forward.7} parent=55 // pred_fallthru
        _
    $region56: #{vistr_forward.7} parent=5 // pred_fallthru
      _
    %p878 = scmp.le.s32.totalorder 2, %s17
    // Predicated region
    $region65: #{vistr_forward.7} parent=5 // pred_check
      %p879 = pneg %p878
    $region66: #{vistr_forward.7} parent=5 // pred_check_branch
      %881 = sbr.rel (%p879) target = $region68
    $region67: #{vistr_forward.7} parent=5 // pred_region
      %s882 = ssub.s32 %s17, 2
      // Predicated region
      $region69: #{vistr_forward.7} parent=67 // pred_check
        %p883 = pneg %p240
      $region70: #{vistr_forward.7} parent=67 // pred_check_branch
        %885 = sbr.rel (%p883) target = $region72
      $region71: #{vistr_forward.7} parent=67 // pred_region
        %p886 = scmp.lt.s32.totalorder %s23, 1
        %s887 = scalar_select %p886, %s23, 1
        %s888 = smul.addr %s887, 8
        %s889 = scalar_lea.vmem %s9, %s888
      $region72: #{vistr_forward.7} parent=67 // pred_fallthru
        _
      // Predicated region
      $region73: #{vistr_forward.7} parent=67 // pred_check
        %p890 = pneg %p266
      $region74: #{vistr_forward.7} parent=67 // pred_check_branch
        %892 = sbr.rel (%p890) target = $region76
      $region75: #{vistr_forward.7} parent=67 // pred_region
        %p893 = scmp.lt.s32.totalorder %s23, 1
        %s894 = scalar_select %p893, %s23, 1
        %s895 = smul.addr %s894, 8
        %s896 = scalar_lea.vmem %s10, %s895
      $region76: #{vistr_forward.7} parent=67 // pred_fallthru
        _
    $region68: #{vistr_forward.7} parent=5 // pred_fallthru
      _
  $region6: #{vistr_forward.7} parent=0 // loop_footer
    %s21 = sadd.s32 1, %s17
  $region7: #{vistr_forward.7} parent=0 // loop_footer_branch
    %16 = sbr.rel target = $region3
  $region8: #{vistr_forward.7} parent=0 // loop_exit
    _

// kernel: vistr_forward.6
$region0: #{vistr_forward.6}
  #allocation0 [shape = 'u32[]', space=smem, size = 0x4, offset = 0x4, fixed_abs, tag = 'smem constant byte address 0x4 - core index']
  #allocation1 [shape = 'u32[144,128]{1,0:T(1,128)}', space=vmem, size = 0x12000, scoped, tag = 'internal scratch']
  #allocation2 [shape = 'f32[8,1]{1,0:T(8,128)}', space=vmem, size = 0x1000, scoped, tag = 'scratch operand']
  #allocation3 [shape = 'f32[8,1]{1,0:T(8,128)}', space=vmem, size = 0x1000, scoped, tag = 'scratch operand']
  #allocation4 [shape = 'f32[8,128]{1,0:T(8,128)}', space=vmem, size = 0x1000, scoped, tag = 'scratch operand']
  %s0 = inlined_call_operand.vmem [shape: bf16[8,128], index: 0, kind: input, shape index: {}]
  %s1 = inlined_call_operand.vmem [shape: bf16[2,128,128], index: 1, kind: input, shape index: {}]
  %s2 = inlined_call_operand.vmem [shape: bf16[2,128,128], index: 2, kind: input, shape index: {}]
  %s3 = inlined_call_operand.vmem [shape: f32[2,1,128], index: 3, kind: input, shape index: {}]
  %s4 = inlined_call_operand.vmem [shape: f32[2,8,128], index: 4, kind: output, shape index: {}]
  %s5 = sld [smem:[#allocation0]]
  $region57: #{vistr_forward.6} parent=0
    _
  %s7 = ssub.s32 1, %s5
  %s8 = scalar_select 0, %s7, %s5
  loop: start=0, step=1, limit=4
  $region2: #{vistr_forward.6} parent=0 // loop_pre_header
    _
  $region3: #{vistr_forward.6} parent=0 // loop_header
    %s10 = sphi 0, %s14
    %p11 = scmp.ge.s32.totalorder %s10, 4
    %s17 = sphi 0, %s36
    %s18 = sphi 0, %s32
    %s19 = sphi 0, %s28
    %s20 = sphi 0, %s17
    %s21 = sphi 0, %s18
    %s22 = sphi 0, %s19
    %s23 = sphi 0, %s20
    %s24 = sphi 0, %s21
    %s25 = sphi 0, %s22
    %s39 = sphi 0, %s41
    %s42 = sphi 0, %s39
    %s43 = sphi 0, %s42
    %s59 = sphi 0, %s43
    %s67 = sphi 0, %s69
    %s70 = sphi 0, %s67
    %s71 = sphi 0, %s70
    %s87 = sphi 0, %s71
    %s95 = sphi 0, %s97
    %s98 = sphi 0, %s95
    %s99 = sphi 0, %s98
    %s115 = sphi 0, %s99
    %s123 = sphi 0, %s125
    %s126 = sphi 0, %s123
    %s127 = sphi 0, %s126
    %s143 = sphi 0, %s127
    %s151 = sphi 0, %s153
    %s154 = sphi 0, %s151
    %s155 = sphi 0, %s154
    %s171 = sphi 0, %s155
  $region4: #{vistr_forward.6} parent=0 // loop_header_branch
    %13 = sbr.rel (%p11) target = $region8
  $region5: #{vistr_forward.6} parent=0 // loop_body
    %s15 = ssub.s32 %s10, 1
    %s16 = ssub.s32 %s10, 2
    %s26 = sadd.s32 1, %s19
    %p27 = scmp.ge.s32.totalorder %s26, 1
    %s28 = scalar_select %p27, 0, %s26
    %s29 = sadd.s32 1, %s18
    %s30 = scalar_select %p27, %s29, %s18
    %p31 = scmp.ge.s32.totalorder %s30, 1
    %s32 = scalar_select %p31, 0, %s30
    %s33 = sadd.s32 1, %s17
    %s34 = scalar_select %p31, %s33, %s17
    %p35 = scmp.ge.s32.totalorder %s34, 2
    %s36 = scalar_select %p35, 0, %s34
    %s37 = ssub.s32 %s18, %s32
    %p38 = scmp.eq.s32.totalorder %s37, 0
    %s40 = sadd.s32 %s39, 1
    %s41 = scalar_select %p38, %s39, %s40
    %p44 = pneg %p38
    %p45 = scmp.eq.s32.totalorder %s10, 1
    %p46 = por %p44, %p45
    %p47 = scmp.ne.s32.totalorder %s39, %s42
    %p48 = scmp.eq.s32.totalorder %s10, 0
    %p49 = por %p47, %p48
    %p50 = scmp.ne.s32.totalorder %s39, %s42
    %p51 = scmp.eq.s32.totalorder %s15, 1
    %p52 = por %p50, %p51
    %p53 = scmp.ne.s32.totalorder %s42, %s43
    %p54 = scmp.eq.s32.totalorder %s15, 0
    %p55 = por %p53, %p54
    %p56 = scmp.ne.s32.totalorder %s42, %s43
    %p57 = scmp.eq.s32.totalorder %s16, 1
    %p58 = por %p56, %p57
    %p60 = scmp.ne.s32.totalorder %s43, %s59
    %p61 = scmp.eq.s32.totalorder %s16, 0
    %p62 = por %p60, %p61
    %s63 = ssub.s32 %s17, %s36
    %s64 = ssub.s32 %s19, %s28
    %s65 = sor.u32 %s63, %s64
    %p66 = scmp.eq.s32.totalorder %s65, 0
    %s68 = sadd.s32 %s67, 1
    %s69 = scalar_select %p66, %s67, %s68
    %p72 = pneg %p66
    %p73 = scmp.eq.s32.totalorder %s10, 1
    %p74 = por %p72, %p73
    %p75 = scmp.ne.s32.totalorder %s67, %s70
    %p76 = scmp.eq.s32.totalorder %s10, 0
    %p77 = por %p75, %p76
    %p78 = scmp.ne.s32.totalorder %s67, %s70
    %p79 = scmp.eq.s32.totalorder %s15, 1
    %p80 = por %p78, %p79
    %p81 = scmp.ne.s32.totalorder %s70, %s71
    %p82 = scmp.eq.s32.totalorder %s15, 0
    %p83 = por %p81, %p82
    %p84 = scmp.ne.s32.totalorder %s70, %s71
    %p85 = scmp.eq.s32.totalorder %s16, 1
    %p86 = por %p84, %p85
    %p88 = scmp.ne.s32.totalorder %s71, %s87
    %p89 = scmp.eq.s32.totalorder %s16, 0
    %p90 = por %p88, %p89
    %s91 = ssub.s32 %s17, %s36
    %s92 = ssub.s32 %s19, %s28
    %s93 = sor.u32 %s91, %s92
    %p94 = scmp.eq.s32.totalorder %s93, 0
    %s96 = sadd.s32 %s95, 1
    %s97 = scalar_select %p94, %s95, %s96
    %p100 = pneg %p94
    %p101 = scmp.eq.s32.totalorder %s10, 1
    %p102 = por %p100, %p101
    %p103 = scmp.ne.s32.totalorder %s95, %s98
    %p104 = scmp.eq.s32.totalorder %s10, 0
    %p105 = por %p103, %p104
    %p106 = scmp.ne.s32.totalorder %s95, %s98
    %p107 = scmp.eq.s32.totalorder %s15, 1
    %p108 = por %p106, %p107
    %p109 = scmp.ne.s32.totalorder %s98, %s99
    %p110 = scmp.eq.s32.totalorder %s15, 0
    %p111 = por %p109, %p110
    %p112 = scmp.ne.s32.totalorder %s98, %s99
    %p113 = scmp.eq.s32.totalorder %s16, 1
    %p114 = por %p112, %p113
    %p116 = scmp.ne.s32.totalorder %s99, %s115
    %p117 = scmp.eq.s32.totalorder %s16, 0
    %p118 = por %p116, %p117
    %s119 = ssub.s32 %s17, %s36
    %s120 = ssub.s32 %s19, %s28
    %s121 = sor.u32 %s119, %s120
    %p122 = scmp.eq.s32.totalorder %s121, 0
    %s124 = sadd.s32 %s123, 1
    %s125 = scalar_select %p122, %s123, %s124
    %p128 = pneg %p122
    %p129 = scmp.eq.s32.totalorder %s10, 1
    %p130 = por %p128, %p129
    %p131 = scmp.ne.s32.totalorder %s123, %s126
    %p132 = scmp.eq.s32.totalorder %s10, 0
    %p133 = por %p131, %p132
    %p134 = scmp.ne.s32.totalorder %s123, %s126
    %p135 = scmp.eq.s32.totalorder %s15, 1
    %p136 = por %p134, %p135
    %p137 = scmp.ne.s32.totalorder %s126, %s127
    %p138 = scmp.eq.s32.totalorder %s15, 0
    %p139 = por %p137, %p138
    %p140 = scmp.ne.s32.totalorder %s126, %s127
    %p141 = scmp.eq.s32.totalorder %s16, 1
    %p142 = por %p140, %p141
    %p144 = scmp.ne.s32.totalorder %s127, %s143
    %p145 = scmp.eq.s32.totalorder %s16, 0
    %p146 = por %p144, %p145
    %s147 = ssub.s32 %s17, %s36
    %s148 = ssub.s32 %s18, %s32
    %s149 = sor.u32 %s147, %s148
    %p150 = scmp.eq.s32.totalorder %s149, 0
    %s152 = sadd.s32 %s151, 1
    %s153 = scalar_select %p150, %s151, %s152
    %p156 = pneg %p150
    %p157 = scmp.eq.s32.totalorder %s10, 1
    %p158 = por %p156, %p157
    %p159 = scmp.ne.s32.totalorder %s151, %s154
    %p160 = scmp.eq.s32.totalorder %s10, 0
    %p161 = por %p159, %p160
    %p162 = scmp.ne.s32.totalorder %s151, %s154
    %p163 = scmp.eq.s32.totalorder %s15, 1
    %p164 = por %p162, %p163
    %p165 = scmp.ne.s32.totalorder %s154, %s155
    %p166 = scmp.eq.s32.totalorder %s15, 0
    %p167 = por %p165, %p166
    %p168 = scmp.ne.s32.totalorder %s154, %s155
    %p169 = scmp.eq.s32.totalorder %s16, 1
    %p170 = por %p168, %p169
    %p172 = scmp.ne.s32.totalorder %s155, %s171
    %p173 = scmp.eq.s32.totalorder %s16, 0
    %p174 = por %p172, %p173
    %p175 = scmp.le.s32.totalorder 1, %s10
    %p176 = scmp.lt.s32.totalorder %s10, 3
    %p177 = pnand %p175, %p176
    %p178 = pneg %p177
    // Predicated region
    $region9: #{vistr_forward.6} parent=5 // pred_check
      _
    $region10: #{vistr_forward.6} parent=5 // pred_check_branch
      %180 = sbr.rel (%p177) target = $region12
    $region11: #{vistr_forward.6} parent=5 // pred_region
      %s181 = ssub.s32 %s10, 1
      // Predicated region
      $region13: #{vistr_forward.6} parent=11 // pred_check
        %p182 = pneg %p55
      $region14: #{vistr_forward.6} parent=11 // pred_check_branch
        %184 = sbr.rel (%p182) target = $region16
      $region15: #{vistr_forward.6} parent=11 // pred_region
        %p185 = scmp.lt.s32.totalorder %s21, 0
        %s186 = scalar_select %p185, %s21, 0
        %s187 = smul.addr %s186, 4
        %s188 = scalar_lea.vmem %s0, %s187
      $region16: #{vistr_forward.6} parent=11 // pred_fallthru
        _
    $region12: #{vistr_forward.6} parent=5 // pred_fallthru
      _
    %p189 = scmp.lt.s32.totalorder %s10, 2
    // Predicated region
    $region17: #{vistr_forward.6} parent=5 // pred_check
      %p190 = pneg %p189
    $region18: #{vistr_forward.6} parent=5 // pred_check_branch
      %192 = sbr.rel (%p190) target = $region20
    $region19: #{vistr_forward.6} parent=5 // pred_region
      // Predicated region
      $region21: #{vistr_forward.6} parent=19 // pred_check
        %p193 = pneg %p77
      $region22: #{vistr_forward.6} parent=19 // pred_check_branch
        %195 = sbr.rel (%p193) target = $region24
      $region23: #{vistr_forward.6} parent=19 // pred_region
        %s196 = smul.u32 16, %s19
        %p197 = scmp.lt.s32.totalorder %s17, 1
        %s198 = scalar_select %p197, %s17, 1
        %p199 = scmp.lt.s32.totalorder %s196, 15
        %s200 = scalar_select %p199, %s196, 15
        %s201 = smul.addr %s198, 16
        %s202 = sadd.s32 %s200, %s201
        %s203 = smul.addr %s202, 4
        %s204 = scalar_lea.vmem %s1, %s203
        %s205 = smul.u32 16, %s19
      $region24: #{vistr_forward.6} parent=19 // pred_fallthru
        _
      // Predicated region
      $region25: #{vistr_forward.6} parent=19 // pred_check
        %p206 = pneg %p105
      $region26: #{vistr_forward.6} parent=19 // pred_check_branch
        %208 = sbr.rel (%p206) target = $region28
      $region27: #{vistr_forward.6} parent=19 // pred_region
        %s209 = smul.u32 16, %s19
        %p210 = scmp.lt.s32.totalorder %s17, 1
        %s211 = scalar_select %p210, %s17, 1
        %p212 = scmp.lt.s32.totalorder %s209, 15
        %s213 = scalar_select %p212, %s209, 15
        %s214 = smul.addr %s211, 16
        %s215 = sadd.s32 %s213, %s214
        %s216 = smul.addr %s215, 4
        %s217 = scalar_lea.vmem %s2, %s216
        %s218 = smul.u32 16, %s19
      $region28: #{vistr_forward.6} parent=19 // pred_fallthru
        _
      // Predicated region
      $region29: #{vistr_forward.6} parent=19 // pred_check
        %p219 = pneg %p133
      $region30: #{vistr_forward.6} parent=19 // pred_check_branch
        %221 = sbr.rel (%p219) target = $region32
      $region31: #{vistr_forward.6} parent=19 // pred_region
        %p222 = scmp.lt.s32.totalorder %s17, 1
        %s223 = scalar_select %p222, %s17, 1
        %p224 = scmp.lt.s32.totalorder %s19, 0
        %s225 = scalar_select %p224, %s19, 0
        %s226 = sadd.s32 %s225, %s223
        %s227 = scalar_lea.vmem %s3, %s226
      $region32: #{vistr_forward.6} parent=19 // pred_fallthru
        _
    $region20: #{vistr_forward.6} parent=5 // pred_fallthru
      _
    %p228 = scmp.le.s32.totalorder 1, %s10
    %p229 = scmp.lt.s32.totalorder %s10, 3
    %p230 = pnand %p228, %p229
    %p231 = pneg %p230
    // Predicated region
    $region33: #{vistr_forward.6} parent=5 // pred_check
      _
    $region34: #{vistr_forward.6} parent=5 // pred_check_branch
      %233 = sbr.rel (%p230) target = $region36
    $region35: #{vistr_forward.6} parent=5 // pred_region
      %s234 = ssub.s32 %s10, 1
      %p235 = scmp.lt.s32.totalorder %s21, 0
      %s236 = scalar_select %p235, %s21, 0
      %s237 = smul.addr %s236, 4
      %s238 = scalar_lea.vmem %s0, %s237
      %p239 = pneg %p55
      %p240 = pneg %p52
      %s241 = smul.u32 16, %s22
      %p242 = scmp.lt.s32.totalorder %s20, 1
      %s243 = scalar_select %p242, %s20, 1
      %p244 = scmp.lt.s32.totalorder %s241, 15
      %s245 = scalar_select %p244, %s241, 15
      %s246 = smul.addr %s243, 16
      %s247 = sadd.s32 %s245, %s246
      %s248 = smul.addr %s247, 4
      %s249 = scalar_lea.vmem %s1, %s248
      %p250 = pneg %p83
      %p251 = pneg %p80
      %s252 = smul.u32 16, %s22
      %p253 = scmp.lt.s32.totalorder %s20, 1
      %s254 = scalar_select %p253, %s20, 1
      %p255 = scmp.lt.s32.totalorder %s252, 15
      %s256 = scalar_select %p255, %s252, 15
      %s257 = smul.addr %s254, 16
      %s258 = sadd.s32 %s256, %s257
      %s259 = smul.addr %s258, 4
      %s260 = scalar_lea.vmem %s2, %s259
      %p261 = pneg %p111
      %p262 = pneg %p108
      %p263 = scmp.lt.s32.totalorder %s20, 1
      %s264 = scalar_select %p263, %s20, 1
      %p265 = scmp.lt.s32.totalorder %s22, 0
      %s266 = scalar_select %p265, %s22, 0
      %s267 = sadd.s32 %s266, %s264
      %s268 = scalar_lea.vmem %s3, %s267
      %p269 = pneg %p139
      %p270 = pneg %p136
      %p271 = pneg %p167
      %p272 = pneg %p164
      %p273 = scmp.lt.s32.totalorder %s20, 1
      %s274 = scalar_select %p273, %s20, 1
      %p275 = scmp.lt.s32.totalorder %s21, 0
      %s276 = scalar_select %p275, %s21, 0
      %s277 = sadd.s32 %s276, %s274
      %s278 = smul.addr %s277, 8
      %s279 = scalar_lea.vmem %s4, %s278
      %p280 = scmp.lt.s32.totalorder %s21, 0
      %s281 = scalar_select %p280, %s21, 0
      %s282 = smul.addr %s281, 4
      %s283 = scalar_lea.vmem %s0, %s282
      %s284 = smul.u32 16, %s22
      %p285 = scmp.lt.s32.totalorder %s20, 1
      %s286 = scalar_select %p285, %s20, 1
      %p287 = scmp.lt.s32.totalorder %s284, 15
      %s288 = scalar_select %p287, %s284, 15
      %s289 = smul.addr %s286, 16
      %s290 = sadd.s32 %s288, %s289
      %s291 = smul.addr %s290, 4
      %s292 = scalar_lea.vmem %s1, %s291
      %s293 = smul.u32 16, %s22
      %s294 = smul.u32 16, %s22
      %p295 = scmp.lt.s32.totalorder %s20, 1
      %s296 = scalar_select %p295, %s20, 1
      %p297 = scmp.lt.s32.totalorder %s294, 15
      %s298 = scalar_select %p297, %s294, 15
      %s299 = smul.addr %s296, 16
      %s300 = sadd.s32 %s298, %s299
      %s301 = smul.addr %s300, 4
      %s302 = scalar_lea.vmem %s2, %s301
      %s303 = smul.u32 16, %s22
      %p304 = scmp.lt.s32.totalorder %s20, 1
      %s305 = scalar_select %p304, %s20, 1
      %p306 = scmp.lt.s32.totalorder %s22, 0
      %s307 = scalar_select %p306, %s22, 0
      %s308 = sadd.s32 %s307, %s305
      %s309 = scalar_lea.vmem %s3, %s308
      %p310 = scmp.lt.s32.totalorder %s20, 1
      %s311 = scalar_select %p310, %s20, 1
      %p312 = scmp.lt.s32.totalorder %s21, 0
      %s313 = scalar_select %p312, %s21, 0
      %s314 = sadd.s32 %s313, %s311
      %s315 = smul.addr %s314, 8
      %s316 = scalar_lea.vmem %s4, %s315
      %p318 = scmp.eq.s32.totalorder %s22, 0
      // Predicated region
      $region37: #{vistr_forward.6} parent=35 // pred_check
        %p319 = pneg %p318
      $region38: #{vistr_forward.6} parent=35 // pred_check_branch
        %321 = sbr.rel (%p319) target = $region40
      $region39: #{vistr_forward.6} parent=35 // pred_region
        %vm322 = vcmask 7168
        %323 = vst.msk [vmem:[#allocation2] sm:$0xff] %vm322, -inf
        %324 = vst.msk [vmem:[#allocation3] sm:$0xff] %vm322, 0.0
        %325 = vst [vmem:[#allocation4] sm:$0xff] 0.0
      $region40: #{vistr_forward.6} parent=35 // pred_fallthru
        _
      %v326 = vld [vmem:[%s283] sm:$0xf]
      %v327 = vld [vmem:[%s292] sm:$0xf]
      %v328 = vld [vmem:[%s292 + $0x4] sm:$0xf]
      %v329 = vld [vmem:[%s292 + $0x8] sm:$0xf]
      %v330 = vld [vmem:[%s292 + $0xc] sm:$0xf]
      %v331 = vld [vmem:[%s292 + $0x10] sm:$0xf]
      %v332 = vld [vmem:[%s292 + $0x14] sm:$0xf]
      %v333 = vld [vmem:[%s292 + $0x18] sm:$0xf]
      %v334 = vld [vmem:[%s292 + $0x1c] sm:$0xf]
      %v335 = vld [vmem:[%s292 + $0x20] sm:$0xf]
      %v336 = vld [vmem:[%s292 + $0x24] sm:$0xf]
      %v337 = vld [vmem:[%s292 + $0x28] sm:$0xf]
      %v338 = vld [vmem:[%s292 + $0x2c] sm:$0xf]
      %v339 = vld [vmem:[%s292 + $0x30] sm:$0xf]
      %v340 = vld [vmem:[%s292 + $0x34] sm:$0xf]
      %v341 = vld [vmem:[%s292 + $0x38] sm:$0xf]
      %v342 = vld [vmem:[%s292 + $0x3c] sm:$0xf]
      %v343 = vld [vmem:[%s302] sm:$0xf]
      %v344 = vld [vmem:[%s302 + $0x4] sm:$0xf]
      %v345 = vld [vmem:[%s302 + $0x8] sm:$0xf]
      %v346 = vld [vmem:[%s302 + $0xc] sm:$0xf]
      %v347 = vld [vmem:[%s302 + $0x10] sm:$0xf]
      %v348 = vld [vmem:[%s302 + $0x14] sm:$0xf]
      %v349 = vld [vmem:[%s302 + $0x18] sm:$0xf]
      %v350 = vld [vmem:[%s302 + $0x1c] sm:$0xf]
      %v351 = vld [vmem:[%s302 + $0x20] sm:$0xf]
      %v352 = vld [vmem:[%s302 + $0x24] sm:$0xf]
      %v353 = vld [vmem:[%s302 + $0x28] sm:$0xf]
      %v354 = vld [vmem:[%s302 + $0x2c] sm:$0xf]
      %v355 = vld [vmem:[%s302 + $0x30] sm:$0xf]
      %v356 = vld [vmem:[%s302 + $0x34] sm:$0xf]
      %v357 = vld [vmem:[%s302 + $0x38] sm:$0xf]
      %v358 = vld [vmem:[%s302 + $0x3c] sm:$0xf]
      %v359 = vld [vmem:[%s309] sm:$0x1]
      %v361 = vlaneseq
      %v362 = vshrl.u32 %v361, 7
      %v363 = vsub.s32 0, %v362
      %v364 = vrot.slane %v359, %v363
      %v382 = vunpack.c.l.b16 %v327
      %v383 = vunpack.c.l.b16 %v328
      %v384 = vunpack.c.l.b16 %v329
      %v385 = vunpack.c.l.b16 %v330
      %v386 = vunpack.c.l.b16 %v331
      %v387 = vunpack.c.l.b16 %v332
      %v388 = vunpack.c.l.b16 %v333
      %v389 = vunpack.c.l.b16 %v334
      %v390 = vunpack.c.l.b16 %v335
      %v391 = vunpack.c.l.b16 %v336
      %v392 = vunpack.c.l.b16 %v337
      %v393 = vunpack.c.l.b16 %v338
      %v394 = vunpack.c.l.b16 %v339
      %v395 = vunpack.c.l.b16 %v340
      %v396 = vunpack.c.l.b16 %v341
      %v397 = vunpack.c.l.b16 %v342
      %v398 = vpack.c.b16 %v383, %v382
      %v399 = vpack.c.b16 %v385, %v384
      %v400 = vpack.c.b16 %v387, %v386
      %v401 = vpack.c.b16 %v389, %v388
      %v402 = vpack.c.b16 %v391, %v390
      %v403 = vpack.c.b16 %v393, %v392
      %v404 = vpack.c.b16 %v395, %v394
      %v405 = vpack.c.b16 %v397, %v396
      %414 = vmatprep.subr.bf16.mxu0 0
      %415 = vmatpush1.bf16.xpose.msra.mxu0 %v398
      %416 = vmatprep.subr.bf16.mxu0 0
      %417 = vmatpush1.bf16.xpose.msra.mxu0 %v399
      %418 = vmatprep.subr.bf16.mxu0 0
      %419 = vmatpush1.bf16.xpose.msra.mxu0 %v400
      %420 = vmatprep.subr.bf16.mxu0 0
      %421 = vmatpush1.bf16.xpose.msra.mxu0 %v401
      %422 = vmatprep.subr.bf16.mxu0 0
      %423 = vmatpush1.bf16.xpose.msra.mxu0 %v402
      %424 = vmatprep.subr.bf16.mxu0 0
      %425 = vmatpush1.bf16.xpose.msra.mxu0 %v403
      %426 = vmatprep.subr.bf16.mxu0 0
      %427 = vmatpush1.bf16.xpose.msra.mxu0 %v404
      %428 = vmatprep.subr.bf16.mxu0 0
      %429 = vmatpush1.bf16.xpose.msra.mxu0 %v405
      %430 = vmatprep.subr.bf16.mxu0 0
      %431 = vmatpush1.bf16.xpose.msra.mxu0 0
      %432 = vmatprep.subr.bf16.mxu0 0
      %433 = vmatpush1.bf16.xpose.msra.mxu0 0
      %434 = vmatprep.subr.bf16.mxu0 0
      %435 = vmatpush1.bf16.xpose.msra.mxu0 0
      %436 = vmatprep.subr.bf16.mxu0 0
      %437 = vmatpush1.bf16.xpose.msra.mxu0 0
      %438 = vmatprep.subr.bf16.mxu0 0
      %439 = vmatpush1.bf16.xpose.msra.mxu0 0
      %440 = vmatprep.subr.bf16.mxu0 0
      %441 = vmatpush1.bf16.xpose.msra.mxu0 0
      %442 = vmatprep.subr.bf16.mxu0 0
      %443 = vmatpush1.bf16.xpose.msra.mxu0 0
      %444 = vmatprep.subr.bf16.mxu0 0
      %445 = vmatpush1.bf16.xpose.msra.mxu0 0
      %446 = vmatprep.mubr.bf16.mxu0 0
      %447 = vmatmul.mubr.bf16.gmra.mrb[0].mxu0 %v326
      %v448 = vpop.f32.mrb[0].mxu0
      %v449 = vadd.f32 %v364, %v448
      %v450 = vpop.f32.mrb[0].mxu0
      %v451 = vpop.f32.mrb[0].mxu0
      %v452 = vpop.f32.mrb[0].mxu0
      %453 = vdwg.mxu0
      %v454 = vld [vmem:[#allocation2] sm:$0xff]
      %455 = vmax.xlane.f32.xlu0 %v449
      %v456 = vpop.xlane.xlu0 %455
      %v457 = vmax.f32 %v454, %v456
      %v458 = vsub.f32 %v454, %v457
      %v459 = vmul.f32 %v458, 1.442695
      %v460 = vpow.pop %v459
      %462 = vset.pattern.permute.xlu0 0
      %463 = vperm.xlu0 %462, %v457
      %v464 = vpop.permute.xlu0 %463
      %v466 = vsub.f32 %v449, %v464
      %v467 = vmul.f32 %v466, 1.442695
      %v468 = vpow.pop %v467
      %v469 = vld [vmem:[#allocation3] sm:$0xff]
      %v470 = vmul.f32 %v460, %v469
      %471 = vadd.xlane.f32.xlu0 %v468
      %v472 = vpop.xlane.xlu0 %471
      %v473 = vadd.f32 %v470, %v472
      %vm474 = vcmask 7168
      %475 = vst.msk [vmem:[#allocation3] sm:$0xff] %vm474, %v473
      %v476 = vld [vmem:[#allocation4] sm:$0xff]
      %478 = vset.pattern.permute.xlu0 0
      %479 = vperm.xlu0 %478, %v460
      %v480 = vpop.permute.xlu0 %479
      %v482 = vmul.f32 %v480, %v476
      %v483 = vpack.c.bf16 %v468, %v468
      %v500 = vunpack.c.l.b16 %v343
      %v501 = vunpack.c.l.b16 %v344
      %v502 = vunpack.c.l.b16 %v345
      %v503 = vunpack.c.l.b16 %v346
      %v504 = vunpack.c.l.b16 %v347
      %v505 = vunpack.c.l.b16 %v348
      %v506 = vunpack.c.l.b16 %v349
      %v507 = vunpack.c.l.b16 %v350
      %v508 = vunpack.c.l.b16 %v351
      %v509 = vunpack.c.l.b16 %v352
      %v510 = vunpack.c.l.b16 %v353
      %v511 = vunpack.c.l.b16 %v354
      %v512 = vunpack.c.l.b16 %v355
      %v513 = vunpack.c.l.b16 %v356
      %v514 = vunpack.c.l.b16 %v357
      %v515 = vunpack.c.l.b16 %v358
      %v516 = vpack.c.b16 %v501, %v500
      %v517 = vpack.c.b16 %v503, %v502
      %v518 = vpack.c.b16 %v505, %v504
      %v519 = vpack.c.b16 %v507, %v506
      %v520 = vpack.c.b16 %v509, %v508
      %v521 = vpack.c.b16 %v511, %v510
      %v522 = vpack.c.b16 %v513, %v512
      %v523 = vpack.c.b16 %v515, %v514
      %532 = vmatprep.subr.bf16.mxu0 0
      %533 = vmatpush1.bf16.msra.mxu0 %v516
      %534 = vmatprep.subr.bf16.mxu0 0
      %535 = vmatpush1.bf16.msra.mxu0 %v517
      %536 = vmatprep.subr.bf16.mxu0 0
      %537 = vmatpush1.bf16.msra.mxu0 %v518
      %538 = vmatprep.subr.bf16.mxu0 0
      %539 = vmatpush1.bf16.msra.mxu0 %v519
      %540 = vmatprep.subr.bf16.mxu0 0
      %541 = vmatpush1.bf16.msra.mxu0 %v520
      %542 = vmatprep.subr.bf16.mxu0 0
      %543 = vmatpush1.bf16.msra.mxu0 %v521
      %544 = vmatprep.subr.bf16.mxu0 0
      %545 = vmatpush1.bf16.msra.mxu0 %v522
      %546 = vmatprep.subr.bf16.mxu0 0
      %547 = vmatpush1.bf16.msra.mxu0 %v523
      %548 = vmatprep.subr.bf16.mxu0 0
      %549 = vmatpush1.bf16.msra.mxu0 0
      %550 = vmatprep.subr.bf16.mxu0 0
      %551 = vmatpush1.bf16.msra.mxu0 0
      %552 = vmatprep.subr.bf16.mxu0 0
      %553 = vmatpush1.bf16.msra.mxu0 0
      %554 = vmatprep.subr.bf16.mxu0 0
      %555 = vmatpush1.bf16.msra.mxu0 0
      %556 = vmatprep.subr.bf16.mxu0 0
      %557 = vmatpush1.bf16.msra.mxu0 0
      %558 = vmatprep.subr.bf16.mxu0 0
      %559 = vmatpush1.bf16.msra.mxu0 0
      %560 = vmatprep.subr.bf16.mxu0 0
      %561 = vmatpush1.bf16.msra.mxu0 0
      %562 = vmatprep.subr.bf16.mxu0 0
      %563 = vmatpush1.bf16.msra.mxu0 0
      %564 = vmatprep.mubr.bf16.mxu0 0
      %565 = vmatmul.mubr.bf16.gmra.mrb[0].mxu0 %v483
      %v566 = vpop.f32.mrb[0].mxu0
      %v567 = vadd.f32 0.0, %v566
      %v568 = vpop.f32.mrb[0].mxu0
      %v569 = vpop.f32.mrb[0].mxu0
      %v570 = vpop.f32.mrb[0].mxu0
      %571 = vdwg.mxu0
      %v572 = vadd.f32 %v482, %v567
      %573 = vst [vmem:[#allocation4] sm:$0xff] %v572
      %574 = vst.msk [vmem:[#allocation2] sm:$0xff] %vm474, %v457
      // Predicated region
      $region41: #{vistr_forward.6} parent=35 // pred_check
        %p575 = pneg %p318
      $region42: #{vistr_forward.6} parent=35 // pred_check_branch
        %577 = sbr.rel (%p575) target = $region44
      $region43: #{vistr_forward.6} parent=35 // pred_region
        %v578 = vld [vmem:[#allocation4] sm:$0xff]
        %v579 = vld [vmem:[#allocation3] sm:$0xff]
        %v580 = vrcp.pop %v579
        %582 = vset.pattern.permute.xlu0 0
        %583 = vperm.xlu0 %582, %v580
        %v584 = vpop.permute.xlu0 %583
        %v586 = vmul.f32 %v578, %v584
        %587 = vst [vmem:[%s316] sm:$0xff] %v586
      $region44: #{vistr_forward.6} parent=35 // pred_fallthru
        _
      %p588 = scmp.lt.s32.totalorder %s20, 1
      %s589 = scalar_select %p588, %s20, 1
      %p590 = scmp.lt.s32.totalorder %s21, 0
      %s591 = scalar_select %p590, %s21, 0
      %s592 = sadd.s32 %s591, %s589
      %s593 = smul.addr %s592, 8
      %s594 = scalar_lea.vmem %s4, %s593
      // Predicated region
      $region45: #{vistr_forward.6} parent=35 // pred_check
        %p595 = pneg %p164
      $region46: #{vistr_forward.6} parent=35 // pred_check_branch
        %597 = sbr.rel (%p595) target = $region48
      $region47: #{vistr_forward.6} parent=35 // pred_region
        _
      $region48: #{vistr_forward.6} parent=35 // pred_fallthru
        _
    $region36: #{vistr_forward.6} parent=5 // pred_fallthru
      _
    %p598 = scmp.le.s32.totalorder 2, %s10
    // Predicated region
    $region49: #{vistr_forward.6} parent=5 // pred_check
      %p599 = pneg %p598
    $region50: #{vistr_forward.6} parent=5 // pred_check_branch
      %601 = sbr.rel (%p599) target = $region52
    $region51: #{vistr_forward.6} parent=5 // pred_region
      %s602 = ssub.s32 %s10, 2
      // Predicated region
      $region53: #{vistr_forward.6} parent=51 // pred_check
        %p603 = pneg %p170
      $region54: #{vistr_forward.6} parent=51 // pred_check_branch
        %605 = sbr.rel (%p603) target = $region56
      $region55: #{vistr_forward.6} parent=51 // pred_region
        %p606 = scmp.lt.s32.totalorder %s23, 1
        %s607 = scalar_select %p606, %s23, 1
        %p608 = scmp.lt.s32.totalorder %s24, 0
        %s609 = scalar_select %p608, %s24, 0
        %s610 = sadd.s32 %s609, %s607
        %s611 = smul.addr %s610, 8
        %s612 = scalar_lea.vmem %s4, %s611
      $region56: #{vistr_forward.6} parent=51 // pred_fallthru
        _
    $region52: #{vistr_forward.6} parent=5 // pred_fallthru
      _
  $region6: #{vistr_forward.6} parent=0 // loop_footer
    %s14 = sadd.s32 1, %s10
  $region7: #{vistr_forward.6} parent=0 // loop_footer_branch
    %9 = sbr.rel target = $region3
  $region8: #{vistr_forward.6} parent=0 // loop_exit
    _

</llo_original>
